<compile_context>
chip_gen: v6e
topology: v6e:2x2x1
jax: 0.10.0
libtpu: 0.0.40
codegen_flags: <defaults>
</compile_context>

<pallas_src>
import math

import jax
import jax.numpy as jnp
from jax import lax
from jax.experimental import pallas as pl
from jax.experimental.pallas import tpu as pltpu


# ---------------------------------------------------------------------------
# Fused kernel: BiGRU (PyTorch gate semantics) + Linear + CRF NLL (denominator
# and emission part of the numerator), per batch tile.
# ---------------------------------------------------------------------------
def elmo_ner_fused_kernel(x_ref, w_in_ref, b_in_ref,
                          whh_f_ref, bhn_f_ref, whh_b_ref, bhn_b_ref,
                          wl_f_ref, wl_b_ref, bl_ref,
                          start_ref, end_ref, trans_ref,
                          tags_ref, mask_ref,
                          loss_ref,
                          g_scr, hf_scr, hb_scr, em_scr):
    T, TB, K = em_scr.shape
    H = whh_f_ref.shape[0]
    NU = x_ref.shape[2]

    # (1) Hoisted input-side gate matmul: one [T*TB, NU] @ [NU, 6H] bf16 MXU call,
    #     fp32 accumulate, stored DIRECTLY into one bf16 scratch (no 6-way copy pass).
    gi = jnp.dot(x_ref[...].reshape(T * TB, NU), w_in_ref[...],
                 preferred_element_type=jnp.float32) + b_in_ref[...]      # [T*TB, 6H] f32
    g_scr[...] = gi.reshape(T, TB, 6 * H).astype(jnp.bfloat16)

    # (2) Fused fwd+bwd recurrence: ONE loop, two independent chains interleaved;
    #     one [TB,H]@[H,3H] dot per direction per step (recurrent weights hoisted).
    whh_f = whh_f_ref[...]            # bf16 [H, 3H], gate order [r, z, n]
    whh_b = whh_b_ref[...]
    bhn_f = bhn_f_ref[...]            # f32 [1, H]
    bhn_b = bhn_b_ref[...]

    def gru_cell(g_in, gh, bhn, h_prev):
        r = jax.nn.sigmoid(g_in[:, 0 * H:1 * H] + gh[:, 0 * H:1 * H])
        z = jax.nn.sigmoid(g_in[:, 1 * H:2 * H] + gh[:, 1 * H:2 * H])
        n = jnp.tanh(g_in[:, 2 * H:3 * H] + r * (gh[:, 2 * H:3 * H] + bhn))
        return (1.0 - z) * n + z * h_prev          # fp32 hidden state

    def step(i, carry):
        hf, hb = carry
        tf = i
        tb = T - 1 - i
        ghf = jnp.dot(hf.astype(jnp.bfloat16), whh_f, preferred_element_type=jnp.float32)
        ghb = jnp.dot(hb.astype(jnp.bfloat16), whh_b, preferred_element_type=jnp.float32)
        g_tf = g_scr[tf]                                   # [TB, 6H] bf16
        g_tb = g_scr[tb]
        gf = g_tf[:, :3 * H].astype(jnp.float32)           # forward-direction gates
        gb = g_tb[:, 3 * H:].astype(jnp.float32)           # backward-direction gates
        hf_new = gru_cell(gf, ghf, bhn_f, hf)
        hb_new = gru_cell(gb, ghb, bhn_b, hb)
        hf_scr[tf] = hf_new.astype(jnp.bfloat16)           # bf16 store; fp32 carry only
        hb_scr[tb] = hb_new.astype(jnp.bfloat16)
        return (hf_new, hb_new)

    h0 = jnp.zeros((TB, H), jnp.float32)
    lax.fori_loop(0, T, step, (h0, h0), unroll=max(1, min(8, T)))

    # (3) Fused output projection: one well-shaped MXU call per direction.
    hf2 = hf_scr[...].reshape(T * TB, H)
    hb2 = hb_scr[...].reshape(T * TB, H)
    em = (jnp.dot(hf2, wl_f_ref[...], preferred_element_type=jnp.float32)
          + jnp.dot(hb2, wl_b_ref[...], preferred_element_type=jnp.float32)
          + bl_ref[...])                                                   # [T*TB, K] f32
    em_scr[...] = em.reshape(T, TB, K)

    # (4) CRF NLL: emissions never leave VMEM.
    start = start_ref[...]                       # [1, K]
    end = end_ref[...]                           # [1, K]
    trans_b = trans_ref[...][None, :, :]         # hoisted broadcast [1, K, K]
    mask_all = mask_ref[...]                     # [T, TB, 1] f32 (glue forces mask[0]==1)

    # Gold-path emission score: masked one-hot built in-kernel from int32 tag indices.
    tags_oh = (tags_ref[...] ==
               lax.broadcasted_iota(jnp.int32, (T, TB, K), 2)).astype(jnp.float32)
    num_em = jnp.sum(tags_oh * mask_all * em_scr[...])

    def crf_step(t, alpha):
        em_t = em_scr[t]                                      # [TB, K]
        m_t = mask_ref[t]                                     # [TB, 1]
        bs = alpha[:, :, None] + trans_b + em_t[:, None, :]   # [TB, K, K]
        mx = jnp.max(bs, axis=1, keepdims=True)
        nxt = (mx + jnp.log(jnp.sum(jnp.exp(bs - mx), axis=1, keepdims=True)))[:, 0, :]
        return jnp.where(m_t > 0.5, nxt, alpha)

    alpha = lax.fori_loop(1, T, crf_step, start + em_scr[0],
                          unroll=max(1, min(8, T - 1)))

    final = alpha + end
    mx = jnp.max(final, axis=-1, keepdims=True)
    logz = mx + jnp.log(jnp.sum(jnp.exp(final - mx), axis=-1, keepdims=True))   # [TB, 1]

    # Partial loss for this batch tile: sum_b logZ_b - sum_b (emission part of numerator).
    loss_ref[...] = jnp.reshape(jnp.sum(logz) - num_em, (1, 1))


# ---------------------------------------------------------------------------
# Glue / wrapper
# ---------------------------------------------------------------------------
def _prep_kernel_params(params):
    """Re-pack PyTorch-layout GRU/linear params into MXU-friendly kernel operands."""
    H = params["whh_f"].shape[0]

    def fold_bias(bih, bhh):
        # b_hr / b_hz fold into the input-side bias; b_hn cannot (inside r * (Whn h + bhn)).
        return jnp.concatenate([bih[:, :H] + bhh[:, :H],
                                bih[:, H:2 * H] + bhh[:, H:2 * H],
                                bih[:, 2 * H:]], axis=1)

    return dict(
        w_in=jnp.concatenate([params["wih_f"], params["wih_b"]],
                             axis=1).astype(jnp.bfloat16),           # [NU, 6H]
        b_in=jnp.concatenate([fold_bias(params["bih_f"], params["bhh_f"]),
                              fold_bias(params["bih_b"], params["bhh_b"])], axis=1),
        whh_f=params["whh_f"].astype(jnp.bfloat16),                  # [H, 3H]
        bhn_f=params["bhh_f"][:, 2 * H:],
        whh_b=params["whh_b"].astype(jnp.bfloat16),
        bhn_b=params["bhh_b"][:, 2 * H:],
        wl_f=params["wl_f"].astype(jnp.bfloat16),
        wl_b=params["wl_b"].astype(jnp.bfloat16),
        bl=params["bl"],
        start=params["start"], end=params["end"], trans=params["trans"],
    )


def _gold_static_score(tags_tb, mask_tb, start, end, trans):
    """CRF numerator terms that depend only on tags/mask/CRF params (plain-JAX gathers)."""
    _, B = tags_tb.shape
    barange = jnp.arange(B)
    s = start[0][tags_tb[0]]                                                     # [B]
    s = s + jnp.sum(mask_tb[1:] * trans[tags_tb[:-1], tags_tb[1:]], axis=0)      # [B]
    seq_ends = jnp.sum(mask_tb, axis=0).astype(jnp.int32) - 1
    s = s + end[0][tags_tb[seq_ends, barange]]                                   # [B]
    return jnp.sum(s)


def _choose_tbatch(B):
    # Fill the MXU row dimension when B permits (256 for v6e/v7x 2x256^2 MXU, 128 for v5e).
    # TODO(synk): on v7x pick tbatch = B // (2*k) so nb is even and the ("parallel",) grid
    # axis actually shards across both TensorCores; on v5e/v6e prefer nb=1 with max tbatch.
    for cand in (256, 128, 64, 32, 16, 8):
        if B % cand == 0:
            return cand
    return B


def _vmem_limit_bytes():
    cap = 64 * 1024 * 1024
    try:
        cap = int(getattr(pltpu.get_tpu_info(), "vmem_capacity_bytes", cap))
    except Exception:
        pass
    # Leave headroom for the double-buffered pipelined inputs.
    return min(max(cap * 3 // 4, 32 * 1024 * 1024), 96 * 1024 * 1024)


@jax.jit
def elmo_ner_loss(x_ids, y_tags, masks, params):
    """Equivalent of ElmoNer.forward(x_data, y_data, masks) -> scalar loss (sum NLL)."""
    # ELMo stand-in: deterministic embedding lookup (glue, plain JAX).
    emb = params["embedding"][x_ids].astype(jnp.float32)          # [B, T, NU]
    B, T, NU = emb.shape
    H = params["whh_f"].shape[0]
    K = params["trans"].shape[0]

    tbatch = _choose_tbatch(B)
    nb = B // tbatch

    # Time-major x, bf16 for the MXU; the kernel's BlockSpec slices the batch directly
    # (no per-tile reshape/transpose relayout in the wrapper).
    x_tb = jnp.transpose(emb, (1, 0, 2)).astype(jnp.bfloat16)     # [T, B, NU]

    kp = _prep_kernel_params(params)

    tags_tb = jnp.transpose(y_tags, (1, 0)).astype(jnp.int32)     # [T, B]
    mask_tb = jnp.transpose(masks, (1, 0)).astype(jnp.float32)    # [T, B]

    gold_static = _gold_static_score(tags_tb, mask_tb,
                                     params["start"], params["end"], params["trans"])

    # torchcrf contract: mask[0] == 1; force it so the in-kernel numerator always counts
    # t = 0 (the alpha recursion never reads mask[0], so sharing one buffer is safe).
    mask_k = mask_tb.at[0].set(1.0)[:, :, None]                   # [T, B, 1]
    tags_k = tags_tb[:, :, None]                                  # [T, B, 1] int32

    def full(a):
        nd = a.ndim
        return pl.BlockSpec(a.shape, lambda i, _n=nd: (0,) * _n)

    in_specs = [
        pl.BlockSpec((T, tbatch, NU), lambda i: (0, i, 0)),       # x tile (time-major)
        full(kp["w_in"]), full(kp["b_in"]),
        full(kp["whh_f"]), full(kp["bhn_f"]), full(kp["whh_b"]), full(kp["bhn_b"]),
        full(kp["wl_f"]), full(kp["wl_b"]), full(kp["bl"]),
        full(kp["start"]), full(kp["end"]), full(kp["trans"]),
        pl.BlockSpec((T, tbatch, 1), lambda i: (0, i, 0)),        # gold tag indices
        pl.BlockSpec((T, tbatch, 1), lambda i: (0, i, 0)),        # mask
    ]

    partial = pl.pallas_call(
        elmo_ner_fused_kernel,
        out_shape=jax.ShapeDtypeStruct((nb, 1), jnp.float32),
        grid=(nb,),
        in_specs=in_specs,
        out_specs=pl.BlockSpec((1, 1), lambda i: (i, 0)),
        scratch_shapes=[
            pltpu.VMEM((T, tbatch, 6 * H), jnp.bfloat16),         # fused gate streams
            pltpu.VMEM((T, tbatch, H), jnp.bfloat16),             # h forward
            pltpu.VMEM((T, tbatch, H), jnp.bfloat16),             # h backward
            pltpu.VMEM((T, tbatch, K), jnp.float32),              # emissions
        ],
        compiler_params=pltpu.CompilerParams(
            dimension_semantics=("parallel",),
            vmem_limit_bytes=_vmem_limit_bytes(),
        ),
    )(x_tb, kp["w_in"], kp["b_in"],
      kp["whh_f"], kp["bhn_f"], kp["whh_b"], kp["bhn_b"],
      kp["wl_f"], kp["wl_b"], kp["bl"],
      kp["start"], kp["end"], kp["trans"],
      tags_k, mask_k)

    return jnp.sum(partial) - gold_static


# ---------------------------------------------------------------------------
# Pure-JAX reference (fp32, mirrors the PyTorch module) used for a sanity check.
# ---------------------------------------------------------------------------
def _reference_loss(x_ids, y_tags, masks, params):
    emb = params["embedding"][x_ids].astype(jnp.float32)          # [B, T, NU]
    B, T, _ = emb.shape
    H = params["whh_f"].shape[0]

    def gru_dir(x_tb, wih, whh, bih, bhh):
        def cell(h, x_t):
            gi = x_t @ wih + bih
            gh = h @ whh + bhh
            r = jax.nn.sigmoid(gi[:, :H] + gh[:, :H])
            z = jax.nn.sigmoid(gi[:, H:2 * H] + gh[:, H:2 * H])
            n = jnp.tanh(gi[:, 2 * H:] + r * gh[:, 2 * H:])
            h_new = (1.0 - z) * n + z * h
            return h_new, h_new
        _, hs = lax.scan(cell, jnp.zeros((B, H), jnp.float32), x_tb)
        return hs                                                  # [T, B, H]

    x_tb = jnp.transpose(emb, (1, 0, 2))
    hf = gru_dir(x_tb, params["wih_f"], params["whh_f"], params["bih_f"], params["bhh_f"])
    hb = gru_dir(x_tb[::-1], params["wih_b"], params["whh_b"],
                 params["bih_b"], params["bhh_b"])[::-1]
    em = hf @ params["wl_f"] + hb @ params["wl_b"] + params["bl"]  # [T, B, K]

    tags = jnp.transpose(y_tags, (1, 0)).astype(jnp.int32)
    mask = jnp.transpose(masks, (1, 0)).astype(jnp.float32)
    start, end, trans = params["start"][0], params["end"][0], params["trans"]
    barange = jnp.arange(B)

    em_gold = em[jnp.arange(T)[:, None], barange[None, :], tags]   # [T, B]
    trans_gold = trans[tags[:-1], tags[1:]]                        # [T-1, B]
    seq_ends = mask.sum(0).astype(jnp.int32) - 1
    num = (start[tags[0]] + em_gold[0]
           + jnp.sum(mask[1:] * (trans_gold + em_gold[1:]), axis=0)
           + end[tags[seq_ends, barange]])                         # [B]

    def step(alpha, t):
        bs = alpha[:, :, None] + trans[None] + em[t][:, None, :]
        nxt = jax.scipy.special.logsumexp(bs, axis=1)
        return jnp.where(mask[t][:, None] > 0.5, nxt, alpha), None

    alpha, _ = lax.scan(step, start[None, :] + em[0], jnp.arange(1, T))
    logz = jax.scipy.special.logsumexp(alpha + end[None, :], axis=1)
    return jnp.sum(logz - num)


def init_params(key, num_units, rnn_hidden, num_tags, vocab):
    H = rnn_hidden
    ks = jax.random.split(key, 16)
    k_gru = 1.0 / math.sqrt(H)
    k_lin = 1.0 / math.sqrt(2 * H)

    def u(k, shape, lim):
        return jax.random.uniform(k, shape, jnp.float32, -lim, lim)

    return dict(
        embedding=0.1 * jax.random.normal(ks[0], (vocab, num_units), jnp.float32),
        # GRU weights stored pre-transposed: [in, 3H] / [H, 3H], gate order [r, z, n]
        wih_f=u(ks[1], (num_units, 3 * H), k_gru),
        whh_f=u(ks[2], (H, 3 * H), k_gru),
        bih_f=u(ks[3], (1, 3 * H), k_gru),
        bhh_f=u(ks[4], (1, 3 * H), k_gru),
        wih_b=u(ks[5], (num_units, 3 * H), k_gru),
        whh_b=u(ks[6], (H, 3 * H), k_gru),
        bih_b=u(ks[7], (1, 3 * H), k_gru),
        bhh_b=u(ks[8], (1, 3 * H), k_gru),
        # Linear(2H -> K) split into forward/backward halves, stored [H, K]
        wl_f=u(ks[9], (H, num_tags), k_lin),
        wl_b=u(ks[10], (H, num_tags), k_lin),
        bl=u(ks[11], (1, num_tags), k_lin),
        # CRF params (torchcrf init: uniform(-0.1, 0.1))
        start=u(ks[12], (1, num_tags), 0.1),
        end=u(ks[13], (1, num_tags), 0.1),
        trans=u(ks[14], (num_tags, num_tags), 0.1),
    )


if __name__ == "__main__":
    B, T = 2, 8
    NUM_UNITS, RNN_HIDDEN, NUM_TAGS, VOCAB = 32, 32, 8, 50

    key = jax.random.PRNGKey(0)
    k_params, k_x, k_y = jax.random.split(key, 3)

    params = init_params(k_params, NUM_UNITS, RNN_HIDDEN, NUM_TAGS, VOCAB)

    x_ids = jax.random.randint(k_x, (B, T), 0, VOCAB)            # token ids
    y_tags = jax.random.randint(k_y, (B, T), 0, NUM_TAGS)        # gold tags
    lengths = jnp.array([T, 5])
    masks = (jnp.arange(T)[None, :] < lengths[:, None]).astype(jnp.float32)  # [B, T]

    loss = elmo_ner_loss(x_ids, y_tags, masks, params)
    jax.block_until_ready(loss)

    ref = _reference_loss(x_ids, y_tags, masks, params)
    if not jnp.allclose(loss, ref, rtol=2e-2, atol=2e-2):
        raise SystemExit(f"MISMATCH kernel={float(loss):.6f} ref={float(ref):.6f}")
    print("KERNEL_OK")
</pallas_src>

<mosaic_0001>
module attributes {stable_mosaic.version = 11 : i64} {
  func.func @elmo_ner_fused_kernel(%arg0: i32, %arg1: memref<8x2x32xbf16, #tpu.memory_space<vmem>>, %arg2: memref<32x192xbf16, #tpu.memory_space<vmem>>, %arg3: memref<1x192xf32, #tpu.memory_space<vmem>>, %arg4: memref<32x96xbf16, #tpu.memory_space<vmem>>, %arg5: memref<1x32xf32, #tpu.memory_space<vmem>>, %arg6: memref<32x96xbf16, #tpu.memory_space<vmem>>, %arg7: memref<1x32xf32, #tpu.memory_space<vmem>>, %arg8: memref<32x8xbf16, #tpu.memory_space<vmem>>, %arg9: memref<32x8xbf16, #tpu.memory_space<vmem>>, %arg10: memref<1x8xf32, #tpu.memory_space<vmem>>, %arg11: memref<1x8xf32, #tpu.memory_space<vmem>>, %arg12: memref<1x8xf32, #tpu.memory_space<vmem>>, %arg13: memref<8x8xf32, #tpu.memory_space<vmem>>, %arg14: memref<8x2x1xi32, #tpu.memory_space<vmem>>, %arg15: memref<8x2x1xf32, #tpu.memory_space<vmem>>, %arg16: memref<1x1xf32, #tpu.memory_space<vmem>>, %arg17: memref<8x2x192xbf16, #tpu.memory_space<vmem>>, %arg18: memref<8x2x32xbf16, #tpu.memory_space<vmem>>, %arg19: memref<8x2x32xbf16, #tpu.memory_space<vmem>>, %arg20: memref<8x2x8xf32, #tpu.memory_space<vmem>>) attributes {dimension_semantics = [#tpu.dimension_semantics<parallel>], iteration_bounds = array<i64: 1>, scalar_prefetch = 0 : i64, scratch_operands = 4 : i64, tpu.core_type = #tpu.core_type<tc>, window_params = [{transform_indices = @transform_0, window_bounds = array<i64: 8, 2, 32>}, {pipeline_mode = #tpu.pipeline_mode<synchronous>, transform_indices = @transform_1, window_bounds = array<i64: 32, 192>}, {pipeline_mode = #tpu.pipeline_mode<synchronous>, transform_indices = @transform_2, window_bounds = array<i64: 1, 192>}, {pipeline_mode = #tpu.pipeline_mode<synchronous>, transform_indices = @transform_3, window_bounds = array<i64: 32, 96>}, {pipeline_mode = #tpu.pipeline_mode<synchronous>, transform_indices = @transform_4, window_bounds = array<i64: 1, 32>}, {pipeline_mode = #tpu.pipeline_mode<synchronous>, transform_indices = @transform_5, window_bounds = array<i64: 32, 96>}, {pipeline_mode = #tpu.pipeline_mode<synchronous>, transform_indices = @transform_6, window_bounds = array<i64: 1, 32>}, {pipeline_mode = #tpu.pipeline_mode<synchronous>, transform_indices = @transform_7, window_bounds = array<i64: 32, 8>}, {pipeline_mode = #tpu.pipeline_mode<synchronous>, transform_indices = @transform_8, window_bounds = array<i64: 32, 8>}, {pipeline_mode = #tpu.pipeline_mode<synchronous>, transform_indices = @transform_9, window_bounds = array<i64: 1, 8>}, {pipeline_mode = #tpu.pipeline_mode<synchronous>, transform_indices = @transform_10, window_bounds = array<i64: 1, 8>}, {pipeline_mode = #tpu.pipeline_mode<synchronous>, transform_indices = @transform_11, window_bounds = array<i64: 1, 8>}, {pipeline_mode = #tpu.pipeline_mode<synchronous>, transform_indices = @transform_12, window_bounds = array<i64: 8, 8>}, {transform_indices = @transform_13, window_bounds = array<i64: 8, 2, 1>}, {transform_indices = @transform_14, window_bounds = array<i64: 8, 2, 1>}, {transform_indices = @transform_15, window_bounds = array<i64: 1, 1>}]} {
    %c0 = arith.constant 0 : index
    %c0_0 = arith.constant 0 : index
    %c0_1 = arith.constant 0 : index
    %0 = vector.load %arg1[%c0, %c0_0, %c0_1] : memref<8x2x32xbf16, #tpu.memory_space<vmem>>, vector<8x2x32xbf16>
    %1 = vector.shape_cast %0 : vector<8x2x32xbf16> to vector<16x32xbf16>
    %c0_2 = arith.constant 0 : index
    %c0_3 = arith.constant 0 : index
    %2 = vector.load %arg2[%c0_2, %c0_3] : memref<32x192xbf16, #tpu.memory_space<vmem>>, vector<32x192xbf16>
    %cst = arith.constant dense<0.000000e+00> : vector<16x192xf32>
    %3 = tpu.matmul %1, %2, %cst {dimension_numbers = #tpu.dot_dimension_numbers<[1], [0], [0], [1], [0, 0, 1, 1], [], []>} : vector<16x32xbf16>, vector<32x192xbf16>, vector<16x192xf32> -> vector<16x192xf32>
    %c0_4 = arith.constant 0 : index
    %c0_5 = arith.constant 0 : index
    %4 = vector.load %arg3[%c0_4, %c0_5] : memref<1x192xf32, #tpu.memory_space<vmem>>, vector<1x192xf32>
    %5 = vector.broadcast %4 : vector<1x192xf32> to vector<16x192xf32>
    %6 = arith.addf %3, %5 : vector<16x192xf32>
    %7 = vector.shape_cast %6 : vector<16x192xf32> to vector<8x2x192xf32>
    %8 = arith.truncf %7 : vector<8x2x192xf32> to vector<8x2x192xbf16>
    %c0_6 = arith.constant 0 : index
    %c0_7 = arith.constant 0 : index
    %c0_8 = arith.constant 0 : index
    %9 = vector.load %arg17[%c0_6, %c0_7, %c0_8] : memref<8x2x192xbf16, #tpu.memory_space<vmem>>, vector<8x2x192xbf16>
    tpu.vector_store %arg17[%c0_6, %c0_7, %c0_8], %8 {strides = array<i32>} : memref<8x2x192xbf16, #tpu.memory_space<vmem>>, vector<8x2x192xbf16>,
    %c0_9 = arith.constant 0 : index
    %c0_10 = arith.constant 0 : index
    %10 = vector.load %arg4[%c0_9, %c0_10] : memref<32x96xbf16, #tpu.memory_space<vmem>>, vector<32x96xbf16>
    %c0_11 = arith.constant 0 : index
    %c0_12 = arith.constant 0 : index
    %11 = vector.load %arg6[%c0_11, %c0_12] : memref<32x96xbf16, #tpu.memory_space<vmem>>, vector<32x96xbf16>
    %c0_13 = arith.constant 0 : index
    %c0_14 = arith.constant 0 : index
    %12 = vector.load %arg5[%c0_13, %c0_14] : memref<1x32xf32, #tpu.memory_space<vmem>>, vector<1x32xf32>
    %c0_15 = arith.constant 0 : index
    %c0_16 = arith.constant 0 : index
    %13 = vector.load %arg7[%c0_15, %c0_16] : memref<1x32xf32, #tpu.memory_space<vmem>>, vector<1x32xf32>
    %cst_17 = arith.constant 0.000000e+00 : f32
    %14 = vector.broadcast %cst_17 : f32 to vector<2x32xf32>
    %c0_i32 = arith.constant 0 : i32
    %c7_i32 = arith.constant 7 : i32
    %15 = arith.subi %c7_i32, %c0_i32 : i32
    %16 = arith.truncf %14 : vector<2x32xf32> to vector<2x32xbf16>
    %cst_18 = arith.constant dense<0.000000e+00> : vector<2x96xf32>
    %17 = tpu.matmul %16, %10, %cst_18 {dimension_numbers = #tpu.dot_dimension_numbers<[1], [0], [0], [1], [0, 0, 1, 1], [], []>} : vector<2x32xbf16>, vector<32x96xbf16>, vector<2x96xf32> -> vector<2x96xf32>
    %18 = arith.truncf %14 : vector<2x32xf32> to vector<2x32xbf16>
    %cst_19 = arith.constant dense<0.000000e+00> : vector<2x96xf32>
    %19 = tpu.matmul %18, %11, %cst_19 {dimension_numbers = #tpu.dot_dimension_numbers<[1], [0], [0], [1], [0, 0, 1, 1], [], []>} : vector<2x32xbf16>, vector<32x96xbf16>, vector<2x96xf32> -> vector<2x96xf32>
    %20 = arith.index_cast %c0_i32 : i32 to index
    %c0_20 = arith.constant 0 : index
    %c0_21 = arith.constant 0 : index
    %21 = vector.load %arg17[%20, %c0_20, %c0_21] : memref<8x2x192xbf16, #tpu.memory_space<vmem>>, vector<1x2x192xbf16>
    %22 = vector.shape_cast %21 : vector<1x2x192xbf16> to vector<2x192xbf16>
    %23 = arith.index_cast %15 : i32 to index
    %c0_22 = arith.constant 0 : index
    %c0_23 = arith.constant 0 : index
    %24 = vector.load %arg17[%23, %c0_22, %c0_23] : memref<8x2x192xbf16, #tpu.memory_space<vmem>>, vector<1x2x192xbf16>
    %25 = vector.shape_cast %24 : vector<1x2x192xbf16> to vector<2x192xbf16>
    %26 = vector.extract_strided_slice %22 {offsets = [0, 0], sizes = [2, 96], strides = [1, 1]} : vector<2x192xbf16> to vector<2x96xbf16>
    %27 = arith.extf %26 : vector<2x96xbf16> to vector<2x96xf32>
    %28 = vector.extract_strided_slice %25 {offsets = [0, 96], sizes = [2, 96], strides = [1, 1]} : vector<2x192xbf16> to vector<2x96xbf16>
    %29 = arith.extf %28 : vector<2x96xbf16> to vector<2x96xf32>
    %30 = vector.extract_strided_slice %27 {offsets = [0, 0], sizes = [2, 32], strides = [1, 1]} : vector<2x96xf32> to vector<2x32xf32>
    %31 = vector.extract_strided_slice %17 {offsets = [0, 0], sizes = [2, 32], strides = [1, 1]} : vector<2x96xf32> to vector<2x32xf32>
    %32 = arith.addf %30, %31 : vector<2x32xf32>
    %33 = arith.negf %32 : vector<2x32xf32>
    %34 = math.exp %33 : vector<2x32xf32>
    %cst_24 = arith.constant 1.000000e+00 : f32
    %35 = vector.broadcast %cst_24 : f32 to vector<2x32xf32>
    %36 = arith.addf %35, %34 : vector<2x32xf32>
    %37 = arith.divf %35, %36 : vector<2x32xf32>
    %38 = vector.extract_strided_slice %27 {offsets = [0, 32], sizes = [2, 32], strides = [1, 1]} : vector<2x96xf32> to vector<2x32xf32>
    %39 = vector.extract_strided_slice %17 {offsets = [0, 32], sizes = [2, 32], strides = [1, 1]} : vector<2x96xf32> to vector<2x32xf32>
    %40 = arith.addf %38, %39 : vector<2x32xf32>
    %41 = arith.negf %40 : vector<2x32xf32>
    %42 = math.exp %41 : vector<2x32xf32>
    %cst_25 = arith.constant 1.000000e+00 : f32
    %43 = vector.broadcast %cst_25 : f32 to vector<2x32xf32>
    %44 = arith.addf %43, %42 : vector<2x32xf32>
    %45 = arith.divf %43, %44 : vector<2x32xf32>
    %46 = vector.extract_strided_slice %27 {offsets = [0, 64], sizes = [2, 32], strides = [1, 1]} : vector<2x96xf32> to vector<2x32xf32>
    %47 = vector.extract_strided_slice %17 {offsets = [0, 64], sizes = [2, 32], strides = [1, 1]} : vector<2x96xf32> to vector<2x32xf32>
    %48 = vector.broadcast %12 : vector<1x32xf32> to vector<2x32xf32>
    %49 = arith.addf %47, %48 : vector<2x32xf32>
    %50 = arith.mulf %37, %49 : vector<2x32xf32>
    %51 = arith.addf %46, %50 : vector<2x32xf32>
    %52 = math.tanh %51 : vector<2x32xf32>
    %cst_26 = arith.constant 1.000000e+00 : f32
    %53 = vector.broadcast %cst_26 : f32 to vector<2x32xf32>
    %54 = arith.subf %53, %45 : vector<2x32xf32>
    %55 = arith.mulf %54, %52 : vector<2x32xf32>
    %56 = arith.mulf %45, %14 : vector<2x32xf32>
    %57 = arith.addf %55, %56 : vector<2x32xf32>
    %58 = vector.extract_strided_slice %29 {offsets = [0, 0], sizes = [2, 32], strides = [1, 1]} : vector<2x96xf32> to vector<2x32xf32>
    %59 = vector.extract_strided_slice %19 {offsets = [0, 0], sizes = [2, 32], strides = [1, 1]} : vector<2x96xf32> to vector<2x32xf32>
    %60 = arith.addf %58, %59 : vector<2x32xf32>
    %61 = arith.negf %60 : vector<2x32xf32>
    %62 = math.exp %61 : vector<2x32xf32>
    %cst_27 = arith.constant 1.000000e+00 : f32
    %63 = vector.broadcast %cst_27 : f32 to vector<2x32xf32>
    %64 = arith.addf %63, %62 : vector<2x32xf32>
    %65 = arith.divf %63, %64 : vector<2x32xf32>
    %66 = vector.extract_strided_slice %29 {offsets = [0, 32], sizes = [2, 32], strides = [1, 1]} : vector<2x96xf32> to vector<2x32xf32>
    %67 = vector.extract_strided_slice %19 {offsets = [0, 32], sizes = [2, 32], strides = [1, 1]} : vector<2x96xf32> to vector<2x32xf32>
    %68 = arith.addf %66, %67 : vector<2x32xf32>
    %69 = arith.negf %68 : vector<2x32xf32>
    %70 = math.exp %69 : vector<2x32xf32>
    %cst_28 = arith.constant 1.000000e+00 : f32
    %71 = vector.broadcast %cst_28 : f32 to vector<2x32xf32>
    %72 = arith.addf %71, %70 : vector<2x32xf32>
    %73 = arith.divf %71, %72 : vector<2x32xf32>
    %74 = vector.extract_strided_slice %29 {offsets = [0, 64], sizes = [2, 32], strides = [1, 1]} : vector<2x96xf32> to vector<2x32xf32>
    %75 = vector.extract_strided_slice %19 {offsets = [0, 64], sizes = [2, 32], strides = [1, 1]} : vector<2x96xf32> to vector<2x32xf32>
    %76 = vector.broadcast %13 : vector<1x32xf32> to vector<2x32xf32>
    %77 = arith.addf %75, %76 : vector<2x32xf32>
    %78 = arith.mulf %65, %77 : vector<2x32xf32>
    %79 = arith.addf %74, %78 : vector<2x32xf32>
    %80 = math.tanh %79 : vector<2x32xf32>
    %cst_29 = arith.constant 1.000000e+00 : f32
    %81 = vector.broadcast %cst_29 : f32 to vector<2x32xf32>
    %82 = arith.subf %81, %73 : vector<2x32xf32>
    %83 = arith.mulf %82, %80 : vector<2x32xf32>
    %84 = arith.mulf %73, %14 : vector<2x32xf32>
    %85 = arith.addf %83, %84 : vector<2x32xf32>
    %86 = arith.truncf %57 : vector<2x32xf32> to vector<2x32xbf16>
    %87 = arith.index_cast %c0_i32 : i32 to index
    %c0_30 = arith.constant 0 : index
    %c0_31 = arith.constant 0 : index
    %88 = vector.load %arg18[%87, %c0_30, %c0_31] : memref<8x2x32xbf16, #tpu.memory_space<vmem>>, vector<1x2x32xbf16>
    %89 = vector.shape_cast %88 : vector<1x2x32xbf16> to vector<2x32xbf16>
    %90 = vector.shape_cast %86 : vector<2x32xbf16> to vector<1x2x32xbf16>
    tpu.vector_store %arg18[%87, %c0_30, %c0_31], %90 {strides = array<i32>} : memref<8x2x32xbf16, #tpu.memory_space<vmem>>, vector<1x2x32xbf16>,
    %91 = arith.truncf %85 : vector<2x32xf32> to vector<2x32xbf16>
    %92 = arith.index_cast %15 : i32 to index
    %c0_32 = arith.constant 0 : index
    %c0_33 = arith.constant 0 : index
    %93 = vector.load %arg19[%92, %c0_32, %c0_33] : memref<8x2x32xbf16, #tpu.memory_space<vmem>>, vector<1x2x32xbf16>
    %94 = vector.shape_cast %93 : vector<1x2x32xbf16> to vector<2x32xbf16>
    %95 = vector.shape_cast %91 : vector<2x32xbf16> to vector<1x2x32xbf16>
    tpu.vector_store %arg19[%92, %c0_32, %c0_33], %95 {strides = array<i32>} : memref<8x2x32xbf16, #tpu.memory_space<vmem>>, vector<1x2x32xbf16>,
    %c1_i32 = arith.constant 1 : i32
    %c7_i32_34 = arith.constant 7 : i32
    %96 = arith.subi %c7_i32_34, %c1_i32 : i32
    %97 = arith.truncf %57 : vector<2x32xf32> to vector<2x32xbf16>
    %cst_35 = arith.constant dense<0.000000e+00> : vector<2x96xf32>
    %98 = tpu.matmul %97, %10, %cst_35 {dimension_numbers = #tpu.dot_dimension_numbers<[1], [0], [0], [1], [0, 0, 1, 1], [], []>} : vector<2x32xbf16>, vector<32x96xbf16>, vector<2x96xf32> -> vector<2x96xf32>
    %99 = arith.truncf %85 : vector<2x32xf32> to vector<2x32xbf16>
    %cst_36 = arith.constant dense<0.000000e+00> : vector<2x96xf32>
    %100 = tpu.matmul %99, %11, %cst_36 {dimension_numbers = #tpu.dot_dimension_numbers<[1], [0], [0], [1], [0, 0, 1, 1], [], []>} : vector<2x32xbf16>, vector<32x96xbf16>, vector<2x96xf32> -> vector<2x96xf32>
    %101 = arith.index_cast %c1_i32 : i32 to index
    %c0_37 = arith.constant 0 : index
    %c0_38 = arith.constant 0 : index
    %102 = vector.load %arg17[%101, %c0_37, %c0_38] : memref<8x2x192xbf16, #tpu.memory_space<vmem>>, vector<1x2x192xbf16>
    %103 = vector.shape_cast %102 : vector<1x2x192xbf16> to vector<2x192xbf16>
    %104 = arith.index_cast %96 : i32 to index
    %c0_39 = arith.constant 0 : index
    %c0_40 = arith.constant 0 : index
    %105 = vector.load %arg17[%104, %c0_39, %c0_40] : memref<8x2x192xbf16, #tpu.memory_space<vmem>>, vector<1x2x192xbf16>
    %106 = vector.shape_cast %105 : vector<1x2x192xbf16> to vector<2x192xbf16>
    %107 = vector.extract_strided_slice %103 {offsets = [0, 0], sizes = [2, 96], strides = [1, 1]} : vector<2x192xbf16> to vector<2x96xbf16>
    %108 = arith.extf %107 : vector<2x96xbf16> to vector<2x96xf32>
    %109 = vector.extract_strided_slice %106 {offsets = [0, 96], sizes = [2, 96], strides = [1, 1]} : vector<2x192xbf16> to vector<2x96xbf16>
    %110 = arith.extf %109 : vector<2x96xbf16> to vector<2x96xf32>
    %111 = vector.extract_strided_slice %108 {offsets = [0, 0], sizes = [2, 32], strides = [1, 1]} : vector<2x96xf32> to vector<2x32xf32>
    %112 = vector.extract_strided_slice %98 {offsets = [0, 0], sizes = [2, 32], strides = [1, 1]} : vector<2x96xf32> to vector<2x32xf32>
    %113 = arith.addf %111, %112 : vector<2x32xf32>
    %114 = arith.negf %113 : vector<2x32xf32>
    %115 = math.exp %114 : vector<2x32xf32>
    %cst_41 = arith.constant 1.000000e+00 : f32
    %116 = vector.broadcast %cst_41 : f32 to vector<2x32xf32>
    %117 = arith.addf %116, %115 : vector<2x32xf32>
    %118 = arith.divf %116, %117 : vector<2x32xf32>
    %119 = vector.extract_strided_slice %108 {offsets = [0, 32], sizes = [2, 32], strides = [1, 1]} : vector<2x96xf32> to vector<2x32xf32>
    %120 = vector.extract_strided_slice %98 {offsets = [0, 32], sizes = [2, 32], strides = [1, 1]} : vector<2x96xf32> to vector<2x32xf32>
    %121 = arith.addf %119, %120 : vector<2x32xf32>
    %122 = arith.negf %121 : vector<2x32xf32>
    %123 = math.exp %122 : vector<2x32xf32>
    %cst_42 = arith.constant 1.000000e+00 : f32
    %124 = vector.broadcast %cst_42 : f32 to vector<2x32xf32>
    %125 = arith.addf %124, %123 : vector<2x32xf32>
    %126 = arith.divf %124, %125 : vector<2x32xf32>
    %127 = vector.extract_strided_slice %108 {offsets = [0, 64], sizes = [2, 32], strides = [1, 1]} : vector<2x96xf32> to vector<2x32xf32>
    %128 = vector.extract_strided_slice %98 {offsets = [0, 64], sizes = [2, 32], strides = [1, 1]} : vector<2x96xf32> to vector<2x32xf32>
    %129 = vector.broadcast %12 : vector<1x32xf32> to vector<2x32xf32>
    %130 = arith.addf %128, %129 : vector<2x32xf32>
    %131 = arith.mulf %118, %130 : vector<2x32xf32>
    %132 = arith.addf %127, %131 : vector<2x32xf32>
    %133 = math.tanh %132 : vector<2x32xf32>
    %cst_43 = arith.constant 1.000000e+00 : f32
    %134 = vector.broadcast %cst_43 : f32 to vector<2x32xf32>
    %135 = arith.subf %134, %126 : vector<2x32xf32>
    %136 = arith.mulf %135, %133 : vector<2x32xf32>
    %137 = arith.mulf %126, %57 : vector<2x32xf32>
    %138 = arith.addf %136, %137 : vector<2x32xf32>
    %139 = vector.extract_strided_slice %110 {offsets = [0, 0], sizes = [2, 32], strides = [1, 1]} : vector<2x96xf32> to vector<2x32xf32>
    %140 = vector.extract_strided_slice %100 {offsets = [0, 0], sizes = [2, 32], strides = [1, 1]} : vector<2x96xf32> to vector<2x32xf32>
    %141 = arith.addf %139, %140 : vector<2x32xf32>
    %142 = arith.negf %141 : vector<2x32xf32>
    %143 = math.exp %142 : vector<2x32xf32>
    %cst_44 = arith.constant 1.000000e+00 : f32
    %144 = vector.broadcast %cst_44 : f32 to vector<2x32xf32>
    %145 = arith.addf %144, %143 : vector<2x32xf32>
    %146 = arith.divf %144, %145 : vector<2x32xf32>
    %147 = vector.extract_strided_slice %110 {offsets = [0, 32], sizes = [2, 32], strides = [1, 1]} : vector<2x96xf32> to vector<2x32xf32>
    %148 = vector.extract_strided_slice %100 {offsets = [0, 32], sizes = [2, 32], strides = [1, 1]} : vector<2x96xf32> to vector<2x32xf32>
    %149 = arith.addf %147, %148 : vector<2x32xf32>
    %150 = arith.negf %149 : vector<2x32xf32>
    %151 = math.exp %150 : vector<2x32xf32>
    %cst_45 = arith.constant 1.000000e+00 : f32
    %152 = vector.broadcast %cst_45 : f32 to vector<2x32xf32>
    %153 = arith.addf %152, %151 : vector<2x32xf32>
    %154 = arith.divf %152, %153 : vector<2x32xf32>
    %155 = vector.extract_strided_slice %110 {offsets = [0, 64], sizes = [2, 32], strides = [1, 1]} : vector<2x96xf32> to vector<2x32xf32>
    %156 = vector.extract_strided_slice %100 {offsets = [0, 64], sizes = [2, 32], strides = [1, 1]} : vector<2x96xf32> to vector<2x32xf32>
    %157 = vector.broadcast %13 : vector<1x32xf32> to vector<2x32xf32>
    %158 = arith.addf %156, %157 : vector<2x32xf32>
    %159 = arith.mulf %146, %158 : vector<2x32xf32>
    %160 = arith.addf %155, %159 : vector<2x32xf32>
    %161 = math.tanh %160 : vector<2x32xf32>
    %cst_46 = arith.constant 1.000000e+00 : f32
    %162 = vector.broadcast %cst_46 : f32 to vector<2x32xf32>
    %163 = arith.subf %162, %154 : vector<2x32xf32>
    %164 = arith.mulf %163, %161 : vector<2x32xf32>
    %165 = arith.mulf %154, %85 : vector<2x32xf32>
    %166 = arith.addf %164, %165 : vector<2x32xf32>
    %167 = arith.truncf %138 : vector<2x32xf32> to vector<2x32xbf16>
    %168 = arith.index_cast %c1_i32 : i32 to index
    %c0_47 = arith.constant 0 : index
    %c0_48 = arith.constant 0 : index
    %169 = vector.load %arg18[%168, %c0_47, %c0_48] : memref<8x2x32xbf16, #tpu.memory_space<vmem>>, vector<1x2x32xbf16>
    %170 = vector.shape_cast %169 : vector<1x2x32xbf16> to vector<2x32xbf16>
    %171 = vector.shape_cast %167 : vector<2x32xbf16> to vector<1x2x32xbf16>
    tpu.vector_store %arg18[%168, %c0_47, %c0_48], %171 {strides = array<i32>} : memref<8x2x32xbf16, #tpu.memory_space<vmem>>, vector<1x2x32xbf16>,
    %172 = arith.truncf %166 : vector<2x32xf32> to vector<2x32xbf16>
    %173 = arith.index_cast %96 : i32 to index
    %c0_49 = arith.constant 0 : index
    %c0_50 = arith.constant 0 : index
    %174 = vector.load %arg19[%173, %c0_49, %c0_50] : memref<8x2x32xbf16, #tpu.memory_space<vmem>>, vector<1x2x32xbf16>
    %175 = vector.shape_cast %174 : vector<1x2x32xbf16> to vector<2x32xbf16>
    %176 = vector.shape_cast %172 : vector<2x32xbf16> to vector<1x2x32xbf16>
    tpu.vector_store %arg19[%173, %c0_49, %c0_50], %176 {strides = array<i32>} : memref<8x2x32xbf16, #tpu.memory_space<vmem>>, vector<1x2x32xbf16>,
    %c2_i32 = arith.constant 2 : i32
    %c7_i32_51 = arith.constant 7 : i32
    %177 = arith.subi %c7_i32_51, %c2_i32 : i32
    %178 = arith.truncf %138 : vector<2x32xf32> to vector<2x32xbf16>
    %cst_52 = arith.constant dense<0.000000e+00> : vector<2x96xf32>
    %179 = tpu.matmul %178, %10, %cst_52 {dimension_numbers = #tpu.dot_dimension_numbers<[1], [0], [0], [1], [0, 0, 1, 1], [], []>} : vector<2x32xbf16>, vector<32x96xbf16>, vector<2x96xf32> -> vector<2x96xf32>
    %180 = arith.truncf %166 : vector<2x32xf32> to vector<2x32xbf16>
    %cst_53 = arith.constant dense<0.000000e+00> : vector<2x96xf32>
    %181 = tpu.matmul %180, %11, %cst_53 {dimension_numbers = #tpu.dot_dimension_numbers<[1], [0], [0], [1], [0, 0, 1, 1], [], []>} : vector<2x32xbf16>, vector<32x96xbf16>, vector<2x96xf32> -> vector<2x96xf32>
    %182 = arith.index_cast %c2_i32 : i32 to index
    %c0_54 = arith.constant 0 : index
    %c0_55 = arith.constant 0 : index
    %183 = vector.load %arg17[%182, %c0_54, %c0_55] : memref<8x2x192xbf16, #tpu.memory_space<vmem>>, vector<1x2x192xbf16>
    %184 = vector.shape_cast %183 : vector<1x2x192xbf16> to vector<2x192xbf16>
    %185 = arith.index_cast %177 : i32 to index
    %c0_56 = arith.constant 0 : index
    %c0_57 = arith.constant 0 : index
    %186 = vector.load %arg17[%185, %c0_56, %c0_57] : memref<8x2x192xbf16, #tpu.memory_space<vmem>>, vector<1x2x192xbf16>
    %187 = vector.shape_cast %186 : vector<1x2x192xbf16> to vector<2x192xbf16>
    %188 = vector.extract_strided_slice %184 {offsets = [0, 0], sizes = [2, 96], strides = [1, 1]} : vector<2x192xbf16> to vector<2x96xbf16>
    %189 = arith.extf %188 : vector<2x96xbf16> to vector<2x96xf32>
    %190 = vector.extract_strided_slice %187 {offsets = [0, 96], sizes = [2, 96], strides = [1, 1]} : vector<2x192xbf16> to vector<2x96xbf16>
    %191 = arith.extf %190 : vector<2x96xbf16> to vector<2x96xf32>
    %192 = vector.extract_strided_slice %189 {offsets = [0, 0], sizes = [2, 32], strides = [1, 1]} : vector<2x96xf32> to vector<2x32xf32>
    %193 = vector.extract_strided_slice %179 {offsets = [0, 0], sizes = [2, 32], strides = [1, 1]} : vector<2x96xf32> to vector<2x32xf32>
    %194 = arith.addf %192, %193 : vector<2x32xf32>
    %195 = arith.negf %194 : vector<2x32xf32>
    %196 = math.exp %195 : vector<2x32xf32>
    %cst_58 = arith.constant 1.000000e+00 : f32
    %197 = vector.broadcast %cst_58 : f32 to vector<2x32xf32>
    %198 = arith.addf %197, %196 : vector<2x32xf32>
    %199 = arith.divf %197, %198 : vector<2x32xf32>
    %200 = vector.extract_strided_slice %189 {offsets = [0, 32], sizes = [2, 32], strides = [1, 1]} : vector<2x96xf32> to vector<2x32xf32>
    %201 = vector.extract_strided_slice %179 {offsets = [0, 32], sizes = [2, 32], strides = [1, 1]} : vector<2x96xf32> to vector<2x32xf32>
    %202 = arith.addf %200, %201 : vector<2x32xf32>
    %203 = arith.negf %202 : vector<2x32xf32>
    %204 = math.exp %203 : vector<2x32xf32>
    %cst_59 = arith.constant 1.000000e+00 : f32
    %205 = vector.broadcast %cst_59 : f32 to vector<2x32xf32>
    %206 = arith.addf %205, %204 : vector<2x32xf32>
    %207 = arith.divf %205, %206 : vector<2x32xf32>
    %208 = vector.extract_strided_slice %189 {offsets = [0, 64], sizes = [2, 32], strides = [1, 1]} : vector<2x96xf32> to vector<2x32xf32>
    %209 = vector.extract_strided_slice %179 {offsets = [0, 64], sizes = [2, 32], strides = [1, 1]} : vector<2x96xf32> to vector<2x32xf32>
    %210 = vector.broadcast %12 : vector<1x32xf32> to vector<2x32xf32>
    %211 = arith.addf %209, %210 : vector<2x32xf32>
    %212 = arith.mulf %199, %211 : vector<2x32xf32>
    %213 = arith.addf %208, %212 : vector<2x32xf32>
    %214 = math.tanh %213 : vector<2x32xf32>
    %cst_60 = arith.constant 1.000000e+00 : f32
    %215 = vector.broadcast %cst_60 : f32 to vector<2x32xf32>
    %216 = arith.subf %215, %207 : vector<2x32xf32>
    %217 = arith.mulf %216, %214 : vector<2x32xf32>
    %218 = arith.mulf %207, %138 : vector<2x32xf32>
    %219 = arith.addf %217, %218 : vector<2x32xf32>
    %220 = vector.extract_strided_slice %191 {offsets = [0, 0], sizes = [2, 32], strides = [1, 1]} : vector<2x96xf32> to vector<2x32xf32>
    %221 = vector.extract_strided_slice %181 {offsets = [0, 0], sizes = [2, 32], strides = [1, 1]} : vector<2x96xf32> to vector<2x32xf32>
    %222 = arith.addf %220, %221 : vector<2x32xf32>
    %223 = arith.negf %222 : vector<2x32xf32>
    %224 = math.exp %223 : vector<2x32xf32>
    %cst_61 = arith.constant 1.000000e+00 : f32
    %225 = vector.broadcast %cst_61 : f32 to vector<2x32xf32>
    %226 = arith.addf %225, %224 : vector<2x32xf32>
    %227 = arith.divf %225, %226 : vector<2x32xf32>
    %228 = vector.extract_strided_slice %191 {offsets = [0, 32], sizes = [2, 32], strides = [1, 1]} : vector<2x96xf32> to vector<2x32xf32>
    %229 = vector.extract_strided_slice %181 {offsets = [0, 32], sizes = [2, 32], strides = [1, 1]} : vector<2x96xf32> to vector<2x32xf32>
    %230 = arith.addf %228, %229 : vector<2x32xf32>
    %231 = arith.negf %230 : vector<2x32xf32>
    %232 = math.exp %231 : vector<2x32xf32>
    %cst_62 = arith.constant 1.000000e+00 : f32
    %233 = vector.broadcast %cst_62 : f32 to vector<2x32xf32>
    %234 = arith.addf %233, %232 : vector<2x32xf32>
    %235 = arith.divf %233, %234 : vector<2x32xf32>
    %236 = vector.extract_strided_slice %191 {offsets = [0, 64], sizes = [2, 32], strides = [1, 1]} : vector<2x96xf32> to vector<2x32xf32>
    %237 = vector.extract_strided_slice %181 {offsets = [0, 64], sizes = [2, 32], strides = [1, 1]} : vector<2x96xf32> to vector<2x32xf32>
    %238 = vector.broadcast %13 : vector<1x32xf32> to vector<2x32xf32>
    %239 = arith.addf %237, %238 : vector<2x32xf32>
    %240 = arith.mulf %227, %239 : vector<2x32xf32>
    %241 = arith.addf %236, %240 : vector<2x32xf32>
    %242 = math.tanh %241 : vector<2x32xf32>
    %cst_63 = arith.constant 1.000000e+00 : f32
    %243 = vector.broadcast %cst_63 : f32 to vector<2x32xf32>
    %244 = arith.subf %243, %235 : vector<2x32xf32>
    %245 = arith.mulf %244, %242 : vector<2x32xf32>
    %246 = arith.mulf %235, %166 : vector<2x32xf32>
    %247 = arith.addf %245, %246 : vector<2x32xf32>
    %248 = arith.truncf %219 : vector<2x32xf32> to vector<2x32xbf16>
    %249 = arith.index_cast %c2_i32 : i32 to index
    %c0_64 = arith.constant 0 : index
    %c0_65 = arith.constant 0 : index
    %250 = vector.load %arg18[%249, %c0_64, %c0_65] : memref<8x2x32xbf16, #tpu.memory_space<vmem>>, vector<1x2x32xbf16>
    %251 = vector.shape_cast %250 : vector<1x2x32xbf16> to vector<2x32xbf16>
    %252 = vector.shape_cast %248 : vector<2x32xbf16> to vector<1x2x32xbf16>
    tpu.vector_store %arg18[%249, %c0_64, %c0_65], %252 {strides = array<i32>} : memref<8x2x32xbf16, #tpu.memory_space<vmem>>, vector<1x2x32xbf16>,
    %253 = arith.truncf %247 : vector<2x32xf32> to vector<2x32xbf16>
    %254 = arith.index_cast %177 : i32 to index
    %c0_66 = arith.constant 0 : index
    %c0_67 = arith.constant 0 : index
    %255 = vector.load %arg19[%254, %c0_66, %c0_67] : memref<8x2x32xbf16, #tpu.memory_space<vmem>>, vector<1x2x32xbf16>
    %256 = vector.shape_cast %255 : vector<1x2x32xbf16> to vector<2x32xbf16>
    %257 = vector.shape_cast %253 : vector<2x32xbf16> to vector<1x2x32xbf16>
    tpu.vector_store %arg19[%254, %c0_66, %c0_67], %257 {strides = array<i32>} : memref<8x2x32xbf16, #tpu.memory_space<vmem>>, vector<1x2x32xbf16>,
    %c3_i32 = arith.constant 3 : i32
    %c7_i32_68 = arith.constant 7 : i32
    %258 = arith.subi %c7_i32_68, %c3_i32 : i32
    %259 = arith.truncf %219 : vector<2x32xf32> to vector<2x32xbf16>
    %cst_69 = arith.constant dense<0.000000e+00> : vector<2x96xf32>
    %260 = tpu.matmul %259, %10, %cst_69 {dimension_numbers = #tpu.dot_dimension_numbers<[1], [0], [0], [1], [0, 0, 1, 1], [], []>} : vector<2x32xbf16>, vector<32x96xbf16>, vector<2x96xf32> -> vector<2x96xf32>
    %261 = arith.truncf %247 : vector<2x32xf32> to vector<2x32xbf16>
    %cst_70 = arith.constant dense<0.000000e+00> : vector<2x96xf32>
    %262 = tpu.matmul %261, %11, %cst_70 {dimension_numbers = #tpu.dot_dimension_numbers<[1], [0], [0], [1], [0, 0, 1, 1], [], []>} : vector<2x32xbf16>, vector<32x96xbf16>, vector<2x96xf32> -> vector<2x96xf32>
    %263 = arith.index_cast %c3_i32 : i32 to index
    %c0_71 = arith.constant 0 : index
    %c0_72 = arith.constant 0 : index
    %264 = vector.load %arg17[%263, %c0_71, %c0_72] : memref<8x2x192xbf16, #tpu.memory_space<vmem>>, vector<1x2x192xbf16>
    %265 = vector.shape_cast %264 : vector<1x2x192xbf16> to vector<2x192xbf16>
    %266 = arith.index_cast %258 : i32 to index
    %c0_73 = arith.constant 0 : index
    %c0_74 = arith.constant 0 : index
    %267 = vector.load %arg17[%266, %c0_73, %c0_74] : memref<8x2x192xbf16, #tpu.memory_space<vmem>>, vector<1x2x192xbf16>
    %268 = vector.shape_cast %267 : vector<1x2x192xbf16> to vector<2x192xbf16>
    %269 = vector.extract_strided_slice %265 {offsets = [0, 0], sizes = [2, 96], strides = [1, 1]} : vector<2x192xbf16> to vector<2x96xbf16>
    %270 = arith.extf %269 : vector<2x96xbf16> to vector<2x96xf32>
    %271 = vector.extract_strided_slice %268 {offsets = [0, 96], sizes = [2, 96], strides = [1, 1]} : vector<2x192xbf16> to vector<2x96xbf16>
    %272 = arith.extf %271 : vector<2x96xbf16> to vector<2x96xf32>
    %273 = vector.extract_strided_slice %270 {offsets = [0, 0], sizes = [2, 32], strides = [1, 1]} : vector<2x96xf32> to vector<2x32xf32>
    %274 = vector.extract_strided_slice %260 {offsets = [0, 0], sizes = [2, 32], strides = [1, 1]} : vector<2x96xf32> to vector<2x32xf32>
    %275 = arith.addf %273, %274 : vector<2x32xf32>
    %276 = arith.negf %275 : vector<2x32xf32>
    %277 = math.exp %276 : vector<2x32xf32>
    %cst_75 = arith.constant 1.000000e+00 : f32
    %278 = vector.broadcast %cst_75 : f32 to vector<2x32xf32>
    %279 = arith.addf %278, %277 : vector<2x32xf32>
    %280 = arith.divf %278, %279 : vector<2x32xf32>
    %281 = vector.extract_strided_slice %270 {offsets = [0, 32], sizes = [2, 32], strides = [1, 1]} : vector<2x96xf32> to vector<2x32xf32>
    %282 = vector.extract_strided_slice %260 {offsets = [0, 32], sizes = [2, 32], strides = [1, 1]} : vector<2x96xf32> to vector<2x32xf32>
    %283 = arith.addf %281, %282 : vector<2x32xf32>
    %284 = arith.negf %283 : vector<2x32xf32>
    %285 = math.exp %284 : vector<2x32xf32>
    %cst_76 = arith.constant 1.000000e+00 : f32
    %286 = vector.broadcast %cst_76 : f32 to vector<2x32xf32>
    %287 = arith.addf %286, %285 : vector<2x32xf32>
    %288 = arith.divf %286, %287 : vector<2x32xf32>
    %289 = vector.extract_strided_slice %270 {offsets = [0, 64], sizes = [2, 32], strides = [1, 1]} : vector<2x96xf32> to vector<2x32xf32>
    %290 = vector.extract_strided_slice %260 {offsets = [0, 64], sizes = [2, 32], strides = [1, 1]} : vector<2x96xf32> to vector<2x32xf32>
    %291 = vector.broadcast %12 : vector<1x32xf32> to vector<2x32xf32>
    %292 = arith.addf %290, %291 : vector<2x32xf32>
    %293 = arith.mulf %280, %292 : vector<2x32xf32>
    %294 = arith.addf %289, %293 : vector<2x32xf32>
    %295 = math.tanh %294 : vector<2x32xf32>
    %cst_77 = arith.constant 1.000000e+00 : f32
    %296 = vector.broadcast %cst_77 : f32 to vector<2x32xf32>
    %297 = arith.subf %296, %288 : vector<2x32xf32>
    %298 = arith.mulf %297, %295 : vector<2x32xf32>
    %299 = arith.mulf %288, %219 : vector<2x32xf32>
    %300 = arith.addf %298, %299 : vector<2x32xf32>
    %301 = vector.extract_strided_slice %272 {offsets = [0, 0], sizes = [2, 32], strides = [1, 1]} : vector<2x96xf32> to vector<2x32xf32>
    %302 = vector.extract_strided_slice %262 {offsets = [0, 0], sizes = [2, 32], strides = [1, 1]} : vector<2x96xf32> to vector<2x32xf32>
    %303 = arith.addf %301, %302 : vector<2x32xf32>
    %304 = arith.negf %303 : vector<2x32xf32>
    %305 = math.exp %304 : vector<2x32xf32>
    %cst_78 = arith.constant 1.000000e+00 : f32
    %306 = vector.broadcast %cst_78 : f32 to vector<2x32xf32>
    %307 = arith.addf %306, %305 : vector<2x32xf32>
    %308 = arith.divf %306, %307 : vector<2x32xf32>
    %309 = vector.extract_strided_slice %272 {offsets = [0, 32], sizes = [2, 32], strides = [1, 1]} : vector<2x96xf32> to vector<2x32xf32>
    %310 = vector.extract_strided_slice %262 {offsets = [0, 32], sizes = [2, 32], strides = [1, 1]} : vector<2x96xf32> to vector<2x32xf32>
    %311 = arith.addf %309, %310 : vector<2x32xf32>
    %312 = arith.negf %311 : vector<2x32xf32>
    %313 = math.exp %312 : vector<2x32xf32>
    %cst_79 = arith.constant 1.000000e+00 : f32
    %314 = vector.broadcast %cst_79 : f32 to vector<2x32xf32>
    %315 = arith.addf %314, %313 : vector<2x32xf32>
    %316 = arith.divf %314, %315 : vector<2x32xf32>
    %317 = vector.extract_strided_slice %272 {offsets = [0, 64], sizes = [2, 32], strides = [1, 1]} : vector<2x96xf32> to vector<2x32xf32>
    %318 = vector.extract_strided_slice %262 {offsets = [0, 64], sizes = [2, 32], strides = [1, 1]} : vector<2x96xf32> to vector<2x32xf32>
    %319 = vector.broadcast %13 : vector<1x32xf32> to vector<2x32xf32>
    %320 = arith.addf %318, %319 : vector<2x32xf32>
    %321 = arith.mulf %308, %320 : vector<2x32xf32>
    %322 = arith.addf %317, %321 : vector<2x32xf32>
    %323 = math.tanh %322 : vector<2x32xf32>
    %cst_80 = arith.constant 1.000000e+00 : f32
    %324 = vector.broadcast %cst_80 : f32 to vector<2x32xf32>
    %325 = arith.subf %324, %316 : vector<2x32xf32>
    %326 = arith.mulf %325, %323 : vector<2x32xf32>
    %327 = arith.mulf %316, %247 : vector<2x32xf32>
    %328 = arith.addf %326, %327 : vector<2x32xf32>
    %329 = arith.truncf %300 : vector<2x32xf32> to vector<2x32xbf16>
    %330 = arith.index_cast %c3_i32 : i32 to index
    %c0_81 = arith.constant 0 : index
    %c0_82 = arith.constant 0 : index
    %331 = vector.load %arg18[%330, %c0_81, %c0_82] : memref<8x2x32xbf16, #tpu.memory_space<vmem>>, vector<1x2x32xbf16>
    %332 = vector.shape_cast %331 : vector<1x2x32xbf16> to vector<2x32xbf16>
    %333 = vector.shape_cast %329 : vector<2x32xbf16> to vector<1x2x32xbf16>
    tpu.vector_store %arg18[%330, %c0_81, %c0_82], %333 {strides = array<i32>} : memref<8x2x32xbf16, #tpu.memory_space<vmem>>, vector<1x2x32xbf16>,
    %334 = arith.truncf %328 : vector<2x32xf32> to vector<2x32xbf16>
    %335 = arith.index_cast %258 : i32 to index
    %c0_83 = arith.constant 0 : index
    %c0_84 = arith.constant 0 : index
    %336 = vector.load %arg19[%335, %c0_83, %c0_84] : memref<8x2x32xbf16, #tpu.memory_space<vmem>>, vector<1x2x32xbf16>
    %337 = vector.shape_cast %336 : vector<1x2x32xbf16> to vector<2x32xbf16>
    %338 = vector.shape_cast %334 : vector<2x32xbf16> to vector<1x2x32xbf16>
    tpu.vector_store %arg19[%335, %c0_83, %c0_84], %338 {strides = array<i32>} : memref<8x2x32xbf16, #tpu.memory_space<vmem>>, vector<1x2x32xbf16>,
    %c4_i32 = arith.constant 4 : i32
    %c7_i32_85 = arith.constant 7 : i32
    %339 = arith.subi %c7_i32_85, %c4_i32 : i32
    %340 = arith.truncf %300 : vector<2x32xf32> to vector<2x32xbf16>
    %cst_86 = arith.constant dense<0.000000e+00> : vector<2x96xf32>
    %341 = tpu.matmul %340, %10, %cst_86 {dimension_numbers = #tpu.dot_dimension_numbers<[1], [0], [0], [1], [0, 0, 1, 1], [], []>} : vector<2x32xbf16>, vector<32x96xbf16>, vector<2x96xf32> -> vector<2x96xf32>
    %342 = arith.truncf %328 : vector<2x32xf32> to vector<2x32xbf16>
    %cst_87 = arith.constant dense<0.000000e+00> : vector<2x96xf32>
    %343 = tpu.matmul %342, %11, %cst_87 {dimension_numbers = #tpu.dot_dimension_numbers<[1], [0], [0], [1], [0, 0, 1, 1], [], []>} : vector<2x32xbf16>, vector<32x96xbf16>, vector<2x96xf32> -> vector<2x96xf32>
    %344 = arith.index_cast %c4_i32 : i32 to index
    %c0_88 = arith.constant 0 : index
    %c0_89 = arith.constant 0 : index
    %345 = vector.load %arg17[%344, %c0_88, %c0_89] : memref<8x2x192xbf16, #tpu.memory_space<vmem>>, vector<1x2x192xbf16>
    %346 = vector.shape_cast %345 : vector<1x2x192xbf16> to vector<2x192xbf16>
    %347 = arith.index_cast %339 : i32 to index
    %c0_90 = arith.constant 0 : index
    %c0_91 = arith.constant 0 : index
    %348 = vector.load %arg17[%347, %c0_90, %c0_91] : memref<8x2x192xbf16, #tpu.memory_space<vmem>>, vector<1x2x192xbf16>
    %349 = vector.shape_cast %348 : vector<1x2x192xbf16> to vector<2x192xbf16>
    %350 = vector.extract_strided_slice %346 {offsets = [0, 0], sizes = [2, 96], strides = [1, 1]} : vector<2x192xbf16> to vector<2x96xbf16>
    %351 = arith.extf %350 : vector<2x96xbf16> to vector<2x96xf32>
    %352 = vector.extract_strided_slice %349 {offsets = [0, 96], sizes = [2, 96], strides = [1, 1]} : vector<2x192xbf16> to vector<2x96xbf16>
    %353 = arith.extf %352 : vector<2x96xbf16> to vector<2x96xf32>
    %354 = vector.extract_strided_slice %351 {offsets = [0, 0], sizes = [2, 32], strides = [1, 1]} : vector<2x96xf32> to vector<2x32xf32>
    %355 = vector.extract_strided_slice %341 {offsets = [0, 0], sizes = [2, 32], strides = [1, 1]} : vector<2x96xf32> to vector<2x32xf32>
    %356 = arith.addf %354, %355 : vector<2x32xf32>
    %357 = arith.negf %356 : vector<2x32xf32>
    %358 = math.exp %357 : vector<2x32xf32>
    %cst_92 = arith.constant 1.000000e+00 : f32
    %359 = vector.broadcast %cst_92 : f32 to vector<2x32xf32>
    %360 = arith.addf %359, %358 : vector<2x32xf32>
    %361 = arith.divf %359, %360 : vector<2x32xf32>
    %362 = vector.extract_strided_slice %351 {offsets = [0, 32], sizes = [2, 32], strides = [1, 1]} : vector<2x96xf32> to vector<2x32xf32>
    %363 = vector.extract_strided_slice %341 {offsets = [0, 32], sizes = [2, 32], strides = [1, 1]} : vector<2x96xf32> to vector<2x32xf32>
    %364 = arith.addf %362, %363 : vector<2x32xf32>
    %365 = arith.negf %364 : vector<2x32xf32>
    %366 = math.exp %365 : vector<2x32xf32>
    %cst_93 = arith.constant 1.000000e+00 : f32
    %367 = vector.broadcast %cst_93 : f32 to vector<2x32xf32>
    %368 = arith.addf %367, %366 : vector<2x32xf32>
    %369 = arith.divf %367, %368 : vector<2x32xf32>
    %370 = vector.extract_strided_slice %351 {offsets = [0, 64], sizes = [2, 32], strides = [1, 1]} : vector<2x96xf32> to vector<2x32xf32>
    %371 = vector.extract_strided_slice %341 {offsets = [0, 64], sizes = [2, 32], strides = [1, 1]} : vector<2x96xf32> to vector<2x32xf32>
    %372 = vector.broadcast %12 : vector<1x32xf32> to vector<2x32xf32>
    %373 = arith.addf %371, %372 : vector<2x32xf32>
    %374 = arith.mulf %361, %373 : vector<2x32xf32>
    %375 = arith.addf %370, %374 : vector<2x32xf32>
    %376 = math.tanh %375 : vector<2x32xf32>
    %cst_94 = arith.constant 1.000000e+00 : f32
    %377 = vector.broadcast %cst_94 : f32 to vector<2x32xf32>
    %378 = arith.subf %377, %369 : vector<2x32xf32>
    %379 = arith.mulf %378, %376 : vector<2x32xf32>
    %380 = arith.mulf %369, %300 : vector<2x32xf32>
    %381 = arith.addf %379, %380 : vector<2x32xf32>
    %382 = vector.extract_strided_slice %353 {offsets = [0, 0], sizes = [2, 32], strides = [1, 1]} : vector<2x96xf32> to vector<2x32xf32>
    %383 = vector.extract_strided_slice %343 {offsets = [0, 0], sizes = [2, 32], strides = [1, 1]} : vector<2x96xf32> to vector<2x32xf32>
    %384 = arith.addf %382, %383 : vector<2x32xf32>
    %385 = arith.negf %384 : vector<2x32xf32>
    %386 = math.exp %385 : vector<2x32xf32>
    %cst_95 = arith.constant 1.000000e+00 : f32
    %387 = vector.broadcast %cst_95 : f32 to vector<2x32xf32>
    %388 = arith.addf %387, %386 : vector<2x32xf32>
    %389 = arith.divf %387, %388 : vector<2x32xf32>
    %390 = vector.extract_strided_slice %353 {offsets = [0, 32], sizes = [2, 32], strides = [1, 1]} : vector<2x96xf32> to vector<2x32xf32>
    %391 = vector.extract_strided_slice %343 {offsets = [0, 32], sizes = [2, 32], strides = [1, 1]} : vector<2x96xf32> to vector<2x32xf32>
    %392 = arith.addf %390, %391 : vector<2x32xf32>
    %393 = arith.negf %392 : vector<2x32xf32>
    %394 = math.exp %393 : vector<2x32xf32>
    %cst_96 = arith.constant 1.000000e+00 : f32
    %395 = vector.broadcast %cst_96 : f32 to vector<2x32xf32>
    %396 = arith.addf %395, %394 : vector<2x32xf32>
    %397 = arith.divf %395, %396 : vector<2x32xf32>
    %398 = vector.extract_strided_slice %353 {offsets = [0, 64], sizes = [2, 32], strides = [1, 1]} : vector<2x96xf32> to vector<2x32xf32>
    %399 = vector.extract_strided_slice %343 {offsets = [0, 64], sizes = [2, 32], strides = [1, 1]} : vector<2x96xf32> to vector<2x32xf32>
    %400 = vector.broadcast %13 : vector<1x32xf32> to vector<2x32xf32>
    %401 = arith.addf %399, %400 : vector<2x32xf32>
    %402 = arith.mulf %389, %401 : vector<2x32xf32>
    %403 = arith.addf %398, %402 : vector<2x32xf32>
    %404 = math.tanh %403 : vector<2x32xf32>
    %cst_97 = arith.constant 1.000000e+00 : f32
    %405 = vector.broadcast %cst_97 : f32 to vector<2x32xf32>
    %406 = arith.subf %405, %397 : vector<2x32xf32>
    %407 = arith.mulf %406, %404 : vector<2x32xf32>
    %408 = arith.mulf %397, %328 : vector<2x32xf32>
    %409 = arith.addf %407, %408 : vector<2x32xf32>
    %410 = arith.truncf %381 : vector<2x32xf32> to vector<2x32xbf16>
    %411 = arith.index_cast %c4_i32 : i32 to index
    %c0_98 = arith.constant 0 : index
    %c0_99 = arith.constant 0 : index
    %412 = vector.load %arg18[%411, %c0_98, %c0_99] : memref<8x2x32xbf16, #tpu.memory_space<vmem>>, vector<1x2x32xbf16>
    %413 = vector.shape_cast %412 : vector<1x2x32xbf16> to vector<2x32xbf16>
    %414 = vector.shape_cast %410 : vector<2x32xbf16> to vector<1x2x32xbf16>
    tpu.vector_store %arg18[%411, %c0_98, %c0_99], %414 {strides = array<i32>} : memref<8x2x32xbf16, #tpu.memory_space<vmem>>, vector<1x2x32xbf16>,
    %415 = arith.truncf %409 : vector<2x32xf32> to vector<2x32xbf16>
    %416 = arith.index_cast %339 : i32 to index
    %c0_100 = arith.constant 0 : index
    %c0_101 = arith.constant 0 : index
    %417 = vector.load %arg19[%416, %c0_100, %c0_101] : memref<8x2x32xbf16, #tpu.memory_space<vmem>>, vector<1x2x32xbf16>
    %418 = vector.shape_cast %417 : vector<1x2x32xbf16> to vector<2x32xbf16>
    %419 = vector.shape_cast %415 : vector<2x32xbf16> to vector<1x2x32xbf16>
    tpu.vector_store %arg19[%416, %c0_100, %c0_101], %419 {strides = array<i32>} : memref<8x2x32xbf16, #tpu.memory_space<vmem>>, vector<1x2x32xbf16>,
    %c5_i32 = arith.constant 5 : i32
    %c7_i32_102 = arith.constant 7 : i32
    %420 = arith.subi %c7_i32_102, %c5_i32 : i32
    %421 = arith.truncf %381 : vector<2x32xf32> to vector<2x32xbf16>
    %cst_103 = arith.constant dense<0.000000e+00> : vector<2x96xf32>
    %422 = tpu.matmul %421, %10, %cst_103 {dimension_numbers = #tpu.dot_dimension_numbers<[1], [0], [0], [1], [0, 0, 1, 1], [], []>} : vector<2x32xbf16>, vector<32x96xbf16>, vector<2x96xf32> -> vector<2x96xf32>
    %423 = arith.truncf %409 : vector<2x32xf32> to vector<2x32xbf16>
    %cst_104 = arith.constant dense<0.000000e+00> : vector<2x96xf32>
    %424 = tpu.matmul %423, %11, %cst_104 {dimension_numbers = #tpu.dot_dimension_numbers<[1], [0], [0], [1], [0, 0, 1, 1], [], []>} : vector<2x32xbf16>, vector<32x96xbf16>, vector<2x96xf32> -> vector<2x96xf32>
    %425 = arith.index_cast %c5_i32 : i32 to index
    %c0_105 = arith.constant 0 : index
    %c0_106 = arith.constant 0 : index
    %426 = vector.load %arg17[%425, %c0_105, %c0_106] : memref<8x2x192xbf16, #tpu.memory_space<vmem>>, vector<1x2x192xbf16>
    %427 = vector.shape_cast %426 : vector<1x2x192xbf16> to vector<2x192xbf16>
    %428 = arith.index_cast %420 : i32 to index
    %c0_107 = arith.constant 0 : index
    %c0_108 = arith.constant 0 : index
    %429 = vector.load %arg17[%428, %c0_107, %c0_108] : memref<8x2x192xbf16, #tpu.memory_space<vmem>>, vector<1x2x192xbf16>
    %430 = vector.shape_cast %429 : vector<1x2x192xbf16> to vector<2x192xbf16>
    %431 = vector.extract_strided_slice %427 {offsets = [0, 0], sizes = [2, 96], strides = [1, 1]} : vector<2x192xbf16> to vector<2x96xbf16>
    %432 = arith.extf %431 : vector<2x96xbf16> to vector<2x96xf32>
    %433 = vector.extract_strided_slice %430 {offsets = [0, 96], sizes = [2, 96], strides = [1, 1]} : vector<2x192xbf16> to vector<2x96xbf16>
    %434 = arith.extf %433 : vector<2x96xbf16> to vector<2x96xf32>
    %435 = vector.extract_strided_slice %432 {offsets = [0, 0], sizes = [2, 32], strides = [1, 1]} : vector<2x96xf32> to vector<2x32xf32>
    %436 = vector.extract_strided_slice %422 {offsets = [0, 0], sizes = [2, 32], strides = [1, 1]} : vector<2x96xf32> to vector<2x32xf32>
    %437 = arith.addf %435, %436 : vector<2x32xf32>
    %438 = arith.negf %437 : vector<2x32xf32>
    %439 = math.exp %438 : vector<2x32xf32>
    %cst_109 = arith.constant 1.000000e+00 : f32
    %440 = vector.broadcast %cst_109 : f32 to vector<2x32xf32>
    %441 = arith.addf %440, %439 : vector<2x32xf32>
    %442 = arith.divf %440, %441 : vector<2x32xf32>
    %443 = vector.extract_strided_slice %432 {offsets = [0, 32], sizes = [2, 32], strides = [1, 1]} : vector<2x96xf32> to vector<2x32xf32>
    %444 = vector.extract_strided_slice %422 {offsets = [0, 32], sizes = [2, 32], strides = [1, 1]} : vector<2x96xf32> to vector<2x32xf32>
    %445 = arith.addf %443, %444 : vector<2x32xf32>
    %446 = arith.negf %445 : vector<2x32xf32>
    %447 = math.exp %446 : vector<2x32xf32>
    %cst_110 = arith.constant 1.000000e+00 : f32
    %448 = vector.broadcast %cst_110 : f32 to vector<2x32xf32>
    %449 = arith.addf %448, %447 : vector<2x32xf32>
    %450 = arith.divf %448, %449 : vector<2x32xf32>
    %451 = vector.extract_strided_slice %432 {offsets = [0, 64], sizes = [2, 32], strides = [1, 1]} : vector<2x96xf32> to vector<2x32xf32>
    %452 = vector.extract_strided_slice %422 {offsets = [0, 64], sizes = [2, 32], strides = [1, 1]} : vector<2x96xf32> to vector<2x32xf32>
    %453 = vector.broadcast %12 : vector<1x32xf32> to vector<2x32xf32>
    %454 = arith.addf %452, %453 : vector<2x32xf32>
    %455 = arith.mulf %442, %454 : vector<2x32xf32>
    %456 = arith.addf %451, %455 : vector<2x32xf32>
    %457 = math.tanh %456 : vector<2x32xf32>
    %cst_111 = arith.constant 1.000000e+00 : f32
    %458 = vector.broadcast %cst_111 : f32 to vector<2x32xf32>
    %459 = arith.subf %458, %450 : vector<2x32xf32>
    %460 = arith.mulf %459, %457 : vector<2x32xf32>
    %461 = arith.mulf %450, %381 : vector<2x32xf32>
    %462 = arith.addf %460, %461 : vector<2x32xf32>
    %463 = vector.extract_strided_slice %434 {offsets = [0, 0], sizes = [2, 32], strides = [1, 1]} : vector<2x96xf32> to vector<2x32xf32>
    %464 = vector.extract_strided_slice %424 {offsets = [0, 0], sizes = [2, 32], strides = [1, 1]} : vector<2x96xf32> to vector<2x32xf32>
    %465 = arith.addf %463, %464 : vector<2x32xf32>
    %466 = arith.negf %465 : vector<2x32xf32>
    %467 = math.exp %466 : vector<2x32xf32>
    %cst_112 = arith.constant 1.000000e+00 : f32
    %468 = vector.broadcast %cst_112 : f32 to vector<2x32xf32>
    %469 = arith.addf %468, %467 : vector<2x32xf32>
    %470 = arith.divf %468, %469 : vector<2x32xf32>
    %471 = vector.extract_strided_slice %434 {offsets = [0, 32], sizes = [2, 32], strides = [1, 1]} : vector<2x96xf32> to vector<2x32xf32>
    %472 = vector.extract_strided_slice %424 {offsets = [0, 32], sizes = [2, 32], strides = [1, 1]} : vector<2x96xf32> to vector<2x32xf32>
    %473 = arith.addf %471, %472 : vector<2x32xf32>
    %474 = arith.negf %473 : vector<2x32xf32>
    %475 = math.exp %474 : vector<2x32xf32>
    %cst_113 = arith.constant 1.000000e+00 : f32
    %476 = vector.broadcast %cst_113 : f32 to vector<2x32xf32>
    %477 = arith.addf %476, %475 : vector<2x32xf32>
    %478 = arith.divf %476, %477 : vector<2x32xf32>
    %479 = vector.extract_strided_slice %434 {offsets = [0, 64], sizes = [2, 32], strides = [1, 1]} : vector<2x96xf32> to vector<2x32xf32>
    %480 = vector.extract_strided_slice %424 {offsets = [0, 64], sizes = [2, 32], strides = [1, 1]} : vector<2x96xf32> to vector<2x32xf32>
    %481 = vector.broadcast %13 : vector<1x32xf32> to vector<2x32xf32>
    %482 = arith.addf %480, %481 : vector<2x32xf32>
    %483 = arith.mulf %470, %482 : vector<2x32xf32>
    %484 = arith.addf %479, %483 : vector<2x32xf32>
    %485 = math.tanh %484 : vector<2x32xf32>
    %cst_114 = arith.constant 1.000000e+00 : f32
    %486 = vector.broadcast %cst_114 : f32 to vector<2x32xf32>
    %487 = arith.subf %486, %478 : vector<2x32xf32>
    %488 = arith.mulf %487, %485 : vector<2x32xf32>
    %489 = arith.mulf %478, %409 : vector<2x32xf32>
    %490 = arith.addf %488, %489 : vector<2x32xf32>
    %491 = arith.truncf %462 : vector<2x32xf32> to vector<2x32xbf16>
    %492 = arith.index_cast %c5_i32 : i32 to index
    %c0_115 = arith.constant 0 : index
    %c0_116 = arith.constant 0 : index
    %493 = vector.load %arg18[%492, %c0_115, %c0_116] : memref<8x2x32xbf16, #tpu.memory_space<vmem>>, vector<1x2x32xbf16>
    %494 = vector.shape_cast %493 : vector<1x2x32xbf16> to vector<2x32xbf16>
    %495 = vector.shape_cast %491 : vector<2x32xbf16> to vector<1x2x32xbf16>
    tpu.vector_store %arg18[%492, %c0_115, %c0_116], %495 {strides = array<i32>} : memref<8x2x32xbf16, #tpu.memory_space<vmem>>, vector<1x2x32xbf16>,
    %496 = arith.truncf %490 : vector<2x32xf32> to vector<2x32xbf16>
    %497 = arith.index_cast %420 : i32 to index
    %c0_117 = arith.constant 0 : index
    %c0_118 = arith.constant 0 : index
    %498 = vector.load %arg19[%497, %c0_117, %c0_118] : memref<8x2x32xbf16, #tpu.memory_space<vmem>>, vector<1x2x32xbf16>
    %499 = vector.shape_cast %498 : vector<1x2x32xbf16> to vector<2x32xbf16>
    %500 = vector.shape_cast %496 : vector<2x32xbf16> to vector<1x2x32xbf16>
    tpu.vector_store %arg19[%497, %c0_117, %c0_118], %500 {strides = array<i32>} : memref<8x2x32xbf16, #tpu.memory_space<vmem>>, vector<1x2x32xbf16>,
    %c6_i32 = arith.constant 6 : i32
    %c7_i32_119 = arith.constant 7 : i32
    %501 = arith.subi %c7_i32_119, %c6_i32 : i32
    %502 = arith.truncf %462 : vector<2x32xf32> to vector<2x32xbf16>
    %cst_120 = arith.constant dense<0.000000e+00> : vector<2x96xf32>
    %503 = tpu.matmul %502, %10, %cst_120 {dimension_numbers = #tpu.dot_dimension_numbers<[1], [0], [0], [1], [0, 0, 1, 1], [], []>} : vector<2x32xbf16>, vector<32x96xbf16>, vector<2x96xf32> -> vector<2x96xf32>
    %504 = arith.truncf %490 : vector<2x32xf32> to vector<2x32xbf16>
    %cst_121 = arith.constant dense<0.000000e+00> : vector<2x96xf32>
    %505 = tpu.matmul %504, %11, %cst_121 {dimension_numbers = #tpu.dot_dimension_numbers<[1], [0], [0], [1], [0, 0, 1, 1], [], []>} : vector<2x32xbf16>, vector<32x96xbf16>, vector<2x96xf32> -> vector<2x96xf32>
    %506 = arith.index_cast %c6_i32 : i32 to index
    %c0_122 = arith.constant 0 : index
    %c0_123 = arith.constant 0 : index
    %507 = vector.load %arg17[%506, %c0_122, %c0_123] : memref<8x2x192xbf16, #tpu.memory_space<vmem>>, vector<1x2x192xbf16>
    %508 = vector.shape_cast %507 : vector<1x2x192xbf16> to vector<2x192xbf16>
    %509 = arith.index_cast %501 : i32 to index
    %c0_124 = arith.constant 0 : index
    %c0_125 = arith.constant 0 : index
    %510 = vector.load %arg17[%509, %c0_124, %c0_125] : memref<8x2x192xbf16, #tpu.memory_space<vmem>>, vector<1x2x192xbf16>
    %511 = vector.shape_cast %510 : vector<1x2x192xbf16> to vector<2x192xbf16>
    %512 = vector.extract_strided_slice %508 {offsets = [0, 0], sizes = [2, 96], strides = [1, 1]} : vector<2x192xbf16> to vector<2x96xbf16>
    %513 = arith.extf %512 : vector<2x96xbf16> to vector<2x96xf32>
    %514 = vector.extract_strided_slice %511 {offsets = [0, 96], sizes = [2, 96], strides = [1, 1]} : vector<2x192xbf16> to vector<2x96xbf16>
    %515 = arith.extf %514 : vector<2x96xbf16> to vector<2x96xf32>
    %516 = vector.extract_strided_slice %513 {offsets = [0, 0], sizes = [2, 32], strides = [1, 1]} : vector<2x96xf32> to vector<2x32xf32>
    %517 = vector.extract_strided_slice %503 {offsets = [0, 0], sizes = [2, 32], strides = [1, 1]} : vector<2x96xf32> to vector<2x32xf32>
    %518 = arith.addf %516, %517 : vector<2x32xf32>
    %519 = arith.negf %518 : vector<2x32xf32>
    %520 = math.exp %519 : vector<2x32xf32>
    %cst_126 = arith.constant 1.000000e+00 : f32
    %521 = vector.broadcast %cst_126 : f32 to vector<2x32xf32>
    %522 = arith.addf %521, %520 : vector<2x32xf32>
    %523 = arith.divf %521, %522 : vector<2x32xf32>
    %524 = vector.extract_strided_slice %513 {offsets = [0, 32], sizes = [2, 32], strides = [1, 1]} : vector<2x96xf32> to vector<2x32xf32>
    %525 = vector.extract_strided_slice %503 {offsets = [0, 32], sizes = [2, 32], strides = [1, 1]} : vector<2x96xf32> to vector<2x32xf32>
    %526 = arith.addf %524, %525 : vector<2x32xf32>
    %527 = arith.negf %526 : vector<2x32xf32>
    %528 = math.exp %527 : vector<2x32xf32>
    %cst_127 = arith.constant 1.000000e+00 : f32
    %529 = vector.broadcast %cst_127 : f32 to vector<2x32xf32>
    %530 = arith.addf %529, %528 : vector<2x32xf32>
    %531 = arith.divf %529, %530 : vector<2x32xf32>
    %532 = vector.extract_strided_slice %513 {offsets = [0, 64], sizes = [2, 32], strides = [1, 1]} : vector<2x96xf32> to vector<2x32xf32>
    %533 = vector.extract_strided_slice %503 {offsets = [0, 64], sizes = [2, 32], strides = [1, 1]} : vector<2x96xf32> to vector<2x32xf32>
    %534 = vector.broadcast %12 : vector<1x32xf32> to vector<2x32xf32>
    %535 = arith.addf %533, %534 : vector<2x32xf32>
    %536 = arith.mulf %523, %535 : vector<2x32xf32>
    %537 = arith.addf %532, %536 : vector<2x32xf32>
    %538 = math.tanh %537 : vector<2x32xf32>
    %cst_128 = arith.constant 1.000000e+00 : f32
    %539 = vector.broadcast %cst_128 : f32 to vector<2x32xf32>
    %540 = arith.subf %539, %531 : vector<2x32xf32>
    %541 = arith.mulf %540, %538 : vector<2x32xf32>
    %542 = arith.mulf %531, %462 : vector<2x32xf32>
    %543 = arith.addf %541, %542 : vector<2x32xf32>
    %544 = vector.extract_strided_slice %515 {offsets = [0, 0], sizes = [2, 32], strides = [1, 1]} : vector<2x96xf32> to vector<2x32xf32>
    %545 = vector.extract_strided_slice %505 {offsets = [0, 0], sizes = [2, 32], strides = [1, 1]} : vector<2x96xf32> to vector<2x32xf32>
    %546 = arith.addf %544, %545 : vector<2x32xf32>
    %547 = arith.negf %546 : vector<2x32xf32>
    %548 = math.exp %547 : vector<2x32xf32>
    %cst_129 = arith.constant 1.000000e+00 : f32
    %549 = vector.broadcast %cst_129 : f32 to vector<2x32xf32>
    %550 = arith.addf %549, %548 : vector<2x32xf32>
    %551 = arith.divf %549, %550 : vector<2x32xf32>
    %552 = vector.extract_strided_slice %515 {offsets = [0, 32], sizes = [2, 32], strides = [1, 1]} : vector<2x96xf32> to vector<2x32xf32>
    %553 = vector.extract_strided_slice %505 {offsets = [0, 32], sizes = [2, 32], strides = [1, 1]} : vector<2x96xf32> to vector<2x32xf32>
    %554 = arith.addf %552, %553 : vector<2x32xf32>
    %555 = arith.negf %554 : vector<2x32xf32>
    %556 = math.exp %555 : vector<2x32xf32>
    %cst_130 = arith.constant 1.000000e+00 : f32
    %557 = vector.broadcast %cst_130 : f32 to vector<2x32xf32>
    %558 = arith.addf %557, %556 : vector<2x32xf32>
    %559 = arith.divf %557, %558 : vector<2x32xf32>
    %560 = vector.extract_strided_slice %515 {offsets = [0, 64], sizes = [2, 32], strides = [1, 1]} : vector<2x96xf32> to vector<2x32xf32>
    %561 = vector.extract_strided_slice %505 {offsets = [0, 64], sizes = [2, 32], strides = [1, 1]} : vector<2x96xf32> to vector<2x32xf32>
    %562 = vector.broadcast %13 : vector<1x32xf32> to vector<2x32xf32>
    %563 = arith.addf %561, %562 : vector<2x32xf32>
    %564 = arith.mulf %551, %563 : vector<2x32xf32>
    %565 = arith.addf %560, %564 : vector<2x32xf32>
    %566 = math.tanh %565 : vector<2x32xf32>
    %cst_131 = arith.constant 1.000000e+00 : f32
    %567 = vector.broadcast %cst_131 : f32 to vector<2x32xf32>
    %568 = arith.subf %567, %559 : vector<2x32xf32>
    %569 = arith.mulf %568, %566 : vector<2x32xf32>
    %570 = arith.mulf %559, %490 : vector<2x32xf32>
    %571 = arith.addf %569, %570 : vector<2x32xf32>
    %572 = arith.truncf %543 : vector<2x32xf32> to vector<2x32xbf16>
    %573 = arith.index_cast %c6_i32 : i32 to index
    %c0_132 = arith.constant 0 : index
    %c0_133 = arith.constant 0 : index
    %574 = vector.load %arg18[%573, %c0_132, %c0_133] : memref<8x2x32xbf16, #tpu.memory_space<vmem>>, vector<1x2x32xbf16>
    %575 = vector.shape_cast %574 : vector<1x2x32xbf16> to vector<2x32xbf16>
    %576 = vector.shape_cast %572 : vector<2x32xbf16> to vector<1x2x32xbf16>
    tpu.vector_store %arg18[%573, %c0_132, %c0_133], %576 {strides = array<i32>} : memref<8x2x32xbf16, #tpu.memory_space<vmem>>, vector<1x2x32xbf16>,
    %577 = arith.truncf %571 : vector<2x32xf32> to vector<2x32xbf16>
    %578 = arith.index_cast %501 : i32 to index
    %c0_134 = arith.constant 0 : index
    %c0_135 = arith.constant 0 : index
    %579 = vector.load %arg19[%578, %c0_134, %c0_135] : memref<8x2x32xbf16, #tpu.memory_space<vmem>>, vector<1x2x32xbf16>
    %580 = vector.shape_cast %579 : vector<1x2x32xbf16> to vector<2x32xbf16>
    %581 = vector.shape_cast %577 : vector<2x32xbf16> to vector<1x2x32xbf16>
    tpu.vector_store %arg19[%578, %c0_134, %c0_135], %581 {strides = array<i32>} : memref<8x2x32xbf16, #tpu.memory_space<vmem>>, vector<1x2x32xbf16>,
    %c7_i32_136 = arith.constant 7 : i32
    %c7_i32_137 = arith.constant 7 : i32
    %582 = arith.subi %c7_i32_137, %c7_i32_136 : i32
    %583 = arith.truncf %543 : vector<2x32xf32> to vector<2x32xbf16>
    %cst_138 = arith.constant dense<0.000000e+00> : vector<2x96xf32>
    %584 = tpu.matmul %583, %10, %cst_138 {dimension_numbers = #tpu.dot_dimension_numbers<[1], [0], [0], [1], [0, 0, 1, 1], [], []>} : vector<2x32xbf16>, vector<32x96xbf16>, vector<2x96xf32> -> vector<2x96xf32>
    %585 = arith.truncf %571 : vector<2x32xf32> to vector<2x32xbf16>
    %cst_139 = arith.constant dense<0.000000e+00> : vector<2x96xf32>
    %586 = tpu.matmul %585, %11, %cst_139 {dimension_numbers = #tpu.dot_dimension_numbers<[1], [0], [0], [1], [0, 0, 1, 1], [], []>} : vector<2x32xbf16>, vector<32x96xbf16>, vector<2x96xf32> -> vector<2x96xf32>
    %587 = arith.index_cast %c7_i32_136 : i32 to index
    %c0_140 = arith.constant 0 : index
    %c0_141 = arith.constant 0 : index
    %588 = vector.load %arg17[%587, %c0_140, %c0_141] : memref<8x2x192xbf16, #tpu.memory_space<vmem>>, vector<1x2x192xbf16>
    %589 = vector.shape_cast %588 : vector<1x2x192xbf16> to vector<2x192xbf16>
    %590 = arith.index_cast %582 : i32 to index
    %c0_142 = arith.constant 0 : index
    %c0_143 = arith.constant 0 : index
    %591 = vector.load %arg17[%590, %c0_142, %c0_143] : memref<8x2x192xbf16, #tpu.memory_space<vmem>>, vector<1x2x192xbf16>
    %592 = vector.shape_cast %591 : vector<1x2x192xbf16> to vector<2x192xbf16>
    %593 = vector.extract_strided_slice %589 {offsets = [0, 0], sizes = [2, 96], strides = [1, 1]} : vector<2x192xbf16> to vector<2x96xbf16>
    %594 = arith.extf %593 : vector<2x96xbf16> to vector<2x96xf32>
    %595 = vector.extract_strided_slice %592 {offsets = [0, 96], sizes = [2, 96], strides = [1, 1]} : vector<2x192xbf16> to vector<2x96xbf16>
    %596 = arith.extf %595 : vector<2x96xbf16> to vector<2x96xf32>
    %597 = vector.extract_strided_slice %594 {offsets = [0, 0], sizes = [2, 32], strides = [1, 1]} : vector<2x96xf32> to vector<2x32xf32>
    %598 = vector.extract_strided_slice %584 {offsets = [0, 0], sizes = [2, 32], strides = [1, 1]} : vector<2x96xf32> to vector<2x32xf32>
    %599 = arith.addf %597, %598 : vector<2x32xf32>
    %600 = arith.negf %599 : vector<2x32xf32>
    %601 = math.exp %600 : vector<2x32xf32>
    %cst_144 = arith.constant 1.000000e+00 : f32
    %602 = vector.broadcast %cst_144 : f32 to vector<2x32xf32>
    %603 = arith.addf %602, %601 : vector<2x32xf32>
    %604 = arith.divf %602, %603 : vector<2x32xf32>
    %605 = vector.extract_strided_slice %594 {offsets = [0, 32], sizes = [2, 32], strides = [1, 1]} : vector<2x96xf32> to vector<2x32xf32>
    %606 = vector.extract_strided_slice %584 {offsets = [0, 32], sizes = [2, 32], strides = [1, 1]} : vector<2x96xf32> to vector<2x32xf32>
    %607 = arith.addf %605, %606 : vector<2x32xf32>
    %608 = arith.negf %607 : vector<2x32xf32>
    %609 = math.exp %608 : vector<2x32xf32>
    %cst_145 = arith.constant 1.000000e+00 : f32
    %610 = vector.broadcast %cst_145 : f32 to vector<2x32xf32>
    %611 = arith.addf %610, %609 : vector<2x32xf32>
    %612 = arith.divf %610, %611 : vector<2x32xf32>
    %613 = vector.extract_strided_slice %594 {offsets = [0, 64], sizes = [2, 32], strides = [1, 1]} : vector<2x96xf32> to vector<2x32xf32>
    %614 = vector.extract_strided_slice %584 {offsets = [0, 64], sizes = [2, 32], strides = [1, 1]} : vector<2x96xf32> to vector<2x32xf32>
    %615 = vector.broadcast %12 : vector<1x32xf32> to vector<2x32xf32>
    %616 = arith.addf %614, %615 : vector<2x32xf32>
    %617 = arith.mulf %604, %616 : vector<2x32xf32>
    %618 = arith.addf %613, %617 : vector<2x32xf32>
    %619 = math.tanh %618 : vector<2x32xf32>
    %cst_146 = arith.constant 1.000000e+00 : f32
    %620 = vector.broadcast %cst_146 : f32 to vector<2x32xf32>
    %621 = arith.subf %620, %612 : vector<2x32xf32>
    %622 = arith.mulf %621, %619 : vector<2x32xf32>
    %623 = arith.mulf %612, %543 : vector<2x32xf32>
    %624 = arith.addf %622, %623 : vector<2x32xf32>
    %625 = vector.extract_strided_slice %596 {offsets = [0, 0], sizes = [2, 32], strides = [1, 1]} : vector<2x96xf32> to vector<2x32xf32>
    %626 = vector.extract_strided_slice %586 {offsets = [0, 0], sizes = [2, 32], strides = [1, 1]} : vector<2x96xf32> to vector<2x32xf32>
    %627 = arith.addf %625, %626 : vector<2x32xf32>
    %628 = arith.negf %627 : vector<2x32xf32>
    %629 = math.exp %628 : vector<2x32xf32>
    %cst_147 = arith.constant 1.000000e+00 : f32
    %630 = vector.broadcast %cst_147 : f32 to vector<2x32xf32>
    %631 = arith.addf %630, %629 : vector<2x32xf32>
    %632 = arith.divf %630, %631 : vector<2x32xf32>
    %633 = vector.extract_strided_slice %596 {offsets = [0, 32], sizes = [2, 32], strides = [1, 1]} : vector<2x96xf32> to vector<2x32xf32>
    %634 = vector.extract_strided_slice %586 {offsets = [0, 32], sizes = [2, 32], strides = [1, 1]} : vector<2x96xf32> to vector<2x32xf32>
    %635 = arith.addf %633, %634 : vector<2x32xf32>
    %636 = arith.negf %635 : vector<2x32xf32>
    %637 = math.exp %636 : vector<2x32xf32>
    %cst_148 = arith.constant 1.000000e+00 : f32
    %638 = vector.broadcast %cst_148 : f32 to vector<2x32xf32>
    %639 = arith.addf %638, %637 : vector<2x32xf32>
    %640 = arith.divf %638, %639 : vector<2x32xf32>
    %641 = vector.extract_strided_slice %596 {offsets = [0, 64], sizes = [2, 32], strides = [1, 1]} : vector<2x96xf32> to vector<2x32xf32>
    %642 = vector.extract_strided_slice %586 {offsets = [0, 64], sizes = [2, 32], strides = [1, 1]} : vector<2x96xf32> to vector<2x32xf32>
    %643 = vector.broadcast %13 : vector<1x32xf32> to vector<2x32xf32>
    %644 = arith.addf %642, %643 : vector<2x32xf32>
    %645 = arith.mulf %632, %644 : vector<2x32xf32>
    %646 = arith.addf %641, %645 : vector<2x32xf32>
    %647 = math.tanh %646 : vector<2x32xf32>
    %cst_149 = arith.constant 1.000000e+00 : f32
    %648 = vector.broadcast %cst_149 : f32 to vector<2x32xf32>
    %649 = arith.subf %648, %640 : vector<2x32xf32>
    %650 = arith.mulf %649, %647 : vector<2x32xf32>
    %651 = arith.mulf %640, %571 : vector<2x32xf32>
    %652 = arith.addf %650, %651 : vector<2x32xf32>
    %653 = arith.truncf %624 : vector<2x32xf32> to vector<2x32xbf16>
    %654 = arith.index_cast %c7_i32_136 : i32 to index
    %c0_150 = arith.constant 0 : index
    %c0_151 = arith.constant 0 : index
    %655 = vector.load %arg18[%654, %c0_150, %c0_151] : memref<8x2x32xbf16, #tpu.memory_space<vmem>>, vector<1x2x32xbf16>
    %656 = vector.shape_cast %655 : vector<1x2x32xbf16> to vector<2x32xbf16>
    %657 = vector.shape_cast %653 : vector<2x32xbf16> to vector<1x2x32xbf16>
    tpu.vector_store %arg18[%654, %c0_150, %c0_151], %657 {strides = array<i32>} : memref<8x2x32xbf16, #tpu.memory_space<vmem>>, vector<1x2x32xbf16>,
    %658 = arith.truncf %652 : vector<2x32xf32> to vector<2x32xbf16>
    %659 = arith.index_cast %582 : i32 to index
    %c0_152 = arith.constant 0 : index
    %c0_153 = arith.constant 0 : index
    %660 = vector.load %arg19[%659, %c0_152, %c0_153] : memref<8x2x32xbf16, #tpu.memory_space<vmem>>, vector<1x2x32xbf16>
    %661 = vector.shape_cast %660 : vector<1x2x32xbf16> to vector<2x32xbf16>
    %662 = vector.shape_cast %658 : vector<2x32xbf16> to vector<1x2x32xbf16>
    tpu.vector_store %arg19[%659, %c0_152, %c0_153], %662 {strides = array<i32>} : memref<8x2x32xbf16, #tpu.memory_space<vmem>>, vector<1x2x32xbf16>,
    %c8_i32 = arith.constant 8 : i32
    %c0_154 = arith.constant 0 : index
    %c0_155 = arith.constant 0 : index
    %c0_156 = arith.constant 0 : index
    %663 = vector.load %arg18[%c0_154, %c0_155, %c0_156] : memref<8x2x32xbf16, #tpu.memory_space<vmem>>, vector<8x2x32xbf16>
    %664 = vector.shape_cast %663 : vector<8x2x32xbf16> to vector<16x32xbf16>
    %c0_157 = arith.constant 0 : index
    %c0_158 = arith.constant 0 : index
    %c0_159 = arith.constant 0 : index
    %665 = vector.load %arg19[%c0_157, %c0_158, %c0_159] : memref<8x2x32xbf16, #tpu.memory_space<vmem>>, vector<8x2x32xbf16>
    %666 = vector.shape_cast %665 : vector<8x2x32xbf16> to vector<16x32xbf16>
    %c0_160 = arith.constant 0 : index
    %c0_161 = arith.constant 0 : index
    %667 = vector.load %arg8[%c0_160, %c0_161] : memref<32x8xbf16, #tpu.memory_space<vmem>>, vector<32x8xbf16>
    %cst_162 = arith.constant dense<0.000000e+00> : vector<16x8xf32>
    %668 = tpu.matmul %664, %667, %cst_162 {dimension_numbers = #tpu.dot_dimension_numbers<[1], [0], [0], [1], [0, 0, 1, 1], [], []>} : vector<16x32xbf16>, vector<32x8xbf16>, vector<16x8xf32> -> vector<16x8xf32>
    %c0_163 = arith.constant 0 : index
    %c0_164 = arith.constant 0 : index
    %669 = vector.load %arg9[%c0_163, %c0_164] : memref<32x8xbf16, #tpu.memory_space<vmem>>, vector<32x8xbf16>
    %cst_165 = arith.constant dense<0.000000e+00> : vector<16x8xf32>
    %670 = tpu.matmul %666, %669, %cst_165 {dimension_numbers = #tpu.dot_dimension_numbers<[1], [0], [0], [1], [0, 0, 1, 1], [], []>} : vector<16x32xbf16>, vector<32x8xbf16>, vector<16x8xf32> -> vector<16x8xf32>
    %671 = arith.addf %668, %670 : vector<16x8xf32>
    %c0_166 = arith.constant 0 : index
    %c0_167 = arith.constant 0 : index
    %672 = vector.load %arg10[%c0_166, %c0_167] : memref<1x8xf32, #tpu.memory_space<vmem>>, vector<1x8xf32>
    %673 = vector.broadcast %672 : vector<1x8xf32> to vector<16x8xf32>
    %674 = arith.addf %671, %673 : vector<16x8xf32>
    %675 = vector.shape_cast %674 : vector<16x8xf32> to vector<8x2x8xf32>
    %c0_168 = arith.constant 0 : index
    %c0_169 = arith.constant 0 : index
    %c0_170 = arith.constant 0 : index
    %676 = vector.load %arg20[%c0_168, %c0_169, %c0_170] : memref<8x2x8xf32, #tpu.memory_space<vmem>>, vector<8x2x8xf32>
    tpu.vector_store %arg20[%c0_168, %c0_169, %c0_170], %675 {strides = array<i32>} : memref<8x2x8xf32, #tpu.memory_space<vmem>>, vector<8x2x8xf32>,
    %c0_171 = arith.constant 0 : index
    %c0_172 = arith.constant 0 : index
    %677 = vector.load %arg11[%c0_171, %c0_172] : memref<1x8xf32, #tpu.memory_space<vmem>>, vector<1x8xf32>
    %c0_173 = arith.constant 0 : index
    %c0_174 = arith.constant 0 : index
    %678 = vector.load %arg12[%c0_173, %c0_174] : memref<1x8xf32, #tpu.memory_space<vmem>>, vector<1x8xf32>
    %c0_175 = arith.constant 0 : index
    %c0_176 = arith.constant 0 : index
    %679 = vector.load %arg13[%c0_175, %c0_176] : memref<8x8xf32, #tpu.memory_space<vmem>>, vector<8x8xf32>
    %680 = vector.shape_cast %679 : vector<8x8xf32> to vector<1x8x8xf32>
    %c0_177 = arith.constant 0 : index
    %c0_178 = arith.constant 0 : index
    %c0_179 = arith.constant 0 : index
    %681 = vector.load %arg15[%c0_177, %c0_178, %c0_179] : memref<8x2x1xf32, #tpu.memory_space<vmem>>, vector<8x2x1xf32>
    %c0_180 = arith.constant 0 : index
    %c0_181 = arith.constant 0 : index
    %c0_182 = arith.constant 0 : index
    %682 = vector.load %arg14[%c0_180, %c0_181, %c0_182] : memref<8x2x1xi32, #tpu.memory_space<vmem>>, vector<8x2x1xi32>
    %683 = tpu.iota {dimensions = array<i32: 2>} : vector<8x2x8xi32>
    %684 = vector.broadcast %682 : vector<8x2x1xi32> to vector<8x2x8xi32>
    %685 = arith.cmpi eq, %684, %683 : vector<8x2x8xi32>
    %686 = arith.extui %685 : vector<8x2x8xi1> to vector<8x2x8xi32>
    %687 = arith.sitofp %686 : vector<8x2x8xi32> to vector<8x2x8xf32>
    %688 = vector.broadcast %681 : vector<8x2x1xf32> to vector<8x2x8xf32>
    %689 = arith.mulf %687, %688 : vector<8x2x8xf32>
    %c0_183 = arith.constant 0 : index
    %c0_184 = arith.constant 0 : index
    %c0_185 = arith.constant 0 : index
    %690 = vector.load %arg20[%c0_183, %c0_184, %c0_185] : memref<8x2x8xf32, #tpu.memory_space<vmem>>, vector<8x2x8xf32>
    %691 = arith.mulf %689, %690 : vector<8x2x8xf32>
    %692 = vector.shape_cast %691 : vector<8x2x8xf32> to vector<1x8x2x8xf32>
    %cst_186 = arith.constant dense<0.000000e+00> : vector<1xf32>
    %693 = vector.multi_reduction <add>, %692, %cst_186 [1, 2, 3] : vector<1x8x2x8xf32> to vector<1xf32>
    %694 = vector.shape_cast %693 : vector<1xf32> to vector<1x1x1x1xf32>
    %695 = vector.extract %694[0, 0, 0, 0] : f32 from vector<1x1x1x1xf32>
    %c0_187 = arith.constant 0 : index
    %c0_188 = arith.constant 0 : index
    %c0_189 = arith.constant 0 : index
    %696 = vector.load %arg20[%c0_187, %c0_188, %c0_189] : memref<8x2x8xf32, #tpu.memory_space<vmem>>, vector<1x2x8xf32>
    %697 = vector.shape_cast %696 : vector<1x2x8xf32> to vector<2x8xf32>
    %698 = vector.broadcast %677 : vector<1x8xf32> to vector<2x8xf32>
    %699 = arith.addf %698, %697 : vector<2x8xf32>
    %c1_i32_190 = arith.constant 1 : i32
    %700 = arith.index_cast %c1_i32_190 : i32 to index
    %c0_191 = arith.constant 0 : index
    %c0_192 = arith.constant 0 : index
    %701 = vector.load %arg20[%700, %c0_191, %c0_192] : memref<8x2x8xf32, #tpu.memory_space<vmem>>, vector<1x2x8xf32>
    %702 = vector.shape_cast %701 : vector<1x2x8xf32> to vector<2x8xf32>
    %703 = arith.index_cast %c1_i32_190 : i32 to index
    %c0_193 = arith.constant 0 : index
    %c0_194 = arith.constant 0 : index
    %704 = vector.load %arg15[%703, %c0_193, %c0_194] : memref<8x2x1xf32, #tpu.memory_space<vmem>>, vector<1x2x1xf32>
    %705 = vector.shape_cast %704 : vector<1x2x1xf32> to vector<2x1xf32>
    %706 = vector.shape_cast %699 : vector<2x8xf32> to vector<2x8x1xf32>
    %707 = vector.broadcast %706 : vector<2x8x1xf32> to vector<2x8x8xf32>
    %708 = vector.broadcast %680 : vector<1x8x8xf32> to vector<2x8x8xf32>
    %709 = arith.addf %707, %708 : vector<2x8x8xf32>
    %710 = vector.shape_cast %702 : vector<2x8xf32> to vector<2x1x8xf32>
    %711 = vector.broadcast %710 : vector<2x1x8xf32> to vector<2x8x8xf32>
    %712 = arith.addf %709, %711 : vector<2x8x8xf32>
    %cst_195 = arith.constant dense<0xFF800000> : vector<2x8xf32>
    %713 = vector.multi_reduction <maximumf>, %712, %cst_195 [1] : vector<2x8x8xf32> to vector<2x8xf32>
    %714 = vector.shape_cast %713 : vector<2x8xf32> to vector<2x1x8xf32>
    %715 = vector.broadcast %714 : vector<2x1x8xf32> to vector<2x8x8xf32>
    %716 = arith.subf %712, %715 : vector<2x8x8xf32>
    %717 = math.exp %716 : vector<2x8x8xf32>
    %cst_196 = arith.constant dense<0.000000e+00> : vector<2x8xf32>
    %718 = vector.multi_reduction <add>, %717, %cst_196 [1] : vector<2x8x8xf32> to vector<2x8xf32>
    %719 = vector.shape_cast %718 : vector<2x8xf32> to vector<2x1x8xf32>
    %720 = math.log %719 : vector<2x1x8xf32>
    %721 = arith.addf %714, %720 : vector<2x1x8xf32>
    %722 = vector.shape_cast %721 : vector<2x1x8xf32> to vector<2x8xf32>
    %cst_197 = arith.constant 5.000000e-01 : f32
    %723 = vector.broadcast %cst_197 : f32 to vector<2x1xf32>
    %724 = arith.cmpf ogt, %705, %723 : vector<2x1xf32>
    %725 = vector.shape_cast %724 : vector<2x1xi1> to vector<2x1xi1>
    %726 = vector.broadcast %725 : vector<2x1xi1> to vector<2x8xi1>
    %727 = arith.select %726, %722, %699 : vector<2x8xi1>, vector<2x8xf32>
    %c2_i32_198 = arith.constant 2 : i32
    %728 = arith.index_cast %c2_i32_198 : i32 to index
    %c0_199 = arith.constant 0 : index
    %c0_200 = arith.constant 0 : index
    %729 = vector.load %arg20[%728, %c0_199, %c0_200] : memref<8x2x8xf32, #tpu.memory_space<vmem>>, vector<1x2x8xf32>
    %730 = vector.shape_cast %729 : vector<1x2x8xf32> to vector<2x8xf32>
    %731 = arith.index_cast %c2_i32_198 : i32 to index
    %c0_201 = arith.constant 0 : index
    %c0_202 = arith.constant 0 : index
    %732 = vector.load %arg15[%731, %c0_201, %c0_202] : memref<8x2x1xf32, #tpu.memory_space<vmem>>, vector<1x2x1xf32>
    %733 = vector.shape_cast %732 : vector<1x2x1xf32> to vector<2x1xf32>
    %734 = vector.shape_cast %727 : vector<2x8xf32> to vector<2x8x1xf32>
    %735 = vector.broadcast %734 : vector<2x8x1xf32> to vector<2x8x8xf32>
    %736 = vector.broadcast %680 : vector<1x8x8xf32> to vector<2x8x8xf32>
    %737 = arith.addf %735, %736 : vector<2x8x8xf32>
    %738 = vector.shape_cast %730 : vector<2x8xf32> to vector<2x1x8xf32>
    %739 = vector.broadcast %738 : vector<2x1x8xf32> to vector<2x8x8xf32>
    %740 = arith.addf %737, %739 : vector<2x8x8xf32>
    %cst_203 = arith.constant dense<0xFF800000> : vector<2x8xf32>
    %741 = vector.multi_reduction <maximumf>, %740, %cst_203 [1] : vector<2x8x8xf32> to vector<2x8xf32>
    %742 = vector.shape_cast %741 : vector<2x8xf32> to vector<2x1x8xf32>
    %743 = vector.broadcast %742 : vector<2x1x8xf32> to vector<2x8x8xf32>
    %744 = arith.subf %740, %743 : vector<2x8x8xf32>
    %745 = math.exp %744 : vector<2x8x8xf32>
    %cst_204 = arith.constant dense<0.000000e+00> : vector<2x8xf32>
    %746 = vector.multi_reduction <add>, %745, %cst_204 [1] : vector<2x8x8xf32> to vector<2x8xf32>
    %747 = vector.shape_cast %746 : vector<2x8xf32> to vector<2x1x8xf32>
    %748 = math.log %747 : vector<2x1x8xf32>
    %749 = arith.addf %742, %748 : vector<2x1x8xf32>
    %750 = vector.shape_cast %749 : vector<2x1x8xf32> to vector<2x8xf32>
    %cst_205 = arith.constant 5.000000e-01 : f32
    %751 = vector.broadcast %cst_205 : f32 to vector<2x1xf32>
    %752 = arith.cmpf ogt, %733, %751 : vector<2x1xf32>
    %753 = vector.shape_cast %752 : vector<2x1xi1> to vector<2x1xi1>
    %754 = vector.broadcast %753 : vector<2x1xi1> to vector<2x8xi1>
    %755 = arith.select %754, %750, %727 : vector<2x8xi1>, vector<2x8xf32>
    %c3_i32_206 = arith.constant 3 : i32
    %756 = arith.index_cast %c3_i32_206 : i32 to index
    %c0_207 = arith.constant 0 : index
    %c0_208 = arith.constant 0 : index
    %757 = vector.load %arg20[%756, %c0_207, %c0_208] : memref<8x2x8xf32, #tpu.memory_space<vmem>>, vector<1x2x8xf32>
    %758 = vector.shape_cast %757 : vector<1x2x8xf32> to vector<2x8xf32>
    %759 = arith.index_cast %c3_i32_206 : i32 to index
    %c0_209 = arith.constant 0 : index
    %c0_210 = arith.constant 0 : index
    %760 = vector.load %arg15[%759, %c0_209, %c0_210] : memref<8x2x1xf32, #tpu.memory_space<vmem>>, vector<1x2x1xf32>
    %761 = vector.shape_cast %760 : vector<1x2x1xf32> to vector<2x1xf32>
    %762 = vector.shape_cast %755 : vector<2x8xf32> to vector<2x8x1xf32>
    %763 = vector.broadcast %762 : vector<2x8x1xf32> to vector<2x8x8xf32>
    %764 = vector.broadcast %680 : vector<1x8x8xf32> to vector<2x8x8xf32>
    %765 = arith.addf %763, %764 : vector<2x8x8xf32>
    %766 = vector.shape_cast %758 : vector<2x8xf32> to vector<2x1x8xf32>
    %767 = vector.broadcast %766 : vector<2x1x8xf32> to vector<2x8x8xf32>
    %768 = arith.addf %765, %767 : vector<2x8x8xf32>
    %cst_211 = arith.constant dense<0xFF800000> : vector<2x8xf32>
    %769 = vector.multi_reduction <maximumf>, %768, %cst_211 [1] : vector<2x8x8xf32> to vector<2x8xf32>
    %770 = vector.shape_cast %769 : vector<2x8xf32> to vector<2x1x8xf32>
    %771 = vector.broadcast %770 : vector<2x1x8xf32> to vector<2x8x8xf32>
    %772 = arith.subf %768, %771 : vector<2x8x8xf32>
    %773 = math.exp %772 : vector<2x8x8xf32>
    %cst_212 = arith.constant dense<0.000000e+00> : vector<2x8xf32>
    %774 = vector.multi_reduction <add>, %773, %cst_212 [1] : vector<2x8x8xf32> to vector<2x8xf32>
    %775 = vector.shape_cast %774 : vector<2x8xf32> to vector<2x1x8xf32>
    %776 = math.log %775 : vector<2x1x8xf32>
    %777 = arith.addf %770, %776 : vector<2x1x8xf32>
    %778 = vector.shape_cast %777 : vector<2x1x8xf32> to vector<2x8xf32>
    %cst_213 = arith.constant 5.000000e-01 : f32
    %779 = vector.broadcast %cst_213 : f32 to vector<2x1xf32>
    %780 = arith.cmpf ogt, %761, %779 : vector<2x1xf32>
    %781 = vector.shape_cast %780 : vector<2x1xi1> to vector<2x1xi1>
    %782 = vector.broadcast %781 : vector<2x1xi1> to vector<2x8xi1>
    %783 = arith.select %782, %778, %755 : vector<2x8xi1>, vector<2x8xf32>
    %c4_i32_214 = arith.constant 4 : i32
    %784 = arith.index_cast %c4_i32_214 : i32 to index
    %c0_215 = arith.constant 0 : index
    %c0_216 = arith.constant 0 : index
    %785 = vector.load %arg20[%784, %c0_215, %c0_216] : memref<8x2x8xf32, #tpu.memory_space<vmem>>, vector<1x2x8xf32>
    %786 = vector.shape_cast %785 : vector<1x2x8xf32> to vector<2x8xf32>
    %787 = arith.index_cast %c4_i32_214 : i32 to index
    %c0_217 = arith.constant 0 : index
    %c0_218 = arith.constant 0 : index
    %788 = vector.load %arg15[%787, %c0_217, %c0_218] : memref<8x2x1xf32, #tpu.memory_space<vmem>>, vector<1x2x1xf32>
    %789 = vector.shape_cast %788 : vector<1x2x1xf32> to vector<2x1xf32>
    %790 = vector.shape_cast %783 : vector<2x8xf32> to vector<2x8x1xf32>
    %791 = vector.broadcast %790 : vector<2x8x1xf32> to vector<2x8x8xf32>
    %792 = vector.broadcast %680 : vector<1x8x8xf32> to vector<2x8x8xf32>
    %793 = arith.addf %791, %792 : vector<2x8x8xf32>
    %794 = vector.shape_cast %786 : vector<2x8xf32> to vector<2x1x8xf32>
    %795 = vector.broadcast %794 : vector<2x1x8xf32> to vector<2x8x8xf32>
    %796 = arith.addf %793, %795 : vector<2x8x8xf32>
    %cst_219 = arith.constant dense<0xFF800000> : vector<2x8xf32>
    %797 = vector.multi_reduction <maximumf>, %796, %cst_219 [1] : vector<2x8x8xf32> to vector<2x8xf32>
    %798 = vector.shape_cast %797 : vector<2x8xf32> to vector<2x1x8xf32>
    %799 = vector.broadcast %798 : vector<2x1x8xf32> to vector<2x8x8xf32>
    %800 = arith.subf %796, %799 : vector<2x8x8xf32>
    %801 = math.exp %800 : vector<2x8x8xf32>
    %cst_220 = arith.constant dense<0.000000e+00> : vector<2x8xf32>
    %802 = vector.multi_reduction <add>, %801, %cst_220 [1] : vector<2x8x8xf32> to vector<2x8xf32>
    %803 = vector.shape_cast %802 : vector<2x8xf32> to vector<2x1x8xf32>
    %804 = math.log %803 : vector<2x1x8xf32>
    %805 = arith.addf %798, %804 : vector<2x1x8xf32>
    %806 = vector.shape_cast %805 : vector<2x1x8xf32> to vector<2x8xf32>
    %cst_221 = arith.constant 5.000000e-01 : f32
    %807 = vector.broadcast %cst_221 : f32 to vector<2x1xf32>
    %808 = arith.cmpf ogt, %789, %807 : vector<2x1xf32>
    %809 = vector.shape_cast %808 : vector<2x1xi1> to vector<2x1xi1>
    %810 = vector.broadcast %809 : vector<2x1xi1> to vector<2x8xi1>
    %811 = arith.select %810, %806, %783 : vector<2x8xi1>, vector<2x8xf32>
    %c5_i32_222 = arith.constant 5 : i32
    %812 = arith.index_cast %c5_i32_222 : i32 to index
    %c0_223 = arith.constant 0 : index
    %c0_224 = arith.constant 0 : index
    %813 = vector.load %arg20[%812, %c0_223, %c0_224] : memref<8x2x8xf32, #tpu.memory_space<vmem>>, vector<1x2x8xf32>
    %814 = vector.shape_cast %813 : vector<1x2x8xf32> to vector<2x8xf32>
    %815 = arith.index_cast %c5_i32_222 : i32 to index
    %c0_225 = arith.constant 0 : index
    %c0_226 = arith.constant 0 : index
    %816 = vector.load %arg15[%815, %c0_225, %c0_226] : memref<8x2x1xf32, #tpu.memory_space<vmem>>, vector<1x2x1xf32>
    %817 = vector.shape_cast %816 : vector<1x2x1xf32> to vector<2x1xf32>
    %818 = vector.shape_cast %811 : vector<2x8xf32> to vector<2x8x1xf32>
    %819 = vector.broadcast %818 : vector<2x8x1xf32> to vector<2x8x8xf32>
    %820 = vector.broadcast %680 : vector<1x8x8xf32> to vector<2x8x8xf32>
    %821 = arith.addf %819, %820 : vector<2x8x8xf32>
    %822 = vector.shape_cast %814 : vector<2x8xf32> to vector<2x1x8xf32>
    %823 = vector.broadcast %822 : vector<2x1x8xf32> to vector<2x8x8xf32>
    %824 = arith.addf %821, %823 : vector<2x8x8xf32>
    %cst_227 = arith.constant dense<0xFF800000> : vector<2x8xf32>
    %825 = vector.multi_reduction <maximumf>, %824, %cst_227 [1] : vector<2x8x8xf32> to vector<2x8xf32>
    %826 = vector.shape_cast %825 : vector<2x8xf32> to vector<2x1x8xf32>
    %827 = vector.broadcast %826 : vector<2x1x8xf32> to vector<2x8x8xf32>
    %828 = arith.subf %824, %827 : vector<2x8x8xf32>
    %829 = math.exp %828 : vector<2x8x8xf32>
    %cst_228 = arith.constant dense<0.000000e+00> : vector<2x8xf32>
    %830 = vector.multi_reduction <add>, %829, %cst_228 [1] : vector<2x8x8xf32> to vector<2x8xf32>
    %831 = vector.shape_cast %830 : vector<2x8xf32> to vector<2x1x8xf32>
    %832 = math.log %831 : vector<2x1x8xf32>
    %833 = arith.addf %826, %832 : vector<2x1x8xf32>
    %834 = vector.shape_cast %833 : vector<2x1x8xf32> to vector<2x8xf32>
    %cst_229 = arith.constant 5.000000e-01 : f32
    %835 = vector.broadcast %cst_229 : f32 to vector<2x1xf32>
    %836 = arith.cmpf ogt, %817, %835 : vector<2x1xf32>
    %837 = vector.shape_cast %836 : vector<2x1xi1> to vector<2x1xi1>
    %838 = vector.broadcast %837 : vector<2x1xi1> to vector<2x8xi1>
    %839 = arith.select %838, %834, %811 : vector<2x8xi1>, vector<2x8xf32>
    %c6_i32_230 = arith.constant 6 : i32
    %840 = arith.index_cast %c6_i32_230 : i32 to index
    %c0_231 = arith.constant 0 : index
    %c0_232 = arith.constant 0 : index
    %841 = vector.load %arg20[%840, %c0_231, %c0_232] : memref<8x2x8xf32, #tpu.memory_space<vmem>>, vector<1x2x8xf32>
    %842 = vector.shape_cast %841 : vector<1x2x8xf32> to vector<2x8xf32>
    %843 = arith.index_cast %c6_i32_230 : i32 to index
    %c0_233 = arith.constant 0 : index
    %c0_234 = arith.constant 0 : index
    %844 = vector.load %arg15[%843, %c0_233, %c0_234] : memref<8x2x1xf32, #tpu.memory_space<vmem>>, vector<1x2x1xf32>
    %845 = vector.shape_cast %844 : vector<1x2x1xf32> to vector<2x1xf32>
    %846 = vector.shape_cast %839 : vector<2x8xf32> to vector<2x8x1xf32>
    %847 = vector.broadcast %846 : vector<2x8x1xf32> to vector<2x8x8xf32>
    %848 = vector.broadcast %680 : vector<1x8x8xf32> to vector<2x8x8xf32>
    %849 = arith.addf %847, %848 : vector<2x8x8xf32>
    %850 = vector.shape_cast %842 : vector<2x8xf32> to vector<2x1x8xf32>
    %851 = vector.broadcast %850 : vector<2x1x8xf32> to vector<2x8x8xf32>
    %852 = arith.addf %849, %851 : vector<2x8x8xf32>
    %cst_235 = arith.constant dense<0xFF800000> : vector<2x8xf32>
    %853 = vector.multi_reduction <maximumf>, %852, %cst_235 [1] : vector<2x8x8xf32> to vector<2x8xf32>
    %854 = vector.shape_cast %853 : vector<2x8xf32> to vector<2x1x8xf32>
    %855 = vector.broadcast %854 : vector<2x1x8xf32> to vector<2x8x8xf32>
    %856 = arith.subf %852, %855 : vector<2x8x8xf32>
    %857 = math.exp %856 : vector<2x8x8xf32>
    %cst_236 = arith.constant dense<0.000000e+00> : vector<2x8xf32>
    %858 = vector.multi_reduction <add>, %857, %cst_236 [1] : vector<2x8x8xf32> to vector<2x8xf32>
    %859 = vector.shape_cast %858 : vector<2x8xf32> to vector<2x1x8xf32>
    %860 = math.log %859 : vector<2x1x8xf32>
    %861 = arith.addf %854, %860 : vector<2x1x8xf32>
    %862 = vector.shape_cast %861 : vector<2x1x8xf32> to vector<2x8xf32>
    %cst_237 = arith.constant 5.000000e-01 : f32
    %863 = vector.broadcast %cst_237 : f32 to vector<2x1xf32>
    %864 = arith.cmpf ogt, %845, %863 : vector<2x1xf32>
    %865 = vector.shape_cast %864 : vector<2x1xi1> to vector<2x1xi1>
    %866 = vector.broadcast %865 : vector<2x1xi1> to vector<2x8xi1>
    %867 = arith.select %866, %862, %839 : vector<2x8xi1>, vector<2x8xf32>
    %c7_i32_238 = arith.constant 7 : i32
    %868 = arith.index_cast %c7_i32_238 : i32 to index
    %c0_239 = arith.constant 0 : index
    %c0_240 = arith.constant 0 : index
    %869 = vector.load %arg20[%868, %c0_239, %c0_240] : memref<8x2x8xf32, #tpu.memory_space<vmem>>, vector<1x2x8xf32>
    %870 = vector.shape_cast %869 : vector<1x2x8xf32> to vector<2x8xf32>
    %871 = arith.index_cast %c7_i32_238 : i32 to index
    %c0_241 = arith.constant 0 : index
    %c0_242 = arith.constant 0 : index
    %872 = vector.load %arg15[%871, %c0_241, %c0_242] : memref<8x2x1xf32, #tpu.memory_space<vmem>>, vector<1x2x1xf32>
    %873 = vector.shape_cast %872 : vector<1x2x1xf32> to vector<2x1xf32>
    %874 = vector.shape_cast %867 : vector<2x8xf32> to vector<2x8x1xf32>
    %875 = vector.broadcast %874 : vector<2x8x1xf32> to vector<2x8x8xf32>
    %876 = vector.broadcast %680 : vector<1x8x8xf32> to vector<2x8x8xf32>
    %877 = arith.addf %875, %876 : vector<2x8x8xf32>
    %878 = vector.shape_cast %870 : vector<2x8xf32> to vector<2x1x8xf32>
    %879 = vector.broadcast %878 : vector<2x1x8xf32> to vector<2x8x8xf32>
    %880 = arith.addf %877, %879 : vector<2x8x8xf32>
    %cst_243 = arith.constant dense<0xFF800000> : vector<2x8xf32>
    %881 = vector.multi_reduction <maximumf>, %880, %cst_243 [1] : vector<2x8x8xf32> to vector<2x8xf32>
    %882 = vector.shape_cast %881 : vector<2x8xf32> to vector<2x1x8xf32>
    %883 = vector.broadcast %882 : vector<2x1x8xf32> to vector<2x8x8xf32>
    %884 = arith.subf %880, %883 : vector<2x8x8xf32>
    %885 = math.exp %884 : vector<2x8x8xf32>
    %cst_244 = arith.constant dense<0.000000e+00> : vector<2x8xf32>
    %886 = vector.multi_reduction <add>, %885, %cst_244 [1] : vector<2x8x8xf32> to vector<2x8xf32>
    %887 = vector.shape_cast %886 : vector<2x8xf32> to vector<2x1x8xf32>
    %888 = math.log %887 : vector<2x1x8xf32>
    %889 = arith.addf %882, %888 : vector<2x1x8xf32>
    %890 = vector.shape_cast %889 : vector<2x1x8xf32> to vector<2x8xf32>
    %cst_245 = arith.constant 5.000000e-01 : f32
    %891 = vector.broadcast %cst_245 : f32 to vector<2x1xf32>
    %892 = arith.cmpf ogt, %873, %891 : vector<2x1xf32>
    %893 = vector.shape_cast %892 : vector<2x1xi1> to vector<2x1xi1>
    %894 = vector.broadcast %893 : vector<2x1xi1> to vector<2x8xi1>
    %895 = arith.select %894, %890, %867 : vector<2x8xi1>, vector<2x8xf32>
    %c7_i32_246 = arith.constant 7 : i32
    %896 = vector.broadcast %678 : vector<1x8xf32> to vector<2x8xf32>
    %897 = arith.addf %895, %896 : vector<2x8xf32>
    %cst_247 = arith.constant dense<0xFF800000> : vector<2xf32>
    %898 = vector.multi_reduction <maximumf>, %897, %cst_247 [1] : vector<2x8xf32> to vector<2xf32>
    %899 = vector.shape_cast %898 : vector<2xf32> to vector<2x1xf32>
    %900 = vector.broadcast %899 : vector<2x1xf32> to vector<2x8xf32>
    %901 = arith.subf %897, %900 : vector<2x8xf32>
    %902 = math.exp %901 : vector<2x8xf32>
    %cst_248 = arith.constant dense<0.000000e+00> : vector<2xf32>
    %903 = vector.multi_reduction <add>, %902, %cst_248 [1] : vector<2x8xf32> to vector<2xf32>
    %904 = vector.shape_cast %903 : vector<2xf32> to vector<2x1xf32>
    %905 = math.log %904 : vector<2x1xf32>
    %906 = arith.addf %899, %905 : vector<2x1xf32>
    %907 = vector.shape_cast %906 : vector<2x1xf32> to vector<1x2x1xf32>
    %cst_249 = arith.constant dense<0.000000e+00> : vector<1xf32>
    %908 = vector.multi_reduction <add>, %907, %cst_249 [1, 2] : vector<1x2x1xf32> to vector<1xf32>
    %909 = vector.shape_cast %908 : vector<1xf32> to vector<1x1x1xf32>
    %910 = vector.extract %909[0, 0, 0] : f32 from vector<1x1x1xf32>
    %911 = arith.subf %910, %695 : f32
    %912 = vector.broadcast %911 : f32 to vector<1x1xf32>
    %c0_250 = arith.constant 0 : index
    %c0_251 = arith.constant 0 : index
    %913 = vector.load %arg16[%c0_250, %c0_251] : memref<1x1xf32, #tpu.memory_space<vmem>>, vector<1x1xf32>
    tpu.vector_store %arg16[%c0_250, %c0_251], %912 {strides = array<i32>} : memref<1x1xf32, #tpu.memory_space<vmem>>, vector<1x1xf32>,
    return
  }
  func.func @transform_0(%arg0: i32) -> (i32, i32, i32) {
    %c0_i32 = arith.constant 0 : i32
    %c0_i32_0 = arith.constant 0 : i32
    %c0_i32_1 = arith.constant 0 : i32
    return %c0_i32, %arg0, %c0_i32_0 : i32, i32, i32
  }
  func.func @transform_1(%arg0: i32) -> (i32, i32) {
    %c0_i32 = arith.constant 0 : i32
    %c0_i32_0 = arith.constant 0 : i32
    %c0_i32_1 = arith.constant 0 : i32
    return %c0_i32, %c0_i32_0 : i32, i32
  }
  func.func @transform_2(%arg0: i32) -> (i32, i32) {
    %c0_i32 = arith.constant 0 : i32
    %c0_i32_0 = arith.constant 0 : i32
    %c0_i32_1 = arith.constant 0 : i32
    return %c0_i32, %c0_i32_0 : i32, i32
  }
  func.func @transform_3(%arg0: i32) -> (i32, i32) {
    %c0_i32 = arith.constant 0 : i32
    %c0_i32_0 = arith.constant 0 : i32
    %c0_i32_1 = arith.constant 0 : i32
    return %c0_i32, %c0_i32_0 : i32, i32
  }
  func.func @transform_4(%arg0: i32) -> (i32, i32) {
    %c0_i32 = arith.constant 0 : i32
    %c0_i32_0 = arith.constant 0 : i32
    %c0_i32_1 = arith.constant 0 : i32
    return %c0_i32, %c0_i32_0 : i32, i32
  }
  func.func @transform_5(%arg0: i32) -> (i32, i32) {
    %c0_i32 = arith.constant 0 : i32
    %c0_i32_0 = arith.constant 0 : i32
    %c0_i32_1 = arith.constant 0 : i32
    return %c0_i32, %c0_i32_0 : i32, i32
  }
  func.func @transform_6(%arg0: i32) -> (i32, i32) {
    %c0_i32 = arith.constant 0 : i32
    %c0_i32_0 = arith.constant 0 : i32
    %c0_i32_1 = arith.constant 0 : i32
    return %c0_i32, %c0_i32_0 : i32, i32
  }
  func.func @transform_7(%arg0: i32) -> (i32, i32) {
    %c0_i32 = arith.constant 0 : i32
    %c0_i32_0 = arith.constant 0 : i32
    %c0_i32_1 = arith.constant 0 : i32
    return %c0_i32, %c0_i32_0 : i32, i32
  }
  func.func @transform_8(%arg0: i32) -> (i32, i32) {
    %c0_i32 = arith.constant 0 : i32
    %c0_i32_0 = arith.constant 0 : i32
    %c0_i32_1 = arith.constant 0 : i32
    return %c0_i32, %c0_i32_0 : i32, i32
  }
  func.func @transform_9(%arg0: i32) -> (i32, i32) {
    %c0_i32 = arith.constant 0 : i32
    %c0_i32_0 = arith.constant 0 : i32
    %c0_i32_1 = arith.constant 0 : i32
    return %c0_i32, %c0_i32_0 : i32, i32
  }
  func.func @transform_10(%arg0: i32) -> (i32, i32) {
    %c0_i32 = arith.constant 0 : i32
    %c0_i32_0 = arith.constant 0 : i32
    %c0_i32_1 = arith.constant 0 : i32
    return %c0_i32, %c0_i32_0 : i32, i32
  }
  func.func @transform_11(%arg0: i32) -> (i32, i32) {
    %c0_i32 = arith.constant 0 : i32
    %c0_i32_0 = arith.constant 0 : i32
    %c0_i32_1 = arith.constant 0 : i32
    return %c0_i32, %c0_i32_0 : i32, i32
  }
  func.func @transform_12(%arg0: i32) -> (i32, i32) {
    %c0_i32 = arith.constant 0 : i32
    %c0_i32_0 = arith.constant 0 : i32
    %c0_i32_1 = arith.constant 0 : i32
    return %c0_i32, %c0_i32_0 : i32, i32
  }
  func.func @transform_13(%arg0: i32) -> (i32, i32, i32) {
    %c0_i32 = arith.constant 0 : i32
    %c0_i32_0 = arith.constant 0 : i32
    %c0_i32_1 = arith.constant 0 : i32
    return %c0_i32, %arg0, %c0_i32_0 : i32, i32, i32
  }
  func.func @transform_14(%arg0: i32) -> (i32, i32, i32) {
    %c0_i32 = arith.constant 0 : i32
    %c0_i32_0 = arith.constant 0 : i32
    %c0_i32_1 = arith.constant 0 : i32
    return %c0_i32, %arg0, %c0_i32_0 : i32, i32, i32
  }
  func.func @transform_15(%arg0: i32) -> (i32, i32) {
    %c0_i32 = arith.constant 0 : i32
    %c0_i32_0 = arith.constant 0 : i32
    return %arg0, %c0_i32 : i32, i32
  }
}

</mosaic_0001>

<llo_original>
// kernel: elmo_ner_loss.1
$region0: #{elmo_ner_loss.1}
  #allocation0 [shape = 'u32[]', space=smem, size = 0x4, offset = 0x4, fixed_abs, tag = 'smem constant byte address 0x4 - core index']
  #allocation1 [shape = 'u32[144,128]{1,0:T(1,128)}', space=vmem, size = 0x12000, scoped, tag = 'internal scratch']
  #allocation2 [shape = 'bf16[8,2,192]{2,1,0:T(2,128)(2,1)}', space=vmem, size = 0x2000, scoped, tag = 'scratch operand']
  #allocation3 [shape = 'bf16[8,2,32]{2,1,0:T(2,128)(2,1)}', space=vmem, size = 0x1000, scoped, tag = 'scratch operand']
  #allocation4 [shape = 'bf16[8,2,32]{2,1,0:T(2,128)(2,1)}', space=vmem, size = 0x1000, scoped, tag = 'scratch operand']
  #allocation5 [shape = 'f32[8,2,8]{2,1,0:T(2,128)}', space=vmem, size = 0x2000, scoped, tag = 'scratch operand']
  %s0 = inlined_call_operand.vmem [shape: bf16[8,2,32], index: 0, kind: input, shape index: {}]
  %s1 = inlined_call_operand.vmem [shape: bf16[32,192], index: 1, kind: input, shape index: {}]
  %s2 = inlined_call_operand.vmem [shape: f32[1,192], index: 2, kind: input, shape index: {}]
  %s3 = inlined_call_operand.vmem [shape: bf16[32,96], index: 3, kind: input, shape index: {}]
  %s4 = inlined_call_operand.vmem [shape: f32[1,32], index: 4, kind: input, shape index: {}]
  %s5 = inlined_call_operand.vmem [shape: bf16[32,96], index: 5, kind: input, shape index: {}]
  %s6 = inlined_call_operand.vmem [shape: f32[1,32], index: 6, kind: input, shape index: {}]
  %s7 = inlined_call_operand.vmem [shape: bf16[32,8], index: 7, kind: input, shape index: {}]
  %s8 = inlined_call_operand.vmem [shape: bf16[32,8], index: 8, kind: input, shape index: {}]
  %s9 = inlined_call_operand.vmem [shape: f32[1,8], index: 9, kind: input, shape index: {}]
  %s10 = inlined_call_operand.vmem [shape: f32[1,8], index: 10, kind: input, shape index: {}]
  %s11 = inlined_call_operand.vmem [shape: f32[1,8], index: 11, kind: input, shape index: {}]
  %s12 = inlined_call_operand.vmem [shape: f32[8,8], index: 12, kind: input, shape index: {}]
  %s13 = inlined_call_operand.vmem [shape: s32[8,2,1], index: 13, kind: input, shape index: {}]
  %s14 = inlined_call_operand.vmem [shape: f32[8,2,1], index: 14, kind: input, shape index: {}]
  %s15 = inlined_call_operand.hbm [shape: f32[1,1], index: 15, kind: output, shape index: {}]
  %s16 = sld [smem:[#allocation0]]
  $region70: #{elmo_ner_loss.1} parent=0
    _
  %s18 = ssub.s32 1, %s16
  %s19 = scalar_select 0, %s18, %s16
  $region1: #{elmo_ner_loss.1} parent=0
    #allocation6 [shape = 'u8[512]{0}', space=vmem, size = 0x400, scoped, tag = 'output window, operand 0, single buffered']
    #allocation7 [shape = 's32[1]{0}', space=sflag, size = 0x4, scoped, tag = 'scoped memory for elmo_ner_loss.1']
    %20 = vsyncpa [#allocation7], 0
    // Predicated region
    $region2: #{elmo_ner_loss.1} parent=1 // pred_check
      _
    $region3: #{elmo_ner_loss.1} parent=1 // pred_check_branch
      %22 = sbr.rel (0) target = $region5
    $region4: #{elmo_ner_loss.1} parent=1 // pred_region
      _
    $region5: #{elmo_ner_loss.1} parent=1 // pred_fallthru
      _
    // Predicated region
    $region6: #{elmo_ner_loss.1} parent=1 // pred_check
      _
    $region7: #{elmo_ner_loss.1} parent=1 // pred_check_branch
      %24 = sbr.rel (0) target = $region9
    $region8: #{elmo_ner_loss.1} parent=1 // pred_region
      _
    $region9: #{elmo_ner_loss.1} parent=1 // pred_fallthru
      _
    // Predicated region
    $region10: #{elmo_ner_loss.1} parent=1 // pred_check
      _
    $region11: #{elmo_ner_loss.1} parent=1 // pred_check_branch
      %26 = sbr.rel (0) target = $region13
    $region12: #{elmo_ner_loss.1} parent=1 // pred_region
      _
    $region13: #{elmo_ner_loss.1} parent=1 // pred_fallthru
      _
    // Predicated region
    $region14: #{elmo_ner_loss.1} parent=1 // pred_check
      _
    $region15: #{elmo_ner_loss.1} parent=1 // pred_check_branch
      %28 = sbr.rel (0) target = $region17
    $region16: #{elmo_ner_loss.1} parent=1 // pred_region
      _
    $region17: #{elmo_ner_loss.1} parent=1 // pred_fallthru
      _
    // Predicated region
    $region18: #{elmo_ner_loss.1} parent=1 // pred_check
      _
    $region19: #{elmo_ner_loss.1} parent=1 // pred_check_branch
      %30 = sbr.rel (0) target = $region21
    $region20: #{elmo_ner_loss.1} parent=1 // pred_region
      _
    $region21: #{elmo_ner_loss.1} parent=1 // pred_fallthru
      _
    // Predicated region
    $region22: #{elmo_ner_loss.1} parent=1 // pred_check
      _
    $region23: #{elmo_ner_loss.1} parent=1 // pred_check_branch
      %32 = sbr.rel (0) target = $region25
    $region24: #{elmo_ner_loss.1} parent=1 // pred_region
      _
    $region25: #{elmo_ner_loss.1} parent=1 // pred_fallthru
      _
    // Predicated region
    $region26: #{elmo_ner_loss.1} parent=1 // pred_check
      _
    $region27: #{elmo_ner_loss.1} parent=1 // pred_check_branch
      %34 = sbr.rel (0) target = $region29
    $region28: #{elmo_ner_loss.1} parent=1 // pred_region
      _
    $region29: #{elmo_ner_loss.1} parent=1 // pred_fallthru
      _
    // Predicated region
    $region30: #{elmo_ner_loss.1} parent=1 // pred_check
      _
    $region31: #{elmo_ner_loss.1} parent=1 // pred_check_branch
      %36 = sbr.rel (0) target = $region33
    $region32: #{elmo_ner_loss.1} parent=1 // pred_region
      _
    $region33: #{elmo_ner_loss.1} parent=1 // pred_fallthru
      _
    // Predicated region
    $region34: #{elmo_ner_loss.1} parent=1 // pred_check
      _
    $region35: #{elmo_ner_loss.1} parent=1 // pred_check_branch
      %38 = sbr.rel (0) target = $region37
    $region36: #{elmo_ner_loss.1} parent=1 // pred_region
      _
    $region37: #{elmo_ner_loss.1} parent=1 // pred_fallthru
      _
    // Predicated region
    $region38: #{elmo_ner_loss.1} parent=1 // pred_check
      _
    $region39: #{elmo_ner_loss.1} parent=1 // pred_check_branch
      %40 = sbr.rel (0) target = $region41
    $region40: #{elmo_ner_loss.1} parent=1 // pred_region
      _
    $region41: #{elmo_ner_loss.1} parent=1 // pred_fallthru
      _
    // Predicated region
    $region42: #{elmo_ner_loss.1} parent=1 // pred_check
      _
    $region43: #{elmo_ner_loss.1} parent=1 // pred_check_branch
      %42 = sbr.rel (0) target = $region45
    $region44: #{elmo_ner_loss.1} parent=1 // pred_region
      _
    $region45: #{elmo_ner_loss.1} parent=1 // pred_fallthru
      _
    // Predicated region
    $region46: #{elmo_ner_loss.1} parent=1 // pred_check
      _
    $region47: #{elmo_ner_loss.1} parent=1 // pred_check_branch
      %44 = sbr.rel (0) target = $region49
    $region48: #{elmo_ner_loss.1} parent=1 // pred_region
      _
    $region49: #{elmo_ner_loss.1} parent=1 // pred_fallthru
      _
    // Predicated region
    $region50: #{elmo_ner_loss.1} parent=1 // pred_check
      _
    $region51: #{elmo_ner_loss.1} parent=1 // pred_check_branch
      %46 = sbr.rel (0) target = $region53
    $region52: #{elmo_ner_loss.1} parent=1 // pred_region
      _
    $region53: #{elmo_ner_loss.1} parent=1 // pred_fallthru
      _
    // Predicated region
    $region54: #{elmo_ner_loss.1} parent=1 // pred_check
      _
    $region55: #{elmo_ner_loss.1} parent=1 // pred_check_branch
      %48 = sbr.rel (0) target = $region57
    $region56: #{elmo_ner_loss.1} parent=1 // pred_region
      _
    $region57: #{elmo_ner_loss.1} parent=1 // pred_fallthru
      _
    // Predicated region
    $region58: #{elmo_ner_loss.1} parent=1 // pred_check
      _
    $region59: #{elmo_ner_loss.1} parent=1 // pred_check_branch
      %50 = sbr.rel (0) target = $region61
    $region60: #{elmo_ner_loss.1} parent=1 // pred_region
      _
    $region61: #{elmo_ner_loss.1} parent=1 // pred_fallthru
      _
    %v52 = vld [vmem:[%s0] sm:$0x1]
    %v53 = vld [vmem:[%s0 + $0x1] sm:$0x1]
    %v54 = vld [vmem:[%s0 + $0x2] sm:$0x1]
    %v55 = vld [vmem:[%s0 + $0x3] sm:$0x1]
    %v56 = vld [vmem:[%s0 + $0x4] sm:$0x1]
    %v57 = vld [vmem:[%s0 + $0x5] sm:$0x1]
    %v58 = vld [vmem:[%s0 + $0x6] sm:$0x1]
    %v59 = vld [vmem:[%s0 + $0x7] sm:$0x1]
    %v60 = vld [vmem:[%s1] sm:$0xff]
    %v61 = vld [vmem:[%s1 + $0x8] sm:$0xff]
    %v62 = vld [vmem:[%s1 + $0x10] sm:$0xff]
    %v63 = vld [vmem:[%s1 + $0x18] sm:$0xff]
    %v64 = vld [vmem:[%s2] sm:$0x3]
    %v66 = vlaneseq
    %v67 = vshrl.u32 %v66, 7
    %v68 = vsub.s32 0, %v67
    %v69 = vrot.slane %v64, %v68
    %v70 = vlaneseq
    %v71 = vshrl.u32 %v70, 7
    %v72 = vsub.s32 1, %v71
    %v73 = vrot.slane %v64, %v72
    %v84 = vcombine.low %v52, %v53
    %v85 = vcombine.low %v54, %v55
    %v86 = vcombine.low %v56, %v57
    %v87 = vcombine.low %v58, %v59
    %v89 = vunpack.c.l.s4 1966171168
    %v90 = vunpack.c.0.s8 %v89
    %v91 = vlaneseq
    %v92 = vshrl.u32 %v91, 7
    %v93 = vsub.s32 %v90, %v92
    %v94 = vrot.slane %v84, %v93
    %v96 = vunpack.c.l.s4 1966171168
    %v97 = vunpack.c.0.s8 %v96
    %v98 = vlaneseq
    %v99 = vshrl.u32 %v98, 7
    %v100 = vsub.s32 %v97, %v99
    %v101 = vrot.slane %v85, %v100
    %v103 = vunpack.c.l.s4 1966171168
    %v104 = vunpack.c.0.s8 %v103
    %v105 = vlaneseq
    %v106 = vshrl.u32 %v105, 7
    %v107 = vsub.s32 %v104, %v106
    %v108 = vrot.slane %v86, %v107
    %v110 = vunpack.c.l.s4 1966171168
    %v111 = vunpack.c.0.s8 %v110
    %v112 = vlaneseq
    %v113 = vshrl.u32 %v112, 7
    %v114 = vsub.s32 %v111, %v113
    %v115 = vrot.slane %v87, %v114
    %v116 = vcombine.low %v94, %v101
    %v117 = vcombine.low %v108, %v115
    %v119 = vunpack.c.l.s4 1966171168
    %v120 = vunpack.c.0.s8 %v119
    %v121 = vlaneseq
    %v122 = vshrl.u32 %v121, 7
    %v123 = vsub.s32 %v120, %v122
    %v124 = vrot.slane %v116, %v123
    %v126 = vunpack.c.l.s4 1966171168
    %v127 = vunpack.c.0.s8 %v126
    %v128 = vlaneseq
    %v129 = vshrl.u32 %v128, 7
    %v130 = vsub.s32 %v127, %v129
    %v131 = vrot.slane %v117, %v130
    %v132 = vcombine.low %v124, %v131
    %v137 = vunpack.c.l.b16 %v60
    %v138 = vunpack.c.h.b16 %v60
    %v139 = vunpack.c.l.b16 %v61
    %v140 = vunpack.c.h.b16 %v61
    %v141 = vunpack.c.l.b16 %v62
    %v142 = vunpack.c.h.b16 %v62
    %v143 = vunpack.c.l.b16 %v63
    %v144 = vunpack.c.h.b16 %v63
    %v145 = vpack.c.b16 %v139, %v137
    %v146 = vpack.c.b16 %v140, %v138
    %v147 = vpack.c.b16 %v143, %v141
    %v148 = vpack.c.b16 %v144, %v142
    %vm153 = vcmask 261120
    %v155 = vsel %vm153, %v132, 0
    %157 = vmatprep.subr.bf16.mxu0 0
    %158 = vmatpush1.bf16.msra.mxu0 0
    %159 = vmatprep.subr.bf16.mxu0 0
    %160 = vmatpush1.bf16.msra.mxu0 0
    %161 = vmatprep.subr.bf16.mxu0 0
    %162 = vmatpush1.bf16.msra.mxu0 0
    %163 = vmatprep.subr.bf16.mxu0 0
    %164 = vmatpush1.bf16.msra.mxu0 0
    %165 = vmatprep.subr.bf16.mxu0 0
    %166 = vmatpush1.bf16.msra.mxu0 0
    %167 = vmatprep.subr.bf16.mxu0 0
    %168 = vmatpush1.bf16.msra.mxu0 0
    %169 = vmatprep.subr.bf16.mxu0 %v148
    %170 = vmatpush1.bf16.msra.mxu0 %v147
    %171 = vmatprep.subr.bf16.mxu0 %v146
    %172 = vmatpush1.bf16.msra.mxu0 %v145
    %173 = vmatprep.subr.bf16.mxu0 0
    %174 = vmatpush2.bf16.msra.mxu0 0
    %175 = vmatprep.subr.bf16.mxu0 0
    %176 = vmatpush2.bf16.msra.mxu0 0
    %177 = vmatprep.subr.bf16.mxu0 0
    %178 = vmatpush2.bf16.msra.mxu0 0
    %179 = vmatprep.subr.bf16.mxu0 0
    %180 = vmatpush2.bf16.msra.mxu0 0
    %181 = vmatprep.subr.bf16.mxu0 0
    %182 = vmatpush2.bf16.msra.mxu0 0
    %183 = vmatprep.subr.bf16.mxu0 0
    %184 = vmatpush2.bf16.msra.mxu0 0
    %185 = vmatprep.subr.bf16.mxu0 0
    %186 = vmatpush2.bf16.msra.mxu0 0
    %187 = vmatprep.subr.bf16.mxu0 0
    %188 = vmatpush2.bf16.msra.mxu0 0
    %189 = vmatprep.mubr.bf16.mxu0 0
    %190 = vmatmul.mubr.bf16.gmra.mxu0 %v155
    %v191 = vpop.f32.mrf.mxu0
    %v192 = vadd.f32 %v69, %v191
    %v193 = vpop.f32.mrf.mxu0
    %v194 = vadd.f32 %v73, %v193
    %v195 = vpop.f32.mrf.mxu0
    %v196 = vadd.f32 %v69, %v195
    %v197 = vpop.f32.mrf.mxu0
    %v198 = vadd.f32 %v73, %v197
    %199 = vdwg.mxu0
    %v204 = vcombine.low %v192, %v194
    %v205 = vcombine.high %v192, %v194
    %v207 = vunpack.c.l.s4 1983009808
    %v208 = vunpack.c.0.s8 %v207
    %v209 = vlaneseq
    %v210 = vshrl.u32 %v209, 7
    %v211 = vsub.s32 %v208, %v210
    %v212 = vrot.slane %v204, %v211
    %v214 = vunpack.c.l.s4 1983009808
    %v215 = vunpack.c.0.s8 %v214
    %v216 = vlaneseq
    %v217 = vshrl.u32 %v216, 7
    %v218 = vsub.s32 %v215, %v217
    %v219 = vrot.slane %v205, %v218
    %v220 = vcombine.high %v212, %v212
    %v221 = vcombine.high %v219, %v219
    %v222 = vcombine.low %v196, %v198
    %v223 = vcombine.high %v196, %v198
    %v225 = vunpack.c.l.s4 1983009808
    %v226 = vunpack.c.0.s8 %v225
    %v227 = vlaneseq
    %v228 = vshrl.u32 %v227, 7
    %v229 = vsub.s32 %v226, %v228
    %v230 = vrot.slane %v222, %v229
    %v232 = vunpack.c.l.s4 1983009808
    %v233 = vunpack.c.0.s8 %v232
    %v234 = vlaneseq
    %v235 = vshrl.u32 %v234, 7
    %v236 = vsub.s32 %v233, %v235
    %v237 = vrot.slane %v223, %v236
    %v238 = vcombine.high %v230, %v230
    %v239 = vcombine.high %v237, %v237
    %v241 = vunpack.c.l.s4 1983009808
    %v242 = vunpack.c.0.s8 %v241
    %v243 = vlaneseq
    %v244 = vshrl.u32 %v243, 7
    %v245 = vsub.s32 %v242, %v244
    %v246 = vrot.slane %v212, %v245
    %v247 = vcombine.high %v246, %v246
    %v249 = vunpack.c.l.s4 1983009808
    %v250 = vunpack.c.0.s8 %v249
    %v251 = vlaneseq
    %v252 = vshrl.u32 %v251, 7
    %v253 = vsub.s32 %v250, %v252
    %v254 = vrot.slane %v220, %v253
    %v255 = vcombine.high %v254, %v254
    %v257 = vunpack.c.l.s4 1983009808
    %v258 = vunpack.c.0.s8 %v257
    %v259 = vlaneseq
    %v260 = vshrl.u32 %v259, 7
    %v261 = vsub.s32 %v258, %v260
    %v262 = vrot.slane %v219, %v261
    %v263 = vcombine.high %v262, %v262
    %v265 = vunpack.c.l.s4 1983009808
    %v266 = vunpack.c.0.s8 %v265
    %v267 = vlaneseq
    %v268 = vshrl.u32 %v267, 7
    %v269 = vsub.s32 %v266, %v268
    %v270 = vrot.slane %v221, %v269
    %v271 = vcombine.high %v270, %v270
    %v273 = vunpack.c.l.s4 1983009808
    %v274 = vunpack.c.0.s8 %v273
    %v275 = vlaneseq
    %v276 = vshrl.u32 %v275, 7
    %v277 = vsub.s32 %v274, %v276
    %v278 = vrot.slane %v230, %v277
    %v279 = vcombine.high %v278, %v278
    %v281 = vunpack.c.l.s4 1983009808
    %v282 = vunpack.c.0.s8 %v281
    %v283 = vlaneseq
    %v284 = vshrl.u32 %v283, 7
    %v285 = vsub.s32 %v282, %v284
    %v286 = vrot.slane %v238, %v285
    %v287 = vcombine.high %v286, %v286
    %v289 = vunpack.c.l.s4 1983009808
    %v290 = vunpack.c.0.s8 %v289
    %v291 = vlaneseq
    %v292 = vshrl.u32 %v291, 7
    %v293 = vsub.s32 %v290, %v292
    %v294 = vrot.slane %v237, %v293
    %v295 = vcombine.high %v294, %v294
    %v297 = vunpack.c.l.s4 1983009808
    %v298 = vunpack.c.0.s8 %v297
    %v299 = vlaneseq
    %v300 = vshrl.u32 %v299, 7
    %v301 = vsub.s32 %v298, %v300
    %v302 = vrot.slane %v239, %v301
    %v303 = vcombine.high %v302, %v302
    %v320 = vpack.c.bf16 %v246, %v246
    %v321 = vpack.c.bf16 %v247, %v247
    %v322 = vpack.c.bf16 %v254, %v254
    %v323 = vpack.c.bf16 %v255, %v255
    %v324 = vpack.c.bf16 %v262, %v262
    %v325 = vpack.c.bf16 %v263, %v263
    %v326 = vpack.c.bf16 %v270, %v270
    %v327 = vpack.c.bf16 %v271, %v271
    %v328 = vpack.c.bf16 %v278, %v278
    %v329 = vpack.c.bf16 %v279, %v279
    %v330 = vpack.c.bf16 %v286, %v286
    %v331 = vpack.c.bf16 %v287, %v287
    %v332 = vpack.c.bf16 %v294, %v294
    %v333 = vpack.c.bf16 %v295, %v295
    %v334 = vpack.c.bf16 %v302, %v302
    %v335 = vpack.c.bf16 %v303, %v303
    %v352 = vcombine.low %v320, %v321
    %v354 = vunpack.c.l.s4 1966171168
    %v355 = vunpack.c.0.s8 %v354
    %v356 = vlaneseq
    %v357 = vshrl.u32 %v356, 7
    %v358 = vsub.s32 %v355, %v357
    %v359 = vrot.slane %v352, %v358
    %v361 = vunpack.c.l.s4 1966171168
    %v362 = vunpack.c.0.s8 %v361
    %v363 = vlaneseq
    %v364 = vshrl.u32 %v363, 7
    %v365 = vsub.s32 %v362, %v364
    %v366 = vrot.slane %v359, %v365
    %v367 = vcombine.low %v322, %v323
    %v369 = vunpack.c.l.s4 1966171168
    %v370 = vunpack.c.0.s8 %v369
    %v371 = vlaneseq
    %v372 = vshrl.u32 %v371, 7
    %v373 = vsub.s32 %v370, %v372
    %v374 = vrot.slane %v367, %v373
    %v376 = vunpack.c.l.s4 1966171168
    %v377 = vunpack.c.0.s8 %v376
    %v378 = vlaneseq
    %v379 = vshrl.u32 %v378, 7
    %v380 = vsub.s32 %v377, %v379
    %v381 = vrot.slane %v374, %v380
    %v382 = vcombine.low %v324, %v325
    %v384 = vunpack.c.l.s4 1966171168
    %v385 = vunpack.c.0.s8 %v384
    %v386 = vlaneseq
    %v387 = vshrl.u32 %v386, 7
    %v388 = vsub.s32 %v385, %v387
    %v389 = vrot.slane %v382, %v388
    %v391 = vunpack.c.l.s4 1966171168
    %v392 = vunpack.c.0.s8 %v391
    %v393 = vlaneseq
    %v394 = vshrl.u32 %v393, 7
    %v395 = vsub.s32 %v392, %v394
    %v396 = vrot.slane %v389, %v395
    %v397 = vcombine.low %v326, %v327
    %v399 = vunpack.c.l.s4 1966171168
    %v400 = vunpack.c.0.s8 %v399
    %v401 = vlaneseq
    %v402 = vshrl.u32 %v401, 7
    %v403 = vsub.s32 %v400, %v402
    %v404 = vrot.slane %v397, %v403
    %v406 = vunpack.c.l.s4 1966171168
    %v407 = vunpack.c.0.s8 %v406
    %v408 = vlaneseq
    %v409 = vshrl.u32 %v408, 7
    %v410 = vsub.s32 %v407, %v409
    %v411 = vrot.slane %v404, %v410
    %v412 = vcombine.low %v328, %v329
    %v414 = vunpack.c.l.s4 1966171168
    %v415 = vunpack.c.0.s8 %v414
    %v416 = vlaneseq
    %v417 = vshrl.u32 %v416, 7
    %v418 = vsub.s32 %v415, %v417
    %v419 = vrot.slane %v412, %v418
    %v421 = vunpack.c.l.s4 1966171168
    %v422 = vunpack.c.0.s8 %v421
    %v423 = vlaneseq
    %v424 = vshrl.u32 %v423, 7
    %v425 = vsub.s32 %v422, %v424
    %v426 = vrot.slane %v419, %v425
    %v427 = vcombine.low %v330, %v331
    %v429 = vunpack.c.l.s4 1966171168
    %v430 = vunpack.c.0.s8 %v429
    %v431 = vlaneseq
    %v432 = vshrl.u32 %v431, 7
    %v433 = vsub.s32 %v430, %v432
    %v434 = vrot.slane %v427, %v433
    %v436 = vunpack.c.l.s4 1966171168
    %v437 = vunpack.c.0.s8 %v436
    %v438 = vlaneseq
    %v439 = vshrl.u32 %v438, 7
    %v440 = vsub.s32 %v437, %v439
    %v441 = vrot.slane %v434, %v440
    %v442 = vcombine.low %v332, %v333
    %v444 = vunpack.c.l.s4 1966171168
    %v445 = vunpack.c.0.s8 %v444
    %v446 = vlaneseq
    %v447 = vshrl.u32 %v446, 7
    %v448 = vsub.s32 %v445, %v447
    %v449 = vrot.slane %v442, %v448
    %v451 = vunpack.c.l.s4 1966171168
    %v452 = vunpack.c.0.s8 %v451
    %v453 = vlaneseq
    %v454 = vshrl.u32 %v453, 7
    %v455 = vsub.s32 %v452, %v454
    %v456 = vrot.slane %v449, %v455
    %v457 = vcombine.low %v334, %v335
    %v459 = vunpack.c.l.s4 1966171168
    %v460 = vunpack.c.0.s8 %v459
    %v461 = vlaneseq
    %v462 = vshrl.u32 %v461, 7
    %v463 = vsub.s32 %v460, %v462
    %v464 = vrot.slane %v457, %v463
    %v466 = vunpack.c.l.s4 1966171168
    %v467 = vunpack.c.0.s8 %v466
    %v468 = vlaneseq
    %v469 = vshrl.u32 %v468, 7
    %v470 = vsub.s32 %v467, %v469
    %v471 = vrot.slane %v464, %v470
    %vm480 = vcmask 1040384
    %vm481 = vcmask 517121
    %vm482 = vmor %vm481, %vm480
    %483 = vst.msk [vmem:[#allocation2] sm:$0x3] %vm482, %v366
    %484 = vst.msk [vmem:[#allocation2 + $0x2] sm:$0x3] %vm482, %v381
    %485 = vst.msk [vmem:[#allocation2 + $0x4] sm:$0x3] %vm482, %v396
    %486 = vst.msk [vmem:[#allocation2 + $0x6] sm:$0x3] %vm482, %v411
    %487 = vst.msk [vmem:[#allocation2 + $0x8] sm:$0x3] %vm482, %v426
    %488 = vst.msk [vmem:[#allocation2 + $0xa] sm:$0x3] %vm482, %v441
    %489 = vst.msk [vmem:[#allocation2 + $0xc] sm:$0x3] %vm482, %v456
    %490 = vst.msk [vmem:[#allocation2 + $0xe] sm:$0x3] %vm482, %v471
    %v491 = vld [vmem:[%s3] sm:$0xf]
    %v492 = vld [vmem:[%s3 + $0x4] sm:$0xf]
    %v493 = vld [vmem:[%s3 + $0x8] sm:$0xf]
    %v494 = vld [vmem:[%s3 + $0xc] sm:$0xf]
    %v495 = vld [vmem:[%s5] sm:$0xf]
    %v496 = vld [vmem:[%s5 + $0x4] sm:$0xf]
    %v497 = vld [vmem:[%s5 + $0x8] sm:$0xf]
    %v498 = vld [vmem:[%s5 + $0xc] sm:$0xf]
    %v499 = vld [vmem:[%s4] sm:$0x1]
    %v500 = vld [vmem:[%s6] sm:$0x1]
    %v505 = vunpack.c.l.b16 %v491
    %v506 = vunpack.c.l.b16 %v492
    %v507 = vunpack.c.l.b16 %v493
    %v508 = vunpack.c.l.b16 %v494
    %v509 = vpack.c.b16 %v506, %v505
    %v510 = vpack.c.b16 %v508, %v507
    %v514 = vsel %vm153, 0, 0
    %516 = vmatprep.subr.bf16.mxu0 0
    %517 = vmatpush1.bf16.msra.mxu0 0
    %518 = vmatprep.subr.bf16.mxu0 0
    %519 = vmatpush1.bf16.msra.mxu0 0
    %520 = vmatprep.subr.bf16.mxu0 0
    %521 = vmatpush1.bf16.msra.mxu0 0
    %522 = vmatprep.subr.bf16.mxu0 0
    %523 = vmatpush1.bf16.msra.mxu0 0
    %524 = vmatprep.subr.bf16.mxu0 0
    %525 = vmatpush1.bf16.msra.mxu0 0
    %526 = vmatprep.subr.bf16.mxu0 0
    %527 = vmatpush1.bf16.msra.mxu0 0
    %528 = vmatprep.subr.bf16.mxu0 0
    %529 = vmatpush1.bf16.msra.mxu0 %v510
    %530 = vmatprep.subr.bf16.mxu0 0
    %531 = vmatpush1.bf16.msra.mxu0 %v509
    %532 = vmatprep.subr.bf16.mxu0 0
    %533 = vmatpush2.bf16.msra.mxu0 0
    %534 = vmatprep.subr.bf16.mxu0 0
    %535 = vmatpush2.bf16.msra.mxu0 0
    %536 = vmatprep.subr.bf16.mxu0 0
    %537 = vmatpush2.bf16.msra.mxu0 0
    %538 = vmatprep.subr.bf16.mxu0 0
    %539 = vmatpush2.bf16.msra.mxu0 0
    %540 = vmatprep.subr.bf16.mxu0 0
    %541 = vmatpush2.bf16.msra.mxu0 0
    %542 = vmatprep.subr.bf16.mxu0 0
    %543 = vmatpush2.bf16.msra.mxu0 0
    %544 = vmatprep.subr.bf16.mxu0 0
    %545 = vmatpush2.bf16.msra.mxu0 0
    %546 = vmatprep.subr.bf16.mxu0 0
    %547 = vmatpush2.bf16.msra.mxu0 0
    %548 = vmatprep.mubr.bf16.mxu0 0
    %549 = vmatmul.mubr.bf16.gmra.mxu0 %v514
    %v550 = vpop.f32.mrf.mxu0
    %v551 = vadd.f32 0.0, %v550
    %v552 = vpop.f32.mrf.mxu0
    %v553 = vpop.f32.mrf.mxu0
    %v554 = vpop.f32.mrf.mxu0
    %555 = vdwg.mxu0
    %v560 = vunpack.c.l.b16 %v495
    %v561 = vunpack.c.l.b16 %v496
    %v562 = vunpack.c.l.b16 %v497
    %v563 = vunpack.c.l.b16 %v498
    %v564 = vpack.c.b16 %v561, %v560
    %v565 = vpack.c.b16 %v563, %v562
    %568 = vmatprep.subr.bf16.mxu0 0
    %569 = vmatpush1.bf16.msra.mxu0 0
    %570 = vmatprep.subr.bf16.mxu0 0
    %571 = vmatpush1.bf16.msra.mxu0 0
    %572 = vmatprep.subr.bf16.mxu0 0
    %573 = vmatpush1.bf16.msra.mxu0 0
    %574 = vmatprep.subr.bf16.mxu0 0
    %575 = vmatpush1.bf16.msra.mxu0 0
    %576 = vmatprep.subr.bf16.mxu0 0
    %577 = vmatpush1.bf16.msra.mxu0 0
    %578 = vmatprep.subr.bf16.mxu0 0
    %579 = vmatpush1.bf16.msra.mxu0 0
    %580 = vmatprep.subr.bf16.mxu0 0
    %581 = vmatpush1.bf16.msra.mxu0 %v565
    %582 = vmatprep.subr.bf16.mxu0 0
    %583 = vmatpush1.bf16.msra.mxu0 %v564
    %584 = vmatprep.subr.bf16.mxu0 0
    %585 = vmatpush2.bf16.msra.mxu0 0
    %586 = vmatprep.subr.bf16.mxu0 0
    %587 = vmatpush2.bf16.msra.mxu0 0
    %588 = vmatprep.subr.bf16.mxu0 0
    %589 = vmatpush2.bf16.msra.mxu0 0
    %590 = vmatprep.subr.bf16.mxu0 0
    %591 = vmatpush2.bf16.msra.mxu0 0
    %592 = vmatprep.subr.bf16.mxu0 0
    %593 = vmatpush2.bf16.msra.mxu0 0
    %594 = vmatprep.subr.bf16.mxu0 0
    %595 = vmatpush2.bf16.msra.mxu0 0
    %596 = vmatprep.subr.bf16.mxu0 0
    %597 = vmatpush2.bf16.msra.mxu0 0
    %598 = vmatprep.subr.bf16.mxu0 0
    %599 = vmatpush2.bf16.msra.mxu0 0
    %600 = vmatprep.mubr.bf16.mxu0 0
    %601 = vmatmul.mubr.bf16.gmra.mxu0 %v514
    %v602 = vpop.f32.mrf.mxu0
    %v603 = vadd.f32 0.0, %v602
    %v604 = vpop.f32.mrf.mxu0
    %v605 = vpop.f32.mrf.mxu0
    %v606 = vpop.f32.mrf.mxu0
    %607 = vdwg.mxu0
    %v608 = vld [vmem:[#allocation2] sm:$0x3]
    %s609 = scalar_lea.vmem [#allocation2], 14
    %v610 = vld [vmem:[%s609] sm:$0x3]
    %v611 = vunpack.c.l.bf16 %v608
    %v612 = vunpack.c.l.bf16 %v610
    %v613 = vadd.f32 %v611, %v551
    %v614 = vxor.u32 %v613, 2147483648
    %v615 = vmul.f32 %v614, 1.442695
    %v616 = vpow.pop %v615
    %v617 = vadd.f32 %v616, 1.0
    %v618 = vrcp.pop %v617
    %v619 = vmul.f32 1.0, %v618
    %v621 = vlaneseq
    %v622 = vshrl.u32 %v621, 7
    %v623 = vsub.s32 0, %v622
    %v624 = vrot.slane %v499, %v623
    %625 = vrot.lane.b32.xlu0 %v624, 64
    %v626 = vpop.permute.xlu0 %625
    %v628 = vadd.f32 %v551, %v626
    %v631 = vunpack.c.l.s4 1983009808
    %v632 = vunpack.c.0.s8 %v631
    %v633 = vlaneseq
    %v634 = vshrl.u32 %v633, 7
    %v635 = vsub.s32 %v632, %v634
    %v636 = vrot.slane %v628, %v635
    %637 = vrot.lane.b32.xlu0 %v636, 64
    %v638 = vpop.permute.xlu0 %637
    %v640 = vmul.f32 %v619, %v638
    %642 = vrot.lane.b32.xlu0 %v640, 64
    %v643 = vpop.permute.xlu0 %642
    %v645 = vadd.f32 %v611, %v643
    %v646 = vtanh.pop %v645
    %v647 = vsub.f32 1.0, %v619
    %649 = vrot.lane.b32.xlu0 %v646, 96
    %v650 = vpop.permute.xlu0 %649
    %v652 = vmul.f32 %v647, %v650
    %v653 = vmul.f32 %v619, 0.0
    %v654 = vadd.f32 %v652, %v653
    %v657 = vunpack.c.l.s4 1983009808
    %v658 = vunpack.c.0.s8 %v657
    %v659 = vlaneseq
    %v660 = vshrl.u32 %v659, 7
    %v661 = vsub.s32 %v658, %v660
    %v662 = vrot.slane %v603, %v661
    %663 = vrot.lane.b32.xlu0 %v662, 96
    %v664 = vpop.permute.xlu0 %663
    %v666 = vadd.f32 %v612, %v664
    %v667 = vxor.u32 %v666, 2147483648
    %v668 = vmul.f32 %v667, 1.442695
    %v669 = vpow.pop %v668
    %v670 = vadd.f32 %v669, 1.0
    %v671 = vrcp.pop %v670
    %v672 = vmul.f32 1.0, %v671
    %v674 = vrot.slane %v612, 2
    %v676 = vadd.f32 %v674, %v664
    %v677 = vxor.u32 %v676, 2147483648
    %v678 = vmul.f32 %v677, 1.442695
    %v679 = vpow.pop %v678
    %v680 = vadd.f32 %v679, 1.0
    %v681 = vrcp.pop %v680
    %v682 = vmul.f32 1.0, %v681
    %v684 = vlaneseq
    %v685 = vshrl.u32 %v684, 7
    %v686 = vsub.s32 0, %v685
    %v687 = vrot.slane %v500, %v686
    %688 = vrot.lane.b32.xlu0 %v687, 64
    %v689 = vpop.permute.xlu0 %688
    %v691 = vadd.f32 %v603, %v689
    %v694 = vunpack.c.l.s4 1983009808
    %v695 = vunpack.c.0.s8 %v694
    %v696 = vlaneseq
    %v697 = vshrl.u32 %v696, 7
    %v698 = vsub.s32 %v695, %v697
    %v699 = vrot.slane %v691, %v698
    %700 = vrot.lane.b32.xlu0 %v699, 32
    %v701 = vpop.permute.xlu0 %700
    %v703 = vmul.f32 %v672, %v701
    %704 = vrot.lane.b32.xlu0 %v612, 96
    %v705 = vpop.permute.xlu0 %704
    %v706 = vrot.slane %v705, 2
    %709 = vrot.lane.b32.xlu0 %v703, 32
    %v710 = vpop.permute.xlu0 %709
    %v712 = vadd.f32 %v706, %v710
    %v713 = vtanh.pop %v712
    %v714 = vsub.f32 1.0, %v682
    %v715 = vmul.f32 %v714, %v713
    %v716 = vmul.f32 %v682, 0.0
    %v717 = vadd.f32 %v715, %v716
    %v718 = vpack.c.bf16 %v654, %v654
    %v721 = vunpack.c.l.s4 1966171168
    %v722 = vunpack.c.0.s8 %v721
    %v723 = vlaneseq
    %v724 = vshrl.u32 %v723, 7
    %v725 = vsub.s32 %v722, %v724
    %v726 = vrot.slane %v718, %v725
    %v728 = vunpack.c.l.s4 1966171168
    %v729 = vunpack.c.0.s8 %v728
    %v730 = vlaneseq
    %v731 = vshrl.u32 %v730, 7
    %v732 = vsub.s32 %v729, %v731
    %v733 = vrot.slane %v726, %v732
    %734 = vrot.lane.b32.xlu0 %v733, 96
    %v735 = vpop.permute.xlu0 %734
    %vm737 = vcmask 253952
    %738 = vst.msk [vmem:[#allocation3] sm:$0x1] %vm737, %v735
    %v739 = vpack.c.bf16 %v717, %v717
    %s740 = scalar_lea.vmem [#allocation4], 7
    %741 = vst.msk [vmem:[%s740] sm:$0x1] %vm737, %v739
    %742 = vrot.lane.b32.xlu0 %v718, 96
    %v743 = vpop.permute.xlu0 %742
    %v745 = vsel %vm153, %v743, 0
    %747 = vmatprep.subr.bf16.mxu0 0
    %748 = vmatpush1.bf16.msra.mxu0 0
    %749 = vmatprep.subr.bf16.mxu0 0
    %750 = vmatpush1.bf16.msra.mxu0 0
    %751 = vmatprep.subr.bf16.mxu0 0
    %752 = vmatpush1.bf16.msra.mxu0 0
    %753 = vmatprep.subr.bf16.mxu0 0
    %754 = vmatpush1.bf16.msra.mxu0 0
    %755 = vmatprep.subr.bf16.mxu0 0
    %756 = vmatpush1.bf16.msra.mxu0 0
    %757 = vmatprep.subr.bf16.mxu0 0
    %758 = vmatpush1.bf16.msra.mxu0 0
    %759 = vmatprep.subr.bf16.mxu0 0
    %760 = vmatpush1.bf16.msra.mxu0 %v510
    %761 = vmatprep.subr.bf16.mxu0 0
    %762 = vmatpush1.bf16.msra.mxu0 %v509
    %763 = vmatprep.subr.bf16.mxu0 0
    %764 = vmatpush2.bf16.msra.mxu0 0
    %765 = vmatprep.subr.bf16.mxu0 0
    %766 = vmatpush2.bf16.msra.mxu0 0
    %767 = vmatprep.subr.bf16.mxu0 0
    %768 = vmatpush2.bf16.msra.mxu0 0
    %769 = vmatprep.subr.bf16.mxu0 0
    %770 = vmatpush2.bf16.msra.mxu0 0
    %771 = vmatprep.subr.bf16.mxu0 0
    %772 = vmatpush2.bf16.msra.mxu0 0
    %773 = vmatprep.subr.bf16.mxu0 0
    %774 = vmatpush2.bf16.msra.mxu0 0
    %775 = vmatprep.subr.bf16.mxu0 0
    %776 = vmatpush2.bf16.msra.mxu0 0
    %777 = vmatprep.subr.bf16.mxu0 0
    %778 = vmatpush2.bf16.msra.mxu0 0
    %779 = vmatprep.mubr.bf16.mxu0 0
    %780 = vmatmul.mubr.bf16.gmra.mxu0 %v745
    %v781 = vpop.f32.mrf.mxu0
    %v782 = vadd.f32 0.0, %v781
    %v783 = vpop.f32.mrf.mxu0
    %v784 = vpop.f32.mrf.mxu0
    %v785 = vpop.f32.mrf.mxu0
    %786 = vdwg.mxu0
    %v788 = vsel %vm153, %v739, 0
    %790 = vmatprep.subr.bf16.mxu0 0
    %791 = vmatpush1.bf16.msra.mxu0 0
    %792 = vmatprep.subr.bf16.mxu0 0
    %793 = vmatpush1.bf16.msra.mxu0 0
    %794 = vmatprep.subr.bf16.mxu0 0
    %795 = vmatpush1.bf16.msra.mxu0 0
    %796 = vmatprep.subr.bf16.mxu0 0
    %797 = vmatpush1.bf16.msra.mxu0 0
    %798 = vmatprep.subr.bf16.mxu0 0
    %799 = vmatpush1.bf16.msra.mxu0 0
    %800 = vmatprep.subr.bf16.mxu0 0
    %801 = vmatpush1.bf16.msra.mxu0 0
    %802 = vmatprep.subr.bf16.mxu0 0
    %803 = vmatpush1.bf16.msra.mxu0 %v565
    %804 = vmatprep.subr.bf16.mxu0 0
    %805 = vmatpush1.bf16.msra.mxu0 %v564
    %806 = vmatprep.subr.bf16.mxu0 0
    %807 = vmatpush2.bf16.msra.mxu0 0
    %808 = vmatprep.subr.bf16.mxu0 0
    %809 = vmatpush2.bf16.msra.mxu0 0
    %810 = vmatprep.subr.bf16.mxu0 0
    %811 = vmatpush2.bf16.msra.mxu0 0
    %812 = vmatprep.subr.bf16.mxu0 0
    %813 = vmatpush2.bf16.msra.mxu0 0
    %814 = vmatprep.subr.bf16.mxu0 0
    %815 = vmatpush2.bf16.msra.mxu0 0
    %816 = vmatprep.subr.bf16.mxu0 0
    %817 = vmatpush2.bf16.msra.mxu0 0
    %818 = vmatprep.subr.bf16.mxu0 0
    %819 = vmatpush2.bf16.msra.mxu0 0
    %820 = vmatprep.subr.bf16.mxu0 0
    %821 = vmatpush2.bf16.msra.mxu0 0
    %822 = vmatprep.mubr.bf16.mxu0 0
    %823 = vmatmul.mubr.bf16.gmra.mxu0 %v788
    %v824 = vpop.f32.mrf.mxu0
    %v825 = vadd.f32 0.0, %v824
    %v826 = vpop.f32.mrf.mxu0
    %v827 = vpop.f32.mrf.mxu0
    %v828 = vpop.f32.mrf.mxu0
    %829 = vdwg.mxu0
    %s830 = scalar_lea.vmem [#allocation2], 2
    %v831 = vld [vmem:[%s830] sm:$0x3]
    %s832 = scalar_lea.vmem [#allocation2], 12
    %v833 = vld [vmem:[%s832] sm:$0x3]
    %v834 = vunpack.c.l.bf16 %v831
    %v835 = vunpack.c.l.bf16 %v833
    %v836 = vadd.f32 %v834, %v782
    %v837 = vxor.u32 %v836, 2147483648
    %v838 = vmul.f32 %v837, 1.442695
    %v839 = vpow.pop %v838
    %v840 = vadd.f32 %v839, 1.0
    %v841 = vrcp.pop %v840
    %v842 = vmul.f32 1.0, %v841
    %v843 = vadd.f32 %v782, %v626
    %v846 = vunpack.c.l.s4 1983009808
    %v847 = vunpack.c.0.s8 %v846
    %v848 = vlaneseq
    %v849 = vshrl.u32 %v848, 7
    %v850 = vsub.s32 %v847, %v849
    %v851 = vrot.slane %v843, %v850
    %852 = vrot.lane.b32.xlu0 %v851, 64
    %v853 = vpop.permute.xlu0 %852
    %v855 = vmul.f32 %v842, %v853
    %857 = vrot.lane.b32.xlu0 %v855, 64
    %v858 = vpop.permute.xlu0 %857
    %v860 = vadd.f32 %v834, %v858
    %v861 = vtanh.pop %v860
    %v862 = vsub.f32 1.0, %v842
    %864 = vrot.lane.b32.xlu0 %v861, 96
    %v865 = vpop.permute.xlu0 %864
    %v867 = vmul.f32 %v862, %v865
    %v868 = vmul.f32 %v842, %v654
    %v869 = vadd.f32 %v867, %v868
    %v872 = vunpack.c.l.s4 1983009808
    %v873 = vunpack.c.0.s8 %v872
    %v874 = vlaneseq
    %v875 = vshrl.u32 %v874, 7
    %v876 = vsub.s32 %v873, %v875
    %v877 = vrot.slane %v825, %v876
    %878 = vrot.lane.b32.xlu0 %v877, 96
    %v879 = vpop.permute.xlu0 %878
    %v881 = vadd.f32 %v835, %v879
    %v882 = vxor.u32 %v881, 2147483648
    %v883 = vmul.f32 %v882, 1.442695
    %v884 = vpow.pop %v883
    %v885 = vadd.f32 %v884, 1.0
    %v886 = vrcp.pop %v885
    %v887 = vmul.f32 1.0, %v886
    %v889 = vrot.slane %v835, 2
    %v891 = vadd.f32 %v889, %v879
    %v892 = vxor.u32 %v891, 2147483648
    %v893 = vmul.f32 %v892, 1.442695
    %v894 = vpow.pop %v893
    %v895 = vadd.f32 %v894, 1.0
    %v896 = vrcp.pop %v895
    %v897 = vmul.f32 1.0, %v896
    %v898 = vadd.f32 %v825, %v689
    %v901 = vunpack.c.l.s4 1983009808
    %v902 = vunpack.c.0.s8 %v901
    %v903 = vlaneseq
    %v904 = vshrl.u32 %v903, 7
    %v905 = vsub.s32 %v902, %v904
    %v906 = vrot.slane %v898, %v905
    %907 = vrot.lane.b32.xlu0 %v906, 32
    %v908 = vpop.permute.xlu0 %907
    %v910 = vmul.f32 %v887, %v908
    %911 = vrot.lane.b32.xlu0 %v835, 96
    %v912 = vpop.permute.xlu0 %911
    %v913 = vrot.slane %v912, 2
    %916 = vrot.lane.b32.xlu0 %v910, 32
    %v917 = vpop.permute.xlu0 %916
    %v919 = vadd.f32 %v913, %v917
    %v920 = vtanh.pop %v919
    %v921 = vsub.f32 1.0, %v897
    %v922 = vmul.f32 %v921, %v920
    %v923 = vmul.f32 %v897, %v717
    %v924 = vadd.f32 %v922, %v923
    %v925 = vpack.c.bf16 %v869, %v869
    %v928 = vunpack.c.l.s4 1966171168
    %v929 = vunpack.c.0.s8 %v928
    %v930 = vlaneseq
    %v931 = vshrl.u32 %v930, 7
    %v932 = vsub.s32 %v929, %v931
    %v933 = vrot.slane %v925, %v932
    %v935 = vunpack.c.l.s4 1966171168
    %v936 = vunpack.c.0.s8 %v935
    %v937 = vlaneseq
    %v938 = vshrl.u32 %v937, 7
    %v939 = vsub.s32 %v936, %v938
    %v940 = vrot.slane %v933, %v939
    %941 = vrot.lane.b32.xlu0 %v940, 96
    %v942 = vpop.permute.xlu0 %941
    %s944 = scalar_lea.vmem [#allocation3], 1
    %945 = vst.msk [vmem:[%s944] sm:$0x1] %vm737, %v942
    %v946 = vpack.c.bf16 %v924, %v924
    %s947 = scalar_lea.vmem [#allocation4], 6
    %948 = vst.msk [vmem:[%s947] sm:$0x1] %vm737, %v946
    %949 = vrot.lane.b32.xlu0 %v925, 96
    %v950 = vpop.permute.xlu0 %949
    %v952 = vsel %vm153, %v950, 0
    %954 = vmatprep.subr.bf16.mxu0 0
    %955 = vmatpush1.bf16.msra.mxu0 0
    %956 = vmatprep.subr.bf16.mxu0 0
    %957 = vmatpush1.bf16.msra.mxu0 0
    %958 = vmatprep.subr.bf16.mxu0 0
    %959 = vmatpush1.bf16.msra.mxu0 0
    %960 = vmatprep.subr.bf16.mxu0 0
    %961 = vmatpush1.bf16.msra.mxu0 0
    %962 = vmatprep.subr.bf16.mxu0 0
    %963 = vmatpush1.bf16.msra.mxu0 0
    %964 = vmatprep.subr.bf16.mxu0 0
    %965 = vmatpush1.bf16.msra.mxu0 0
    %966 = vmatprep.subr.bf16.mxu0 0
    %967 = vmatpush1.bf16.msra.mxu0 %v510
    %968 = vmatprep.subr.bf16.mxu0 0
    %969 = vmatpush1.bf16.msra.mxu0 %v509
    %970 = vmatprep.subr.bf16.mxu0 0
    %971 = vmatpush2.bf16.msra.mxu0 0
    %972 = vmatprep.subr.bf16.mxu0 0
    %973 = vmatpush2.bf16.msra.mxu0 0
    %974 = vmatprep.subr.bf16.mxu0 0
    %975 = vmatpush2.bf16.msra.mxu0 0
    %976 = vmatprep.subr.bf16.mxu0 0
    %977 = vmatpush2.bf16.msra.mxu0 0
    %978 = vmatprep.subr.bf16.mxu0 0
    %979 = vmatpush2.bf16.msra.mxu0 0
    %980 = vmatprep.subr.bf16.mxu0 0
    %981 = vmatpush2.bf16.msra.mxu0 0
    %982 = vmatprep.subr.bf16.mxu0 0
    %983 = vmatpush2.bf16.msra.mxu0 0
    %984 = vmatprep.subr.bf16.mxu0 0
    %985 = vmatpush2.bf16.msra.mxu0 0
    %986 = vmatprep.mubr.bf16.mxu0 0
    %987 = vmatmul.mubr.bf16.gmra.mxu0 %v952
    %v988 = vpop.f32.mrf.mxu0
    %v989 = vadd.f32 0.0, %v988
    %v990 = vpop.f32.mrf.mxu0
    %v991 = vpop.f32.mrf.mxu0
    %v992 = vpop.f32.mrf.mxu0
    %993 = vdwg.mxu0
    %v995 = vsel %vm153, %v946, 0
    %997 = vmatprep.subr.bf16.mxu0 0
    %998 = vmatpush1.bf16.msra.mxu0 0
    %999 = vmatprep.subr.bf16.mxu0 0
    %1000 = vmatpush1.bf16.msra.mxu0 0
    %1001 = vmatprep.subr.bf16.mxu0 0
    %1002 = vmatpush1.bf16.msra.mxu0 0
    %1003 = vmatprep.subr.bf16.mxu0 0
    %1004 = vmatpush1.bf16.msra.mxu0 0
    %1005 = vmatprep.subr.bf16.mxu0 0
    %1006 = vmatpush1.bf16.msra.mxu0 0
    %1007 = vmatprep.subr.bf16.mxu0 0
    %1008 = vmatpush1.bf16.msra.mxu0 0
    %1009 = vmatprep.subr.bf16.mxu0 0
    %1010 = vmatpush1.bf16.msra.mxu0 %v565
    %1011 = vmatprep.subr.bf16.mxu0 0
    %1012 = vmatpush1.bf16.msra.mxu0 %v564
    %1013 = vmatprep.subr.bf16.mxu0 0
    %1014 = vmatpush2.bf16.msra.mxu0 0
    %1015 = vmatprep.subr.bf16.mxu0 0
    %1016 = vmatpush2.bf16.msra.mxu0 0
    %1017 = vmatprep.subr.bf16.mxu0 0
    %1018 = vmatpush2.bf16.msra.mxu0 0
    %1019 = vmatprep.subr.bf16.mxu0 0
    %1020 = vmatpush2.bf16.msra.mxu0 0
    %1021 = vmatprep.subr.bf16.mxu0 0
    %1022 = vmatpush2.bf16.msra.mxu0 0
    %1023 = vmatprep.subr.bf16.mxu0 0
    %1024 = vmatpush2.bf16.msra.mxu0 0
    %1025 = vmatprep.subr.bf16.mxu0 0
    %1026 = vmatpush2.bf16.msra.mxu0 0
    %1027 = vmatprep.subr.bf16.mxu0 0
    %1028 = vmatpush2.bf16.msra.mxu0 0
    %1029 = vmatprep.mubr.bf16.mxu0 0
    %1030 = vmatmul.mubr.bf16.gmra.mxu0 %v995
    %v1031 = vpop.f32.mrf.mxu0
    %v1032 = vadd.f32 0.0, %v1031
    %v1033 = vpop.f32.mrf.mxu0
    %v1034 = vpop.f32.mrf.mxu0
    %v1035 = vpop.f32.mrf.mxu0
    %1036 = vdwg.mxu0
    %s1037 = scalar_lea.vmem [#allocation2], 4
    %v1038 = vld [vmem:[%s1037] sm:$0x3]
    %s1039 = scalar_lea.vmem [#allocation2], 10
    %v1040 = vld [vmem:[%s1039] sm:$0x3]
    %v1041 = vunpack.c.l.bf16 %v1038
    %v1042 = vunpack.c.l.bf16 %v1040
    %v1043 = vadd.f32 %v1041, %v989
    %v1044 = vxor.u32 %v1043, 2147483648
    %v1045 = vmul.f32 %v1044, 1.442695
    %v1046 = vpow.pop %v1045
    %v1047 = vadd.f32 %v1046, 1.0
    %v1048 = vrcp.pop %v1047
    %v1049 = vmul.f32 1.0, %v1048
    %v1050 = vadd.f32 %v989, %v626
    %v1053 = vunpack.c.l.s4 1983009808
    %v1054 = vunpack.c.0.s8 %v1053
    %v1055 = vlaneseq
    %v1056 = vshrl.u32 %v1055, 7
    %v1057 = vsub.s32 %v1054, %v1056
    %v1058 = vrot.slane %v1050, %v1057
    %1059 = vrot.lane.b32.xlu0 %v1058, 64
    %v1060 = vpop.permute.xlu0 %1059
    %v1062 = vmul.f32 %v1049, %v1060
    %1064 = vrot.lane.b32.xlu0 %v1062, 64
    %v1065 = vpop.permute.xlu0 %1064
    %v1067 = vadd.f32 %v1041, %v1065
    %v1068 = vtanh.pop %v1067
    %v1069 = vsub.f32 1.0, %v1049
    %1071 = vrot.lane.b32.xlu0 %v1068, 96
    %v1072 = vpop.permute.xlu0 %1071
    %v1074 = vmul.f32 %v1069, %v1072
    %v1075 = vmul.f32 %v1049, %v869
    %v1076 = vadd.f32 %v1074, %v1075
    %v1079 = vunpack.c.l.s4 1983009808
    %v1080 = vunpack.c.0.s8 %v1079
    %v1081 = vlaneseq
    %v1082 = vshrl.u32 %v1081, 7
    %v1083 = vsub.s32 %v1080, %v1082
    %v1084 = vrot.slane %v1032, %v1083
    %1085 = vrot.lane.b32.xlu0 %v1084, 96
    %v1086 = vpop.permute.xlu0 %1085
    %v1088 = vadd.f32 %v1042, %v1086
    %v1089 = vxor.u32 %v1088, 2147483648
    %v1090 = vmul.f32 %v1089, 1.442695
    %v1091 = vpow.pop %v1090
    %v1092 = vadd.f32 %v1091, 1.0
    %v1093 = vrcp.pop %v1092
    %v1094 = vmul.f32 1.0, %v1093
    %v1096 = vrot.slane %v1042, 2
    %v1098 = vadd.f32 %v1096, %v1086
    %v1099 = vxor.u32 %v1098, 2147483648
    %v1100 = vmul.f32 %v1099, 1.442695
    %v1101 = vpow.pop %v1100
    %v1102 = vadd.f32 %v1101, 1.0
    %v1103 = vrcp.pop %v1102
    %v1104 = vmul.f32 1.0, %v1103
    %v1105 = vadd.f32 %v1032, %v689
    %v1108 = vunpack.c.l.s4 1983009808
    %v1109 = vunpack.c.0.s8 %v1108
    %v1110 = vlaneseq
    %v1111 = vshrl.u32 %v1110, 7
    %v1112 = vsub.s32 %v1109, %v1111
    %v1113 = vrot.slane %v1105, %v1112
    %1114 = vrot.lane.b32.xlu0 %v1113, 32
    %v1115 = vpop.permute.xlu0 %1114
    %v1117 = vmul.f32 %v1094, %v1115
    %1118 = vrot.lane.b32.xlu0 %v1042, 96
    %v1119 = vpop.permute.xlu0 %1118
    %v1120 = vrot.slane %v1119, 2
    %1123 = vrot.lane.b32.xlu0 %v1117, 32
    %v1124 = vpop.permute.xlu0 %1123
    %v1126 = vadd.f32 %v1120, %v1124
    %v1127 = vtanh.pop %v1126
    %v1128 = vsub.f32 1.0, %v1104
    %v1129 = vmul.f32 %v1128, %v1127
    %v1130 = vmul.f32 %v1104, %v924
    %v1131 = vadd.f32 %v1129, %v1130
    %v1132 = vpack.c.bf16 %v1076, %v1076
    %v1135 = vunpack.c.l.s4 1966171168
    %v1136 = vunpack.c.0.s8 %v1135
    %v1137 = vlaneseq
    %v1138 = vshrl.u32 %v1137, 7
    %v1139 = vsub.s32 %v1136, %v1138
    %v1140 = vrot.slane %v1132, %v1139
    %v1142 = vunpack.c.l.s4 1966171168
    %v1143 = vunpack.c.0.s8 %v1142
    %v1144 = vlaneseq
    %v1145 = vshrl.u32 %v1144, 7
    %v1146 = vsub.s32 %v1143, %v1145
    %v1147 = vrot.slane %v1140, %v1146
    %1148 = vrot.lane.b32.xlu0 %v1147, 96
    %v1149 = vpop.permute.xlu0 %1148
    %s1151 = scalar_lea.vmem [#allocation3], 2
    %1152 = vst.msk [vmem:[%s1151] sm:$0x1] %vm737, %v1149
    %v1153 = vpack.c.bf16 %v1131, %v1131
    %s1154 = scalar_lea.vmem [#allocation4], 5
    %1155 = vst.msk [vmem:[%s1154] sm:$0x1] %vm737, %v1153
    %1156 = vrot.lane.b32.xlu0 %v1132, 96
    %v1157 = vpop.permute.xlu0 %1156
    %v1159 = vsel %vm153, %v1157, 0
    %1161 = vmatprep.subr.bf16.mxu0 0
    %1162 = vmatpush1.bf16.msra.mxu0 0
    %1163 = vmatprep.subr.bf16.mxu0 0
    %1164 = vmatpush1.bf16.msra.mxu0 0
    %1165 = vmatprep.subr.bf16.mxu0 0
    %1166 = vmatpush1.bf16.msra.mxu0 0
    %1167 = vmatprep.subr.bf16.mxu0 0
    %1168 = vmatpush1.bf16.msra.mxu0 0
    %1169 = vmatprep.subr.bf16.mxu0 0
    %1170 = vmatpush1.bf16.msra.mxu0 0
    %1171 = vmatprep.subr.bf16.mxu0 0
    %1172 = vmatpush1.bf16.msra.mxu0 0
    %1173 = vmatprep.subr.bf16.mxu0 0
    %1174 = vmatpush1.bf16.msra.mxu0 %v510
    %1175 = vmatprep.subr.bf16.mxu0 0
    %1176 = vmatpush1.bf16.msra.mxu0 %v509
    %1177 = vmatprep.subr.bf16.mxu0 0
    %1178 = vmatpush2.bf16.msra.mxu0 0
    %1179 = vmatprep.subr.bf16.mxu0 0
    %1180 = vmatpush2.bf16.msra.mxu0 0
    %1181 = vmatprep.subr.bf16.mxu0 0
    %1182 = vmatpush2.bf16.msra.mxu0 0
    %1183 = vmatprep.subr.bf16.mxu0 0
    %1184 = vmatpush2.bf16.msra.mxu0 0
    %1185 = vmatprep.subr.bf16.mxu0 0
    %1186 = vmatpush2.bf16.msra.mxu0 0
    %1187 = vmatprep.subr.bf16.mxu0 0
    %1188 = vmatpush2.bf16.msra.mxu0 0
    %1189 = vmatprep.subr.bf16.mxu0 0
    %1190 = vmatpush2.bf16.msra.mxu0 0
    %1191 = vmatprep.subr.bf16.mxu0 0
    %1192 = vmatpush2.bf16.msra.mxu0 0
    %1193 = vmatprep.mubr.bf16.mxu0 0
    %1194 = vmatmul.mubr.bf16.gmra.mxu0 %v1159
    %v1195 = vpop.f32.mrf.mxu0
    %v1196 = vadd.f32 0.0, %v1195
    %v1197 = vpop.f32.mrf.mxu0
    %v1198 = vpop.f32.mrf.mxu0
    %v1199 = vpop.f32.mrf.mxu0
    %1200 = vdwg.mxu0
    %v1202 = vsel %vm153, %v1153, 0
    %1204 = vmatprep.subr.bf16.mxu0 0
    %1205 = vmatpush1.bf16.msra.mxu0 0
    %1206 = vmatprep.subr.bf16.mxu0 0
    %1207 = vmatpush1.bf16.msra.mxu0 0
    %1208 = vmatprep.subr.bf16.mxu0 0
    %1209 = vmatpush1.bf16.msra.mxu0 0
    %1210 = vmatprep.subr.bf16.mxu0 0
    %1211 = vmatpush1.bf16.msra.mxu0 0
    %1212 = vmatprep.subr.bf16.mxu0 0
    %1213 = vmatpush1.bf16.msra.mxu0 0
    %1214 = vmatprep.subr.bf16.mxu0 0
    %1215 = vmatpush1.bf16.msra.mxu0 0
    %1216 = vmatprep.subr.bf16.mxu0 0
    %1217 = vmatpush1.bf16.msra.mxu0 %v565
    %1218 = vmatprep.subr.bf16.mxu0 0
    %1219 = vmatpush1.bf16.msra.mxu0 %v564
    %1220 = vmatprep.subr.bf16.mxu0 0
    %1221 = vmatpush2.bf16.msra.mxu0 0
    %1222 = vmatprep.subr.bf16.mxu0 0
    %1223 = vmatpush2.bf16.msra.mxu0 0
    %1224 = vmatprep.subr.bf16.mxu0 0
    %1225 = vmatpush2.bf16.msra.mxu0 0
    %1226 = vmatprep.subr.bf16.mxu0 0
    %1227 = vmatpush2.bf16.msra.mxu0 0
    %1228 = vmatprep.subr.bf16.mxu0 0
    %1229 = vmatpush2.bf16.msra.mxu0 0
    %1230 = vmatprep.subr.bf16.mxu0 0
    %1231 = vmatpush2.bf16.msra.mxu0 0
    %1232 = vmatprep.subr.bf16.mxu0 0
    %1233 = vmatpush2.bf16.msra.mxu0 0
    %1234 = vmatprep.subr.bf16.mxu0 0
    %1235 = vmatpush2.bf16.msra.mxu0 0
    %1236 = vmatprep.mubr.bf16.mxu0 0
    %1237 = vmatmul.mubr.bf16.gmra.mxu0 %v1202
    %v1238 = vpop.f32.mrf.mxu0
    %v1239 = vadd.f32 0.0, %v1238
    %v1240 = vpop.f32.mrf.mxu0
    %v1241 = vpop.f32.mrf.mxu0
    %v1242 = vpop.f32.mrf.mxu0
    %1243 = vdwg.mxu0
    %s1244 = scalar_lea.vmem [#allocation2], 6
    %v1245 = vld [vmem:[%s1244] sm:$0x3]
    %s1246 = scalar_lea.vmem [#allocation2], 8
    %v1247 = vld [vmem:[%s1246] sm:$0x3]
    %v1248 = vunpack.c.l.bf16 %v1245
    %v1249 = vunpack.c.l.bf16 %v1247
    %v1250 = vadd.f32 %v1248, %v1196
    %v1251 = vxor.u32 %v1250, 2147483648
    %v1252 = vmul.f32 %v1251, 1.442695
    %v1253 = vpow.pop %v1252
    %v1254 = vadd.f32 %v1253, 1.0
    %v1255 = vrcp.pop %v1254
    %v1256 = vmul.f32 1.0, %v1255
    %v1257 = vadd.f32 %v1196, %v626
    %v1260 = vunpack.c.l.s4 1983009808
    %v1261 = vunpack.c.0.s8 %v1260
    %v1262 = vlaneseq
    %v1263 = vshrl.u32 %v1262, 7
    %v1264 = vsub.s32 %v1261, %v1263
    %v1265 = vrot.slane %v1257, %v1264
    %1266 = vrot.lane.b32.xlu0 %v1265, 64
    %v1267 = vpop.permute.xlu0 %1266
    %v1269 = vmul.f32 %v1256, %v1267
    %1271 = vrot.lane.b32.xlu0 %v1269, 64
    %v1272 = vpop.permute.xlu0 %1271
    %v1274 = vadd.f32 %v1248, %v1272
    %v1275 = vtanh.pop %v1274
    %v1276 = vsub.f32 1.0, %v1256
    %1278 = vrot.lane.b32.xlu0 %v1275, 96
    %v1279 = vpop.permute.xlu0 %1278
    %v1281 = vmul.f32 %v1276, %v1279
    %v1282 = vmul.f32 %v1256, %v1076
    %v1283 = vadd.f32 %v1281, %v1282
    %v1286 = vunpack.c.l.s4 1983009808
    %v1287 = vunpack.c.0.s8 %v1286
    %v1288 = vlaneseq
    %v1289 = vshrl.u32 %v1288, 7
    %v1290 = vsub.s32 %v1287, %v1289
    %v1291 = vrot.slane %v1239, %v1290
    %1292 = vrot.lane.b32.xlu0 %v1291, 96
    %v1293 = vpop.permute.xlu0 %1292
    %v1295 = vadd.f32 %v1249, %v1293
    %v1296 = vxor.u32 %v1295, 2147483648
    %v1297 = vmul.f32 %v1296, 1.442695
    %v1298 = vpow.pop %v1297
    %v1299 = vadd.f32 %v1298, 1.0
    %v1300 = vrcp.pop %v1299
    %v1301 = vmul.f32 1.0, %v1300
    %v1303 = vrot.slane %v1249, 2
    %v1305 = vadd.f32 %v1303, %v1293
    %v1306 = vxor.u32 %v1305, 2147483648
    %v1307 = vmul.f32 %v1306, 1.442695
    %v1308 = vpow.pop %v1307
    %v1309 = vadd.f32 %v1308, 1.0
    %v1310 = vrcp.pop %v1309
    %v1311 = vmul.f32 1.0, %v1310
    %v1312 = vadd.f32 %v1239, %v689
    %v1315 = vunpack.c.l.s4 1983009808
    %v1316 = vunpack.c.0.s8 %v1315
    %v1317 = vlaneseq
    %v1318 = vshrl.u32 %v1317, 7
    %v1319 = vsub.s32 %v1316, %v1318
    %v1320 = vrot.slane %v1312, %v1319
    %1321 = vrot.lane.b32.xlu0 %v1320, 32
    %v1322 = vpop.permute.xlu0 %1321
    %v1324 = vmul.f32 %v1301, %v1322
    %1325 = vrot.lane.b32.xlu0 %v1249, 96
    %v1326 = vpop.permute.xlu0 %1325
    %v1327 = vrot.slane %v1326, 2
    %1330 = vrot.lane.b32.xlu0 %v1324, 32
    %v1331 = vpop.permute.xlu0 %1330
    %v1333 = vadd.f32 %v1327, %v1331
    %v1334 = vtanh.pop %v1333
    %v1335 = vsub.f32 1.0, %v1311
    %v1336 = vmul.f32 %v1335, %v1334
    %v1337 = vmul.f32 %v1311, %v1131
    %v1338 = vadd.f32 %v1336, %v1337
    %v1339 = vpack.c.bf16 %v1283, %v1283
    %v1342 = vunpack.c.l.s4 1966171168
    %v1343 = vunpack.c.0.s8 %v1342
    %v1344 = vlaneseq
    %v1345 = vshrl.u32 %v1344, 7
    %v1346 = vsub.s32 %v1343, %v1345
    %v1347 = vrot.slane %v1339, %v1346
    %v1349 = vunpack.c.l.s4 1966171168
    %v1350 = vunpack.c.0.s8 %v1349
    %v1351 = vlaneseq
    %v1352 = vshrl.u32 %v1351, 7
    %v1353 = vsub.s32 %v1350, %v1352
    %v1354 = vrot.slane %v1347, %v1353
    %1355 = vrot.lane.b32.xlu0 %v1354, 96
    %v1356 = vpop.permute.xlu0 %1355
    %s1358 = scalar_lea.vmem [#allocation3], 3
    %1359 = vst.msk [vmem:[%s1358] sm:$0x1] %vm737, %v1356
    %v1360 = vpack.c.bf16 %v1338, %v1338
    %s1361 = scalar_lea.vmem [#allocation4], 4
    %1362 = vst.msk [vmem:[%s1361] sm:$0x1] %vm737, %v1360
    %1363 = vrot.lane.b32.xlu0 %v1339, 96
    %v1364 = vpop.permute.xlu0 %1363
    %v1366 = vsel %vm153, %v1364, 0
    %1368 = vmatprep.subr.bf16.mxu0 0
    %1369 = vmatpush1.bf16.msra.mxu0 0
    %1370 = vmatprep.subr.bf16.mxu0 0
    %1371 = vmatpush1.bf16.msra.mxu0 0
    %1372 = vmatprep.subr.bf16.mxu0 0
    %1373 = vmatpush1.bf16.msra.mxu0 0
    %1374 = vmatprep.subr.bf16.mxu0 0
    %1375 = vmatpush1.bf16.msra.mxu0 0
    %1376 = vmatprep.subr.bf16.mxu0 0
    %1377 = vmatpush1.bf16.msra.mxu0 0
    %1378 = vmatprep.subr.bf16.mxu0 0
    %1379 = vmatpush1.bf16.msra.mxu0 0
    %1380 = vmatprep.subr.bf16.mxu0 0
    %1381 = vmatpush1.bf16.msra.mxu0 %v510
    %1382 = vmatprep.subr.bf16.mxu0 0
    %1383 = vmatpush1.bf16.msra.mxu0 %v509
    %1384 = vmatprep.subr.bf16.mxu0 0
    %1385 = vmatpush2.bf16.msra.mxu0 0
    %1386 = vmatprep.subr.bf16.mxu0 0
    %1387 = vmatpush2.bf16.msra.mxu0 0
    %1388 = vmatprep.subr.bf16.mxu0 0
    %1389 = vmatpush2.bf16.msra.mxu0 0
    %1390 = vmatprep.subr.bf16.mxu0 0
    %1391 = vmatpush2.bf16.msra.mxu0 0
    %1392 = vmatprep.subr.bf16.mxu0 0
    %1393 = vmatpush2.bf16.msra.mxu0 0
    %1394 = vmatprep.subr.bf16.mxu0 0
    %1395 = vmatpush2.bf16.msra.mxu0 0
    %1396 = vmatprep.subr.bf16.mxu0 0
    %1397 = vmatpush2.bf16.msra.mxu0 0
    %1398 = vmatprep.subr.bf16.mxu0 0
    %1399 = vmatpush2.bf16.msra.mxu0 0
    %1400 = vmatprep.mubr.bf16.mxu0 0
    %1401 = vmatmul.mubr.bf16.gmra.mxu0 %v1366
    %v1402 = vpop.f32.mrf.mxu0
    %v1403 = vadd.f32 0.0, %v1402
    %v1404 = vpop.f32.mrf.mxu0
    %v1405 = vpop.f32.mrf.mxu0
    %v1406 = vpop.f32.mrf.mxu0
    %1407 = vdwg.mxu0
    %v1409 = vsel %vm153, %v1360, 0
    %1411 = vmatprep.subr.bf16.mxu0 0
    %1412 = vmatpush1.bf16.msra.mxu0 0
    %1413 = vmatprep.subr.bf16.mxu0 0
    %1414 = vmatpush1.bf16.msra.mxu0 0
    %1415 = vmatprep.subr.bf16.mxu0 0
    %1416 = vmatpush1.bf16.msra.mxu0 0
    %1417 = vmatprep.subr.bf16.mxu0 0
    %1418 = vmatpush1.bf16.msra.mxu0 0
    %1419 = vmatprep.subr.bf16.mxu0 0
    %1420 = vmatpush1.bf16.msra.mxu0 0
    %1421 = vmatprep.subr.bf16.mxu0 0
    %1422 = vmatpush1.bf16.msra.mxu0 0
    %1423 = vmatprep.subr.bf16.mxu0 0
    %1424 = vmatpush1.bf16.msra.mxu0 %v565
    %1425 = vmatprep.subr.bf16.mxu0 0
    %1426 = vmatpush1.bf16.msra.mxu0 %v564
    %1427 = vmatprep.subr.bf16.mxu0 0
    %1428 = vmatpush2.bf16.msra.mxu0 0
    %1429 = vmatprep.subr.bf16.mxu0 0
    %1430 = vmatpush2.bf16.msra.mxu0 0
    %1431 = vmatprep.subr.bf16.mxu0 0
    %1432 = vmatpush2.bf16.msra.mxu0 0
    %1433 = vmatprep.subr.bf16.mxu0 0
    %1434 = vmatpush2.bf16.msra.mxu0 0
    %1435 = vmatprep.subr.bf16.mxu0 0
    %1436 = vmatpush2.bf16.msra.mxu0 0
    %1437 = vmatprep.subr.bf16.mxu0 0
    %1438 = vmatpush2.bf16.msra.mxu0 0
    %1439 = vmatprep.subr.bf16.mxu0 0
    %1440 = vmatpush2.bf16.msra.mxu0 0
    %1441 = vmatprep.subr.bf16.mxu0 0
    %1442 = vmatpush2.bf16.msra.mxu0 0
    %1443 = vmatprep.mubr.bf16.mxu0 0
    %1444 = vmatmul.mubr.bf16.gmra.mxu0 %v1409
    %v1445 = vpop.f32.mrf.mxu0
    %v1446 = vadd.f32 0.0, %v1445
    %v1447 = vpop.f32.mrf.mxu0
    %v1448 = vpop.f32.mrf.mxu0
    %v1449 = vpop.f32.mrf.mxu0
    %1450 = vdwg.mxu0
    %v1451 = vld [vmem:[%s1246] sm:$0x3]
    %v1452 = vld [vmem:[%s1244] sm:$0x3]
    %v1453 = vunpack.c.l.bf16 %v1451
    %v1454 = vunpack.c.l.bf16 %v1452
    %v1455 = vadd.f32 %v1453, %v1403
    %v1456 = vxor.u32 %v1455, 2147483648
    %v1457 = vmul.f32 %v1456, 1.442695
    %v1458 = vpow.pop %v1457
    %v1459 = vadd.f32 %v1458, 1.0
    %v1460 = vrcp.pop %v1459
    %v1461 = vmul.f32 1.0, %v1460
    %v1462 = vadd.f32 %v1403, %v626
    %v1465 = vunpack.c.l.s4 1983009808
    %v1466 = vunpack.c.0.s8 %v1465
    %v1467 = vlaneseq
    %v1468 = vshrl.u32 %v1467, 7
    %v1469 = vsub.s32 %v1466, %v1468
    %v1470 = vrot.slane %v1462, %v1469
    %1471 = vrot.lane.b32.xlu0 %v1470, 64
    %v1472 = vpop.permute.xlu0 %1471
    %v1474 = vmul.f32 %v1461, %v1472
    %1476 = vrot.lane.b32.xlu0 %v1474, 64
    %v1477 = vpop.permute.xlu0 %1476
    %v1479 = vadd.f32 %v1453, %v1477
    %v1480 = vtanh.pop %v1479
    %v1481 = vsub.f32 1.0, %v1461
    %1483 = vrot.lane.b32.xlu0 %v1480, 96
    %v1484 = vpop.permute.xlu0 %1483
    %v1486 = vmul.f32 %v1481, %v1484
    %v1487 = vmul.f32 %v1461, %v1283
    %v1488 = vadd.f32 %v1486, %v1487
    %v1491 = vunpack.c.l.s4 1983009808
    %v1492 = vunpack.c.0.s8 %v1491
    %v1493 = vlaneseq
    %v1494 = vshrl.u32 %v1493, 7
    %v1495 = vsub.s32 %v1492, %v1494
    %v1496 = vrot.slane %v1446, %v1495
    %1497 = vrot.lane.b32.xlu0 %v1496, 96
    %v1498 = vpop.permute.xlu0 %1497
    %v1500 = vadd.f32 %v1454, %v1498
    %v1501 = vxor.u32 %v1500, 2147483648
    %v1502 = vmul.f32 %v1501, 1.442695
    %v1503 = vpow.pop %v1502
    %v1504 = vadd.f32 %v1503, 1.0
    %v1505 = vrcp.pop %v1504
    %v1506 = vmul.f32 1.0, %v1505
    %v1508 = vrot.slane %v1454, 2
    %v1510 = vadd.f32 %v1508, %v1498
    %v1511 = vxor.u32 %v1510, 2147483648
    %v1512 = vmul.f32 %v1511, 1.442695
    %v1513 = vpow.pop %v1512
    %v1514 = vadd.f32 %v1513, 1.0
    %v1515 = vrcp.pop %v1514
    %v1516 = vmul.f32 1.0, %v1515
    %v1517 = vadd.f32 %v1446, %v689
    %v1520 = vunpack.c.l.s4 1983009808
    %v1521 = vunpack.c.0.s8 %v1520
    %v1522 = vlaneseq
    %v1523 = vshrl.u32 %v1522, 7
    %v1524 = vsub.s32 %v1521, %v1523
    %v1525 = vrot.slane %v1517, %v1524
    %1526 = vrot.lane.b32.xlu0 %v1525, 32
    %v1527 = vpop.permute.xlu0 %1526
    %v1529 = vmul.f32 %v1506, %v1527
    %1530 = vrot.lane.b32.xlu0 %v1454, 96
    %v1531 = vpop.permute.xlu0 %1530
    %v1532 = vrot.slane %v1531, 2
    %1535 = vrot.lane.b32.xlu0 %v1529, 32
    %v1536 = vpop.permute.xlu0 %1535
    %v1538 = vadd.f32 %v1532, %v1536
    %v1539 = vtanh.pop %v1538
    %v1540 = vsub.f32 1.0, %v1516
    %v1541 = vmul.f32 %v1540, %v1539
    %v1542 = vmul.f32 %v1516, %v1338
    %v1543 = vadd.f32 %v1541, %v1542
    %v1544 = vpack.c.bf16 %v1488, %v1488
    %v1547 = vunpack.c.l.s4 1966171168
    %v1548 = vunpack.c.0.s8 %v1547
    %v1549 = vlaneseq
    %v1550 = vshrl.u32 %v1549, 7
    %v1551 = vsub.s32 %v1548, %v1550
    %v1552 = vrot.slane %v1544, %v1551
    %v1554 = vunpack.c.l.s4 1966171168
    %v1555 = vunpack.c.0.s8 %v1554
    %v1556 = vlaneseq
    %v1557 = vshrl.u32 %v1556, 7
    %v1558 = vsub.s32 %v1555, %v1557
    %v1559 = vrot.slane %v1552, %v1558
    %1560 = vrot.lane.b32.xlu0 %v1559, 96
    %v1561 = vpop.permute.xlu0 %1560
    %s1563 = scalar_lea.vmem [#allocation3], 4
    %1564 = vst.msk [vmem:[%s1563] sm:$0x1] %vm737, %v1561
    %v1565 = vpack.c.bf16 %v1543, %v1543
    %s1566 = scalar_lea.vmem [#allocation4], 3
    %1567 = vst.msk [vmem:[%s1566] sm:$0x1] %vm737, %v1565
    %1568 = vrot.lane.b32.xlu0 %v1544, 96
    %v1569 = vpop.permute.xlu0 %1568
    %v1571 = vsel %vm153, %v1569, 0
    %1573 = vmatprep.subr.bf16.mxu0 0
    %1574 = vmatpush1.bf16.msra.mxu0 0
    %1575 = vmatprep.subr.bf16.mxu0 0
    %1576 = vmatpush1.bf16.msra.mxu0 0
    %1577 = vmatprep.subr.bf16.mxu0 0
    %1578 = vmatpush1.bf16.msra.mxu0 0
    %1579 = vmatprep.subr.bf16.mxu0 0
    %1580 = vmatpush1.bf16.msra.mxu0 0
    %1581 = vmatprep.subr.bf16.mxu0 0
    %1582 = vmatpush1.bf16.msra.mxu0 0
    %1583 = vmatprep.subr.bf16.mxu0 0
    %1584 = vmatpush1.bf16.msra.mxu0 0
    %1585 = vmatprep.subr.bf16.mxu0 0
    %1586 = vmatpush1.bf16.msra.mxu0 %v510
    %1587 = vmatprep.subr.bf16.mxu0 0
    %1588 = vmatpush1.bf16.msra.mxu0 %v509
    %1589 = vmatprep.subr.bf16.mxu0 0
    %1590 = vmatpush2.bf16.msra.mxu0 0
    %1591 = vmatprep.subr.bf16.mxu0 0
    %1592 = vmatpush2.bf16.msra.mxu0 0
    %1593 = vmatprep.subr.bf16.mxu0 0
    %1594 = vmatpush2.bf16.msra.mxu0 0
    %1595 = vmatprep.subr.bf16.mxu0 0
    %1596 = vmatpush2.bf16.msra.mxu0 0
    %1597 = vmatprep.subr.bf16.mxu0 0
    %1598 = vmatpush2.bf16.msra.mxu0 0
    %1599 = vmatprep.subr.bf16.mxu0 0
    %1600 = vmatpush2.bf16.msra.mxu0 0
    %1601 = vmatprep.subr.bf16.mxu0 0
    %1602 = vmatpush2.bf16.msra.mxu0 0
    %1603 = vmatprep.subr.bf16.mxu0 0
    %1604 = vmatpush2.bf16.msra.mxu0 0
    %1605 = vmatprep.mubr.bf16.mxu0 0
    %1606 = vmatmul.mubr.bf16.gmra.mxu0 %v1571
    %v1607 = vpop.f32.mrf.mxu0
    %v1608 = vadd.f32 0.0, %v1607
    %v1609 = vpop.f32.mrf.mxu0
    %v1610 = vpop.f32.mrf.mxu0
    %v1611 = vpop.f32.mrf.mxu0
    %1612 = vdwg.mxu0
    %v1614 = vsel %vm153, %v1565, 0
    %1616 = vmatprep.subr.bf16.mxu0 0
    %1617 = vmatpush1.bf16.msra.mxu0 0
    %1618 = vmatprep.subr.bf16.mxu0 0
    %1619 = vmatpush1.bf16.msra.mxu0 0
    %1620 = vmatprep.subr.bf16.mxu0 0
    %1621 = vmatpush1.bf16.msra.mxu0 0
    %1622 = vmatprep.subr.bf16.mxu0 0
    %1623 = vmatpush1.bf16.msra.mxu0 0
    %1624 = vmatprep.subr.bf16.mxu0 0
    %1625 = vmatpush1.bf16.msra.mxu0 0
    %1626 = vmatprep.subr.bf16.mxu0 0
    %1627 = vmatpush1.bf16.msra.mxu0 0
    %1628 = vmatprep.subr.bf16.mxu0 0
    %1629 = vmatpush1.bf16.msra.mxu0 %v565
    %1630 = vmatprep.subr.bf16.mxu0 0
    %1631 = vmatpush1.bf16.msra.mxu0 %v564
    %1632 = vmatprep.subr.bf16.mxu0 0
    %1633 = vmatpush2.bf16.msra.mxu0 0
    %1634 = vmatprep.subr.bf16.mxu0 0
    %1635 = vmatpush2.bf16.msra.mxu0 0
    %1636 = vmatprep.subr.bf16.mxu0 0
    %1637 = vmatpush2.bf16.msra.mxu0 0
    %1638 = vmatprep.subr.bf16.mxu0 0
    %1639 = vmatpush2.bf16.msra.mxu0 0
    %1640 = vmatprep.subr.bf16.mxu0 0
    %1641 = vmatpush2.bf16.msra.mxu0 0
    %1642 = vmatprep.subr.bf16.mxu0 0
    %1643 = vmatpush2.bf16.msra.mxu0 0
    %1644 = vmatprep.subr.bf16.mxu0 0
    %1645 = vmatpush2.bf16.msra.mxu0 0
    %1646 = vmatprep.subr.bf16.mxu0 0
    %1647 = vmatpush2.bf16.msra.mxu0 0
    %1648 = vmatprep.mubr.bf16.mxu0 0
    %1649 = vmatmul.mubr.bf16.gmra.mxu0 %v1614
    %v1650 = vpop.f32.mrf.mxu0
    %v1651 = vadd.f32 0.0, %v1650
    %v1652 = vpop.f32.mrf.mxu0
    %v1653 = vpop.f32.mrf.mxu0
    %v1654 = vpop.f32.mrf.mxu0
    %1655 = vdwg.mxu0
    %v1656 = vld [vmem:[%s1039] sm:$0x3]
    %v1657 = vld [vmem:[%s1037] sm:$0x3]
    %v1658 = vunpack.c.l.bf16 %v1656
    %v1659 = vunpack.c.l.bf16 %v1657
    %v1660 = vadd.f32 %v1658, %v1608
    %v1661 = vxor.u32 %v1660, 2147483648
    %v1662 = vmul.f32 %v1661, 1.442695
    %v1663 = vpow.pop %v1662
    %v1664 = vadd.f32 %v1663, 1.0
    %v1665 = vrcp.pop %v1664
    %v1666 = vmul.f32 1.0, %v1665
    %v1667 = vadd.f32 %v1608, %v626
    %v1670 = vunpack.c.l.s4 1983009808
    %v1671 = vunpack.c.0.s8 %v1670
    %v1672 = vlaneseq
    %v1673 = vshrl.u32 %v1672, 7
    %v1674 = vsub.s32 %v1671, %v1673
    %v1675 = vrot.slane %v1667, %v1674
    %1676 = vrot.lane.b32.xlu0 %v1675, 64
    %v1677 = vpop.permute.xlu0 %1676
    %v1679 = vmul.f32 %v1666, %v1677
    %1681 = vrot.lane.b32.xlu0 %v1679, 64
    %v1682 = vpop.permute.xlu0 %1681
    %v1684 = vadd.f32 %v1658, %v1682
    %v1685 = vtanh.pop %v1684
    %v1686 = vsub.f32 1.0, %v1666
    %1688 = vrot.lane.b32.xlu0 %v1685, 96
    %v1689 = vpop.permute.xlu0 %1688
    %v1691 = vmul.f32 %v1686, %v1689
    %v1692 = vmul.f32 %v1666, %v1488
    %v1693 = vadd.f32 %v1691, %v1692
    %v1696 = vunpack.c.l.s4 1983009808
    %v1697 = vunpack.c.0.s8 %v1696
    %v1698 = vlaneseq
    %v1699 = vshrl.u32 %v1698, 7
    %v1700 = vsub.s32 %v1697, %v1699
    %v1701 = vrot.slane %v1651, %v1700
    %1702 = vrot.lane.b32.xlu0 %v1701, 96
    %v1703 = vpop.permute.xlu0 %1702
    %v1705 = vadd.f32 %v1659, %v1703
    %v1706 = vxor.u32 %v1705, 2147483648
    %v1707 = vmul.f32 %v1706, 1.442695
    %v1708 = vpow.pop %v1707
    %v1709 = vadd.f32 %v1708, 1.0
    %v1710 = vrcp.pop %v1709
    %v1711 = vmul.f32 1.0, %v1710
    %v1713 = vrot.slane %v1659, 2
    %v1715 = vadd.f32 %v1713, %v1703
    %v1716 = vxor.u32 %v1715, 2147483648
    %v1717 = vmul.f32 %v1716, 1.442695
    %v1718 = vpow.pop %v1717
    %v1719 = vadd.f32 %v1718, 1.0
    %v1720 = vrcp.pop %v1719
    %v1721 = vmul.f32 1.0, %v1720
    %v1722 = vadd.f32 %v1651, %v689
    %v1725 = vunpack.c.l.s4 1983009808
    %v1726 = vunpack.c.0.s8 %v1725
    %v1727 = vlaneseq
    %v1728 = vshrl.u32 %v1727, 7
    %v1729 = vsub.s32 %v1726, %v1728
    %v1730 = vrot.slane %v1722, %v1729
    %1731 = vrot.lane.b32.xlu0 %v1730, 32
    %v1732 = vpop.permute.xlu0 %1731
    %v1734 = vmul.f32 %v1711, %v1732
    %1735 = vrot.lane.b32.xlu0 %v1659, 96
    %v1736 = vpop.permute.xlu0 %1735
    %v1737 = vrot.slane %v1736, 2
    %1740 = vrot.lane.b32.xlu0 %v1734, 32
    %v1741 = vpop.permute.xlu0 %1740
    %v1743 = vadd.f32 %v1737, %v1741
    %v1744 = vtanh.pop %v1743
    %v1745 = vsub.f32 1.0, %v1721
    %v1746 = vmul.f32 %v1745, %v1744
    %v1747 = vmul.f32 %v1721, %v1543
    %v1748 = vadd.f32 %v1746, %v1747
    %v1749 = vpack.c.bf16 %v1693, %v1693
    %v1752 = vunpack.c.l.s4 1966171168
    %v1753 = vunpack.c.0.s8 %v1752
    %v1754 = vlaneseq
    %v1755 = vshrl.u32 %v1754, 7
    %v1756 = vsub.s32 %v1753, %v1755
    %v1757 = vrot.slane %v1749, %v1756
    %v1759 = vunpack.c.l.s4 1966171168
    %v1760 = vunpack.c.0.s8 %v1759
    %v1761 = vlaneseq
    %v1762 = vshrl.u32 %v1761, 7
    %v1763 = vsub.s32 %v1760, %v1762
    %v1764 = vrot.slane %v1757, %v1763
    %1765 = vrot.lane.b32.xlu0 %v1764, 96
    %v1766 = vpop.permute.xlu0 %1765
    %s1768 = scalar_lea.vmem [#allocation3], 5
    %1769 = vst.msk [vmem:[%s1768] sm:$0x1] %vm737, %v1766
    %v1770 = vpack.c.bf16 %v1748, %v1748
    %s1771 = scalar_lea.vmem [#allocation4], 2
    %1772 = vst.msk [vmem:[%s1771] sm:$0x1] %vm737, %v1770
    %1773 = vrot.lane.b32.xlu0 %v1749, 96
    %v1774 = vpop.permute.xlu0 %1773
    %v1776 = vsel %vm153, %v1774, 0
    %1778 = vmatprep.subr.bf16.mxu0 0
    %1779 = vmatpush1.bf16.msra.mxu0 0
    %1780 = vmatprep.subr.bf16.mxu0 0
    %1781 = vmatpush1.bf16.msra.mxu0 0
    %1782 = vmatprep.subr.bf16.mxu0 0
    %1783 = vmatpush1.bf16.msra.mxu0 0
    %1784 = vmatprep.subr.bf16.mxu0 0
    %1785 = vmatpush1.bf16.msra.mxu0 0
    %1786 = vmatprep.subr.bf16.mxu0 0
    %1787 = vmatpush1.bf16.msra.mxu0 0
    %1788 = vmatprep.subr.bf16.mxu0 0
    %1789 = vmatpush1.bf16.msra.mxu0 0
    %1790 = vmatprep.subr.bf16.mxu0 0
    %1791 = vmatpush1.bf16.msra.mxu0 %v510
    %1792 = vmatprep.subr.bf16.mxu0 0
    %1793 = vmatpush1.bf16.msra.mxu0 %v509
    %1794 = vmatprep.subr.bf16.mxu0 0
    %1795 = vmatpush2.bf16.msra.mxu0 0
    %1796 = vmatprep.subr.bf16.mxu0 0
    %1797 = vmatpush2.bf16.msra.mxu0 0
    %1798 = vmatprep.subr.bf16.mxu0 0
    %1799 = vmatpush2.bf16.msra.mxu0 0
    %1800 = vmatprep.subr.bf16.mxu0 0
    %1801 = vmatpush2.bf16.msra.mxu0 0
    %1802 = vmatprep.subr.bf16.mxu0 0
    %1803 = vmatpush2.bf16.msra.mxu0 0
    %1804 = vmatprep.subr.bf16.mxu0 0
    %1805 = vmatpush2.bf16.msra.mxu0 0
    %1806 = vmatprep.subr.bf16.mxu0 0
    %1807 = vmatpush2.bf16.msra.mxu0 0
    %1808 = vmatprep.subr.bf16.mxu0 0
    %1809 = vmatpush2.bf16.msra.mxu0 0
    %1810 = vmatprep.mubr.bf16.mxu0 0
    %1811 = vmatmul.mubr.bf16.gmra.mxu0 %v1776
    %v1812 = vpop.f32.mrf.mxu0
    %v1813 = vadd.f32 0.0, %v1812
    %v1814 = vpop.f32.mrf.mxu0
    %v1815 = vpop.f32.mrf.mxu0
    %v1816 = vpop.f32.mrf.mxu0
    %1817 = vdwg.mxu0
    %v1819 = vsel %vm153, %v1770, 0
    %1821 = vmatprep.subr.bf16.mxu0 0
    %1822 = vmatpush1.bf16.msra.mxu0 0
    %1823 = vmatprep.subr.bf16.mxu0 0
    %1824 = vmatpush1.bf16.msra.mxu0 0
    %1825 = vmatprep.subr.bf16.mxu0 0
    %1826 = vmatpush1.bf16.msra.mxu0 0
    %1827 = vmatprep.subr.bf16.mxu0 0
    %1828 = vmatpush1.bf16.msra.mxu0 0
    %1829 = vmatprep.subr.bf16.mxu0 0
    %1830 = vmatpush1.bf16.msra.mxu0 0
    %1831 = vmatprep.subr.bf16.mxu0 0
    %1832 = vmatpush1.bf16.msra.mxu0 0
    %1833 = vmatprep.subr.bf16.mxu0 0
    %1834 = vmatpush1.bf16.msra.mxu0 %v565
    %1835 = vmatprep.subr.bf16.mxu0 0
    %1836 = vmatpush1.bf16.msra.mxu0 %v564
    %1837 = vmatprep.subr.bf16.mxu0 0
    %1838 = vmatpush2.bf16.msra.mxu0 0
    %1839 = vmatprep.subr.bf16.mxu0 0
    %1840 = vmatpush2.bf16.msra.mxu0 0
    %1841 = vmatprep.subr.bf16.mxu0 0
    %1842 = vmatpush2.bf16.msra.mxu0 0
    %1843 = vmatprep.subr.bf16.mxu0 0
    %1844 = vmatpush2.bf16.msra.mxu0 0
    %1845 = vmatprep.subr.bf16.mxu0 0
    %1846 = vmatpush2.bf16.msra.mxu0 0
    %1847 = vmatprep.subr.bf16.mxu0 0
    %1848 = vmatpush2.bf16.msra.mxu0 0
    %1849 = vmatprep.subr.bf16.mxu0 0
    %1850 = vmatpush2.bf16.msra.mxu0 0
    %1851 = vmatprep.subr.bf16.mxu0 0
    %1852 = vmatpush2.bf16.msra.mxu0 0
    %1853 = vmatprep.mubr.bf16.mxu0 0
    %1854 = vmatmul.mubr.bf16.gmra.mxu0 %v1819
    %v1855 = vpop.f32.mrf.mxu0
    %v1856 = vadd.f32 0.0, %v1855
    %v1857 = vpop.f32.mrf.mxu0
    %v1858 = vpop.f32.mrf.mxu0
    %v1859 = vpop.f32.mrf.mxu0
    %1860 = vdwg.mxu0
    %v1861 = vld [vmem:[%s832] sm:$0x3]
    %v1862 = vld [vmem:[%s830] sm:$0x3]
    %v1863 = vunpack.c.l.bf16 %v1861
    %v1864 = vunpack.c.l.bf16 %v1862
    %v1865 = vadd.f32 %v1863, %v1813
    %v1866 = vxor.u32 %v1865, 2147483648
    %v1867 = vmul.f32 %v1866, 1.442695
    %v1868 = vpow.pop %v1867
    %v1869 = vadd.f32 %v1868, 1.0
    %v1870 = vrcp.pop %v1869
    %v1871 = vmul.f32 1.0, %v1870
    %v1872 = vadd.f32 %v1813, %v626
    %v1875 = vunpack.c.l.s4 1983009808
    %v1876 = vunpack.c.0.s8 %v1875
    %v1877 = vlaneseq
    %v1878 = vshrl.u32 %v1877, 7
    %v1879 = vsub.s32 %v1876, %v1878
    %v1880 = vrot.slane %v1872, %v1879
    %1881 = vrot.lane.b32.xlu0 %v1880, 64
    %v1882 = vpop.permute.xlu0 %1881
    %v1884 = vmul.f32 %v1871, %v1882
    %1886 = vrot.lane.b32.xlu0 %v1884, 64
    %v1887 = vpop.permute.xlu0 %1886
    %v1889 = vadd.f32 %v1863, %v1887
    %v1890 = vtanh.pop %v1889
    %v1891 = vsub.f32 1.0, %v1871
    %1893 = vrot.lane.b32.xlu0 %v1890, 96
    %v1894 = vpop.permute.xlu0 %1893
    %v1896 = vmul.f32 %v1891, %v1894
    %v1897 = vmul.f32 %v1871, %v1693
    %v1898 = vadd.f32 %v1896, %v1897
    %v1901 = vunpack.c.l.s4 1983009808
    %v1902 = vunpack.c.0.s8 %v1901
    %v1903 = vlaneseq
    %v1904 = vshrl.u32 %v1903, 7
    %v1905 = vsub.s32 %v1902, %v1904
    %v1906 = vrot.slane %v1856, %v1905
    %1907 = vrot.lane.b32.xlu0 %v1906, 96
    %v1908 = vpop.permute.xlu0 %1907
    %v1910 = vadd.f32 %v1864, %v1908
    %v1911 = vxor.u32 %v1910, 2147483648
    %v1912 = vmul.f32 %v1911, 1.442695
    %v1913 = vpow.pop %v1912
    %v1914 = vadd.f32 %v1913, 1.0
    %v1915 = vrcp.pop %v1914
    %v1916 = vmul.f32 1.0, %v1915
    %v1918 = vrot.slane %v1864, 2
    %v1920 = vadd.f32 %v1918, %v1908
    %v1921 = vxor.u32 %v1920, 2147483648
    %v1922 = vmul.f32 %v1921, 1.442695
    %v1923 = vpow.pop %v1922
    %v1924 = vadd.f32 %v1923, 1.0
    %v1925 = vrcp.pop %v1924
    %v1926 = vmul.f32 1.0, %v1925
    %v1927 = vadd.f32 %v1856, %v689
    %v1930 = vunpack.c.l.s4 1983009808
    %v1931 = vunpack.c.0.s8 %v1930
    %v1932 = vlaneseq
    %v1933 = vshrl.u32 %v1932, 7
    %v1934 = vsub.s32 %v1931, %v1933
    %v1935 = vrot.slane %v1927, %v1934
    %1936 = vrot.lane.b32.xlu0 %v1935, 32
    %v1937 = vpop.permute.xlu0 %1936
    %v1939 = vmul.f32 %v1916, %v1937
    %1940 = vrot.lane.b32.xlu0 %v1864, 96
    %v1941 = vpop.permute.xlu0 %1940
    %v1942 = vrot.slane %v1941, 2
    %1945 = vrot.lane.b32.xlu0 %v1939, 32
    %v1946 = vpop.permute.xlu0 %1945
    %v1948 = vadd.f32 %v1942, %v1946
    %v1949 = vtanh.pop %v1948
    %v1950 = vsub.f32 1.0, %v1926
    %v1951 = vmul.f32 %v1950, %v1949
    %v1952 = vmul.f32 %v1926, %v1748
    %v1953 = vadd.f32 %v1951, %v1952
    %v1954 = vpack.c.bf16 %v1898, %v1898
    %v1957 = vunpack.c.l.s4 1966171168
    %v1958 = vunpack.c.0.s8 %v1957
    %v1959 = vlaneseq
    %v1960 = vshrl.u32 %v1959, 7
    %v1961 = vsub.s32 %v1958, %v1960
    %v1962 = vrot.slane %v1954, %v1961
    %v1964 = vunpack.c.l.s4 1966171168
    %v1965 = vunpack.c.0.s8 %v1964
    %v1966 = vlaneseq
    %v1967 = vshrl.u32 %v1966, 7
    %v1968 = vsub.s32 %v1965, %v1967
    %v1969 = vrot.slane %v1962, %v1968
    %1970 = vrot.lane.b32.xlu0 %v1969, 96
    %v1971 = vpop.permute.xlu0 %1970
    %s1973 = scalar_lea.vmem [#allocation3], 6
    %1974 = vst.msk [vmem:[%s1973] sm:$0x1] %vm737, %v1971
    %v1975 = vpack.c.bf16 %v1953, %v1953
    %s1976 = scalar_lea.vmem [#allocation4], 1
    %1977 = vst.msk [vmem:[%s1976] sm:$0x1] %vm737, %v1975
    %1978 = vrot.lane.b32.xlu0 %v1954, 96
    %v1979 = vpop.permute.xlu0 %1978
    %v1981 = vsel %vm153, %v1979, 0
    %1983 = vmatprep.subr.bf16.mxu0 0
    %1984 = vmatpush1.bf16.msra.mxu0 0
    %1985 = vmatprep.subr.bf16.mxu0 0
    %1986 = vmatpush1.bf16.msra.mxu0 0
    %1987 = vmatprep.subr.bf16.mxu0 0
    %1988 = vmatpush1.bf16.msra.mxu0 0
    %1989 = vmatprep.subr.bf16.mxu0 0
    %1990 = vmatpush1.bf16.msra.mxu0 0
    %1991 = vmatprep.subr.bf16.mxu0 0
    %1992 = vmatpush1.bf16.msra.mxu0 0
    %1993 = vmatprep.subr.bf16.mxu0 0
    %1994 = vmatpush1.bf16.msra.mxu0 0
    %1995 = vmatprep.subr.bf16.mxu0 0
    %1996 = vmatpush1.bf16.msra.mxu0 %v510
    %1997 = vmatprep.subr.bf16.mxu0 0
    %1998 = vmatpush1.bf16.msra.mxu0 %v509
    %1999 = vmatprep.subr.bf16.mxu0 0
    %2000 = vmatpush2.bf16.msra.mxu0 0
    %2001 = vmatprep.subr.bf16.mxu0 0
    %2002 = vmatpush2.bf16.msra.mxu0 0
    %2003 = vmatprep.subr.bf16.mxu0 0
    %2004 = vmatpush2.bf16.msra.mxu0 0
    %2005 = vmatprep.subr.bf16.mxu0 0
    %2006 = vmatpush2.bf16.msra.mxu0 0
    %2007 = vmatprep.subr.bf16.mxu0 0
    %2008 = vmatpush2.bf16.msra.mxu0 0
    %2009 = vmatprep.subr.bf16.mxu0 0
    %2010 = vmatpush2.bf16.msra.mxu0 0
    %2011 = vmatprep.subr.bf16.mxu0 0
    %2012 = vmatpush2.bf16.msra.mxu0 0
    %2013 = vmatprep.subr.bf16.mxu0 0
    %2014 = vmatpush2.bf16.msra.mxu0 0
    %2015 = vmatprep.mubr.bf16.mxu0 0
    %2016 = vmatmul.mubr.bf16.gmra.mxu0 %v1981
    %v2017 = vpop.f32.mrf.mxu0
    %v2018 = vadd.f32 0.0, %v2017
    %v2019 = vpop.f32.mrf.mxu0
    %v2020 = vpop.f32.mrf.mxu0
    %v2021 = vpop.f32.mrf.mxu0
    %2022 = vdwg.mxu0
    %v2024 = vsel %vm153, %v1975, 0
    %2026 = vmatprep.subr.bf16.mxu0 0
    %2027 = vmatpush1.bf16.msra.mxu0 0
    %2028 = vmatprep.subr.bf16.mxu0 0
    %2029 = vmatpush1.bf16.msra.mxu0 0
    %2030 = vmatprep.subr.bf16.mxu0 0
    %2031 = vmatpush1.bf16.msra.mxu0 0
    %2032 = vmatprep.subr.bf16.mxu0 0
    %2033 = vmatpush1.bf16.msra.mxu0 0
    %2034 = vmatprep.subr.bf16.mxu0 0
    %2035 = vmatpush1.bf16.msra.mxu0 0
    %2036 = vmatprep.subr.bf16.mxu0 0
    %2037 = vmatpush1.bf16.msra.mxu0 0
    %2038 = vmatprep.subr.bf16.mxu0 0
    %2039 = vmatpush1.bf16.msra.mxu0 %v565
    %2040 = vmatprep.subr.bf16.mxu0 0
    %2041 = vmatpush1.bf16.msra.mxu0 %v564
    %2042 = vmatprep.subr.bf16.mxu0 0
    %2043 = vmatpush2.bf16.msra.mxu0 0
    %2044 = vmatprep.subr.bf16.mxu0 0
    %2045 = vmatpush2.bf16.msra.mxu0 0
    %2046 = vmatprep.subr.bf16.mxu0 0
    %2047 = vmatpush2.bf16.msra.mxu0 0
    %2048 = vmatprep.subr.bf16.mxu0 0
    %2049 = vmatpush2.bf16.msra.mxu0 0
    %2050 = vmatprep.subr.bf16.mxu0 0
    %2051 = vmatpush2.bf16.msra.mxu0 0
    %2052 = vmatprep.subr.bf16.mxu0 0
    %2053 = vmatpush2.bf16.msra.mxu0 0
    %2054 = vmatprep.subr.bf16.mxu0 0
    %2055 = vmatpush2.bf16.msra.mxu0 0
    %2056 = vmatprep.subr.bf16.mxu0 0
    %2057 = vmatpush2.bf16.msra.mxu0 0
    %2058 = vmatprep.mubr.bf16.mxu0 0
    %2059 = vmatmul.mubr.bf16.gmra.mxu0 %v2024
    %v2060 = vpop.f32.mrf.mxu0
    %v2061 = vadd.f32 0.0, %v2060
    %v2062 = vpop.f32.mrf.mxu0
    %v2063 = vpop.f32.mrf.mxu0
    %v2064 = vpop.f32.mrf.mxu0
    %2065 = vdwg.mxu0
    %v2066 = vld [vmem:[%s609] sm:$0x3]
    %v2067 = vld [vmem:[#allocation2] sm:$0x3]
    %v2068 = vunpack.c.l.bf16 %v2066
    %v2069 = vunpack.c.l.bf16 %v2067
    %v2070 = vadd.f32 %v2068, %v2018
    %v2071 = vxor.u32 %v2070, 2147483648
    %v2072 = vmul.f32 %v2071, 1.442695
    %v2073 = vpow.pop %v2072
    %v2074 = vadd.f32 %v2073, 1.0
    %v2075 = vrcp.pop %v2074
    %v2076 = vmul.f32 1.0, %v2075
    %v2077 = vadd.f32 %v2018, %v626
    %v2080 = vunpack.c.l.s4 1983009808
    %v2081 = vunpack.c.0.s8 %v2080
    %v2082 = vlaneseq
    %v2083 = vshrl.u32 %v2082, 7
    %v2084 = vsub.s32 %v2081, %v2083
    %v2085 = vrot.slane %v2077, %v2084
    %2086 = vrot.lane.b32.xlu0 %v2085, 64
    %v2087 = vpop.permute.xlu0 %2086
    %v2089 = vmul.f32 %v2076, %v2087
    %2091 = vrot.lane.b32.xlu0 %v2089, 64
    %v2092 = vpop.permute.xlu0 %2091
    %v2094 = vadd.f32 %v2068, %v2092
    %v2095 = vtanh.pop %v2094
    %v2096 = vsub.f32 1.0, %v2076
    %2098 = vrot.lane.b32.xlu0 %v2095, 96
    %v2099 = vpop.permute.xlu0 %2098
    %v2101 = vmul.f32 %v2096, %v2099
    %v2102 = vmul.f32 %v2076, %v1898
    %v2103 = vadd.f32 %v2101, %v2102
    %v2106 = vunpack.c.l.s4 1983009808
    %v2107 = vunpack.c.0.s8 %v2106
    %v2108 = vlaneseq
    %v2109 = vshrl.u32 %v2108, 7
    %v2110 = vsub.s32 %v2107, %v2109
    %v2111 = vrot.slane %v2061, %v2110
    %2112 = vrot.lane.b32.xlu0 %v2111, 96
    %v2113 = vpop.permute.xlu0 %2112
    %v2115 = vadd.f32 %v2069, %v2113
    %v2116 = vxor.u32 %v2115, 2147483648
    %v2117 = vmul.f32 %v2116, 1.442695
    %v2118 = vpow.pop %v2117
    %v2119 = vadd.f32 %v2118, 1.0
    %v2120 = vrcp.pop %v2119
    %v2121 = vmul.f32 1.0, %v2120
    %v2123 = vrot.slane %v2069, 2
    %v2125 = vadd.f32 %v2123, %v2113
    %v2126 = vxor.u32 %v2125, 2147483648
    %v2127 = vmul.f32 %v2126, 1.442695
    %v2128 = vpow.pop %v2127
    %v2129 = vadd.f32 %v2128, 1.0
    %v2130 = vrcp.pop %v2129
    %v2131 = vmul.f32 1.0, %v2130
    %v2132 = vadd.f32 %v2061, %v689
    %v2135 = vunpack.c.l.s4 1983009808
    %v2136 = vunpack.c.0.s8 %v2135
    %v2137 = vlaneseq
    %v2138 = vshrl.u32 %v2137, 7
    %v2139 = vsub.s32 %v2136, %v2138
    %v2140 = vrot.slane %v2132, %v2139
    %2141 = vrot.lane.b32.xlu0 %v2140, 32
    %v2142 = vpop.permute.xlu0 %2141
    %v2144 = vmul.f32 %v2121, %v2142
    %2145 = vrot.lane.b32.xlu0 %v2069, 96
    %v2146 = vpop.permute.xlu0 %2145
    %v2147 = vrot.slane %v2146, 2
    %2150 = vrot.lane.b32.xlu0 %v2144, 32
    %v2151 = vpop.permute.xlu0 %2150
    %v2153 = vadd.f32 %v2147, %v2151
    %v2154 = vtanh.pop %v2153
    %v2155 = vsub.f32 1.0, %v2131
    %v2156 = vmul.f32 %v2155, %v2154
    %v2157 = vmul.f32 %v2131, %v1953
    %v2158 = vadd.f32 %v2156, %v2157
    %v2159 = vpack.c.bf16 %v2103, %v2103
    %v2162 = vunpack.c.l.s4 1966171168
    %v2163 = vunpack.c.0.s8 %v2162
    %v2164 = vlaneseq
    %v2165 = vshrl.u32 %v2164, 7
    %v2166 = vsub.s32 %v2163, %v2165
    %v2167 = vrot.slane %v2159, %v2166
    %v2169 = vunpack.c.l.s4 1966171168
    %v2170 = vunpack.c.0.s8 %v2169
    %v2171 = vlaneseq
    %v2172 = vshrl.u32 %v2171, 7
    %v2173 = vsub.s32 %v2170, %v2172
    %v2174 = vrot.slane %v2167, %v2173
    %2175 = vrot.lane.b32.xlu0 %v2174, 96
    %v2176 = vpop.permute.xlu0 %2175
    %s2178 = scalar_lea.vmem [#allocation3], 7
    %2179 = vst.msk [vmem:[%s2178] sm:$0x1] %vm737, %v2176
    %v2180 = vpack.c.bf16 %v2158, %v2158
    %2181 = vst.msk [vmem:[#allocation4] sm:$0x1] %vm737, %v2180
    %v2182 = vld [vmem:[#allocation3] sm:$0x1]
    %v2183 = vld [vmem:[#allocation3 + $0x1] sm:$0x1]
    %v2184 = vld [vmem:[#allocation3 + $0x2] sm:$0x1]
    %v2185 = vld [vmem:[#allocation3 + $0x3] sm:$0x1]
    %v2186 = vld [vmem:[#allocation3 + $0x4] sm:$0x1]
    %v2187 = vld [vmem:[#allocation3 + $0x5] sm:$0x1]
    %v2188 = vld [vmem:[#allocation3 + $0x6] sm:$0x1]
    %v2189 = vld [vmem:[#allocation3 + $0x7] sm:$0x1]
    %v2190 = vld [vmem:[#allocation4] sm:$0x1]
    %v2191 = vld [vmem:[#allocation4 + $0x1] sm:$0x1]
    %v2192 = vld [vmem:[#allocation4 + $0x2] sm:$0x1]
    %v2193 = vld [vmem:[#allocation4 + $0x3] sm:$0x1]
    %v2194 = vld [vmem:[#allocation4 + $0x4] sm:$0x1]
    %v2195 = vld [vmem:[#allocation4 + $0x5] sm:$0x1]
    %v2196 = vld [vmem:[#allocation4 + $0x6] sm:$0x1]
    %v2197 = vld [vmem:[#allocation4 + $0x7] sm:$0x1]
    %v2198 = vld [vmem:[%s7] sm:$0xf]
    %v2199 = vld [vmem:[%s7 + $0x4] sm:$0xf]
    %v2200 = vld [vmem:[%s7 + $0x8] sm:$0xf]
    %v2201 = vld [vmem:[%s7 + $0xc] sm:$0xf]
    %v2202 = vld [vmem:[%s8] sm:$0xf]
    %v2203 = vld [vmem:[%s8 + $0x4] sm:$0xf]
    %v2204 = vld [vmem:[%s8 + $0x8] sm:$0xf]
    %v2205 = vld [vmem:[%s8 + $0xc] sm:$0xf]
    %v2214 = vcombine.low %v2190, %v2191
    %v2215 = vcombine.low %v2192, %v2193
    %v2216 = vcombine.low %v2194, %v2195
    %v2217 = vcombine.low %v2196, %v2197
    %v2219 = vunpack.c.l.s4 1966171168
    %v2220 = vunpack.c.0.s8 %v2219
    %v2221 = vlaneseq
    %v2222 = vshrl.u32 %v2221, 7
    %v2223 = vsub.s32 %v2220, %v2222
    %v2224 = vrot.slane %v2214, %v2223
    %v2226 = vunpack.c.l.s4 1966171168
    %v2227 = vunpack.c.0.s8 %v2226
    %v2228 = vlaneseq
    %v2229 = vshrl.u32 %v2228, 7
    %v2230 = vsub.s32 %v2227, %v2229
    %v2231 = vrot.slane %v2215, %v2230
    %v2233 = vunpack.c.l.s4 1966171168
    %v2234 = vunpack.c.0.s8 %v2233
    %v2235 = vlaneseq
    %v2236 = vshrl.u32 %v2235, 7
    %v2237 = vsub.s32 %v2234, %v2236
    %v2238 = vrot.slane %v2216, %v2237
    %v2240 = vunpack.c.l.s4 1966171168
    %v2241 = vunpack.c.0.s8 %v2240
    %v2242 = vlaneseq
    %v2243 = vshrl.u32 %v2242, 7
    %v2244 = vsub.s32 %v2241, %v2243
    %v2245 = vrot.slane %v2217, %v2244
    %v2246 = vcombine.low %v2224, %v2231
    %v2247 = vcombine.low %v2238, %v2245
    %v2249 = vunpack.c.l.s4 1966171168
    %v2250 = vunpack.c.0.s8 %v2249
    %v2251 = vlaneseq
    %v2252 = vshrl.u32 %v2251, 7
    %v2253 = vsub.s32 %v2250, %v2252
    %v2254 = vrot.slane %v2246, %v2253
    %v2256 = vunpack.c.l.s4 1966171168
    %v2257 = vunpack.c.0.s8 %v2256
    %v2258 = vlaneseq
    %v2259 = vshrl.u32 %v2258, 7
    %v2260 = vsub.s32 %v2257, %v2259
    %v2261 = vrot.slane %v2247, %v2260
    %v2262 = vcombine.low %v2254, %v2261
    %v2267 = vunpack.c.l.b16 %v2202
    %v2268 = vunpack.c.l.b16 %v2203
    %v2269 = vunpack.c.l.b16 %v2204
    %v2270 = vunpack.c.l.b16 %v2205
    %v2271 = vpack.c.b16 %v2268, %v2267
    %v2272 = vpack.c.b16 %v2270, %v2269
    %v2276 = vsel %vm153, %v2262, 0
    %2278 = vmatprep.subr.bf16.mxu0 0
    %2279 = vmatpush1.bf16.msra.mxu0 0
    %2280 = vmatprep.subr.bf16.mxu0 0
    %2281 = vmatpush1.bf16.msra.mxu0 0
    %2282 = vmatprep.subr.bf16.mxu0 0
    %2283 = vmatpush1.bf16.msra.mxu0 0
    %2284 = vmatprep.subr.bf16.mxu0 0
    %2285 = vmatpush1.bf16.msra.mxu0 0
    %2286 = vmatprep.subr.bf16.mxu0 0
    %2287 = vmatpush1.bf16.msra.mxu0 0
    %2288 = vmatprep.subr.bf16.mxu0 0
    %2289 = vmatpush1.bf16.msra.mxu0 0
    %2290 = vmatprep.subr.bf16.mxu0 0
    %2291 = vmatpush1.bf16.msra.mxu0 %v2272
    %2292 = vmatprep.subr.bf16.mxu0 0
    %2293 = vmatpush1.bf16.msra.mxu0 %v2271
    %2294 = vmatprep.subr.bf16.mxu0 0
    %2295 = vmatpush2.bf16.msra.mxu0 0
    %2296 = vmatprep.subr.bf16.mxu0 0
    %2297 = vmatpush2.bf16.msra.mxu0 0
    %2298 = vmatprep.subr.bf16.mxu0 0
    %2299 = vmatpush2.bf16.msra.mxu0 0
    %2300 = vmatprep.subr.bf16.mxu0 0
    %2301 = vmatpush2.bf16.msra.mxu0 0
    %2302 = vmatprep.subr.bf16.mxu0 0
    %2303 = vmatpush2.bf16.msra.mxu0 0
    %2304 = vmatprep.subr.bf16.mxu0 0
    %2305 = vmatpush2.bf16.msra.mxu0 0
    %2306 = vmatprep.subr.bf16.mxu0 0
    %2307 = vmatpush2.bf16.msra.mxu0 0
    %2308 = vmatprep.subr.bf16.mxu0 0
    %2309 = vmatpush2.bf16.msra.mxu0 0
    %2310 = vmatprep.mubr.bf16.mxu0 0
    %2311 = vmatmul.mubr.bf16.gmra.mxu0 %v2276
    %v2312 = vpop.f32.mrf.mxu0
    %v2313 = vadd.f32 0.0, %v2312
    %v2314 = vpop.f32.mrf.mxu0
    %v2315 = vpop.f32.mrf.mxu0
    %v2316 = vadd.f32 0.0, %v2315
    %v2317 = vpop.f32.mrf.mxu0
    %2318 = vdwg.mxu0
    %v2327 = vcombine.low %v2182, %v2183
    %v2328 = vcombine.low %v2184, %v2185
    %v2329 = vcombine.low %v2186, %v2187
    %v2330 = vcombine.low %v2188, %v2189
    %v2332 = vunpack.c.l.s4 1966171168
    %v2333 = vunpack.c.0.s8 %v2332
    %v2334 = vlaneseq
    %v2335 = vshrl.u32 %v2334, 7
    %v2336 = vsub.s32 %v2333, %v2335
    %v2337 = vrot.slane %v2327, %v2336
    %v2339 = vunpack.c.l.s4 1966171168
    %v2340 = vunpack.c.0.s8 %v2339
    %v2341 = vlaneseq
    %v2342 = vshrl.u32 %v2341, 7
    %v2343 = vsub.s32 %v2340, %v2342
    %v2344 = vrot.slane %v2328, %v2343
    %v2346 = vunpack.c.l.s4 1966171168
    %v2347 = vunpack.c.0.s8 %v2346
    %v2348 = vlaneseq
    %v2349 = vshrl.u32 %v2348, 7
    %v2350 = vsub.s32 %v2347, %v2349
    %v2351 = vrot.slane %v2329, %v2350
    %v2353 = vunpack.c.l.s4 1966171168
    %v2354 = vunpack.c.0.s8 %v2353
    %v2355 = vlaneseq
    %v2356 = vshrl.u32 %v2355, 7
    %v2357 = vsub.s32 %v2354, %v2356
    %v2358 = vrot.slane %v2330, %v2357
    %v2359 = vcombine.low %v2337, %v2344
    %v2360 = vcombine.low %v2351, %v2358
    %v2362 = vunpack.c.l.s4 1966171168
    %v2363 = vunpack.c.0.s8 %v2362
    %v2364 = vlaneseq
    %v2365 = vshrl.u32 %v2364, 7
    %v2366 = vsub.s32 %v2363, %v2365
    %v2367 = vrot.slane %v2359, %v2366
    %v2369 = vunpack.c.l.s4 1966171168
    %v2370 = vunpack.c.0.s8 %v2369
    %v2371 = vlaneseq
    %v2372 = vshrl.u32 %v2371, 7
    %v2373 = vsub.s32 %v2370, %v2372
    %v2374 = vrot.slane %v2360, %v2373
    %v2375 = vcombine.low %v2367, %v2374
    %v2380 = vunpack.c.l.b16 %v2198
    %v2381 = vunpack.c.l.b16 %v2199
    %v2382 = vunpack.c.l.b16 %v2200
    %v2383 = vunpack.c.l.b16 %v2201
    %v2384 = vpack.c.b16 %v2381, %v2380
    %v2385 = vpack.c.b16 %v2383, %v2382
    %v2389 = vsel %vm153, %v2375, 0
    %2391 = vmatprep.subr.bf16.mxu0 0
    %2392 = vmatpush1.bf16.msra.mxu0 0
    %2393 = vmatprep.subr.bf16.mxu0 0
    %2394 = vmatpush1.bf16.msra.mxu0 0
    %2395 = vmatprep.subr.bf16.mxu0 0
    %2396 = vmatpush1.bf16.msra.mxu0 0
    %2397 = vmatprep.subr.bf16.mxu0 0
    %2398 = vmatpush1.bf16.msra.mxu0 0
    %2399 = vmatprep.subr.bf16.mxu0 0
    %2400 = vmatpush1.bf16.msra.mxu0 0
    %2401 = vmatprep.subr.bf16.mxu0 0
    %2402 = vmatpush1.bf16.msra.mxu0 0
    %2403 = vmatprep.subr.bf16.mxu0 0
    %2404 = vmatpush1.bf16.msra.mxu0 %v2385
    %2405 = vmatprep.subr.bf16.mxu0 0
    %2406 = vmatpush1.bf16.msra.mxu0 %v2384
    %2407 = vmatprep.subr.bf16.mxu0 0
    %2408 = vmatpush2.bf16.msra.mxu0 0
    %2409 = vmatprep.subr.bf16.mxu0 0
    %2410 = vmatpush2.bf16.msra.mxu0 0
    %2411 = vmatprep.subr.bf16.mxu0 0
    %2412 = vmatpush2.bf16.msra.mxu0 0
    %2413 = vmatprep.subr.bf16.mxu0 0
    %2414 = vmatpush2.bf16.msra.mxu0 0
    %2415 = vmatprep.subr.bf16.mxu0 0
    %2416 = vmatpush2.bf16.msra.mxu0 0
    %2417 = vmatprep.subr.bf16.mxu0 0
    %2418 = vmatpush2.bf16.msra.mxu0 0
    %2419 = vmatprep.subr.bf16.mxu0 0
    %2420 = vmatpush2.bf16.msra.mxu0 0
    %2421 = vmatprep.subr.bf16.mxu0 0
    %2422 = vmatpush2.bf16.msra.mxu0 0
    %2423 = vmatprep.mubr.bf16.mxu0 0
    %2424 = vmatmul.mubr.bf16.gmra.mxu0 %v2389
    %v2425 = vpop.f32.mrf.mxu0
    %v2426 = vadd.f32 %v2313, %v2425
    %v2427 = vpop.f32.mrf.mxu0
    %v2428 = vpop.f32.mrf.mxu0
    %v2429 = vadd.f32 %v2316, %v2428
    %v2430 = vpop.f32.mrf.mxu0
    %2431 = vdwg.mxu0
    %v2432 = vld [vmem:[%s9] sm:$0x1]
    %v2434 = vlaneseq
    %v2435 = vshrl.u32 %v2434, 7
    %v2436 = vsub.s32 0, %v2435
    %v2437 = vrot.slane %v2432, %v2436
    %v2439 = vadd.f32 %v2426, %v2437
    %v2440 = vadd.f32 %v2429, %v2437
    %v2443 = vcombine.high %v2439, %v2439
    %v2445 = vunpack.c.l.s4 1983009808
    %v2446 = vunpack.c.0.s8 %v2445
    %v2447 = vlaneseq
    %v2448 = vshrl.u32 %v2447, 7
    %v2449 = vsub.s32 %v2446, %v2448
    %v2450 = vrot.slane %v2439, %v2449
    %v2452 = vunpack.c.l.s4 1983009808
    %v2453 = vunpack.c.0.s8 %v2452
    %v2454 = vlaneseq
    %v2455 = vshrl.u32 %v2454, 7
    %v2456 = vsub.s32 %v2453, %v2455
    %v2457 = vrot.slane %v2443, %v2456
    %v2458 = vcombine.high %v2450, %v2450
    %v2459 = vcombine.high %v2457, %v2457
    %v2460 = vcombine.high %v2440, %v2440
    %v2462 = vunpack.c.l.s4 1983009808
    %v2463 = vunpack.c.0.s8 %v2462
    %v2464 = vlaneseq
    %v2465 = vshrl.u32 %v2464, 7
    %v2466 = vsub.s32 %v2463, %v2465
    %v2467 = vrot.slane %v2440, %v2466
    %v2469 = vunpack.c.l.s4 1983009808
    %v2470 = vunpack.c.0.s8 %v2469
    %v2471 = vlaneseq
    %v2472 = vshrl.u32 %v2471, 7
    %v2473 = vsub.s32 %v2470, %v2472
    %v2474 = vrot.slane %v2460, %v2473
    %v2475 = vcombine.high %v2467, %v2467
    %v2476 = vcombine.high %v2474, %v2474
    %vm2485 = vcmask 58368
    %2486 = vst.msk [vmem:[#allocation5] sm:$0x3] %vm2485, %v2450
    %2487 = vst.msk [vmem:[#allocation5 + $0x2] sm:$0x3] %vm2485, %v2458
    %2488 = vst.msk [vmem:[#allocation5 + $0x4] sm:$0x3] %vm2485, %v2457
    %2489 = vst.msk [vmem:[#allocation5 + $0x6] sm:$0x3] %vm2485, %v2459
    %2490 = vst.msk [vmem:[#allocation5 + $0x8] sm:$0x3] %vm2485, %v2467
    %2491 = vst.msk [vmem:[#allocation5 + $0xa] sm:$0x3] %vm2485, %v2475
    %2492 = vst.msk [vmem:[#allocation5 + $0xc] sm:$0x3] %vm2485, %v2474
    %2493 = vst.msk [vmem:[#allocation5 + $0xe] sm:$0x3] %vm2485, %v2476
    %v2494 = vld [vmem:[%s10] sm:$0x1]
    %v2495 = vld [vmem:[%s11] sm:$0x1]
    %v2496 = vld [vmem:[%s12] sm:$0xff]
    %v2497 = vld [vmem:[%s14] sm:$0x3]
    %v2498 = vld [vmem:[%s14 + $0x2] sm:$0x3]
    %v2499 = vld [vmem:[%s14 + $0x4] sm:$0x3]
    %v2500 = vld [vmem:[%s14 + $0x6] sm:$0x3]
    %v2501 = vld [vmem:[%s14 + $0x8] sm:$0x3]
    %v2502 = vld [vmem:[%s14 + $0xa] sm:$0x3]
    %v2503 = vld [vmem:[%s14 + $0xc] sm:$0x3]
    %v2504 = vld [vmem:[%s14 + $0xe] sm:$0x3]
    %v2505 = vld [vmem:[%s13] sm:$0x3]
    %v2506 = vld [vmem:[%s13 + $0x2] sm:$0x3]
    %v2507 = vld [vmem:[%s13 + $0x4] sm:$0x3]
    %v2508 = vld [vmem:[%s13 + $0x6] sm:$0x3]
    %v2509 = vld [vmem:[%s13 + $0x8] sm:$0x3]
    %v2510 = vld [vmem:[%s13 + $0xa] sm:$0x3]
    %v2511 = vld [vmem:[%s13 + $0xc] sm:$0x3]
    %v2512 = vld [vmem:[%s13 + $0xe] sm:$0x3]
    %v2513 = vlaneseq
    %v2514 = vand.u32 %v2513, 127
    %2515 = vset.pattern.permute.xlu0 0
    %2516 = vperm.xlu0 %2515, %v2505
    %v2517 = vpop.permute.xlu0 %2516
    %2518 = vset.pattern.permute.xlu0 0
    %2519 = vperm.xlu0 %2518, %v2506
    %v2520 = vpop.permute.xlu0 %2519
    %2521 = vset.pattern.permute.xlu0 0
    %2522 = vperm.xlu0 %2521, %v2507
    %v2523 = vpop.permute.xlu0 %2522
    %2524 = vset.pattern.permute.xlu0 0
    %2525 = vperm.xlu0 %2524, %v2508
    %v2526 = vpop.permute.xlu0 %2525
    %2527 = vset.pattern.permute.xlu0 0
    %2528 = vperm.xlu0 %2527, %v2509
    %v2529 = vpop.permute.xlu0 %2528
    %2530 = vset.pattern.permute.xlu0 0
    %2531 = vperm.xlu0 %2530, %v2510
    %v2532 = vpop.permute.xlu0 %2531
    %2533 = vset.pattern.permute.xlu0 0
    %2534 = vperm.xlu0 %2533, %v2511
    %v2535 = vpop.permute.xlu0 %2534
    %2536 = vset.pattern.permute.xlu0 0
    %2537 = vperm.xlu0 %2536, %v2512
    %v2538 = vpop.permute.xlu0 %2537
    %vm2539 = vcmp.eq.s32.totalorder %v2517, %v2514
    %vm2540 = vcmp.eq.s32.totalorder %v2520, %v2514
    %vm2541 = vcmp.eq.s32.totalorder %v2523, %v2514
    %vm2542 = vcmp.eq.s32.totalorder %v2526, %v2514
    %vm2543 = vcmp.eq.s32.totalorder %v2529, %v2514
    %vm2544 = vcmp.eq.s32.totalorder %v2532, %v2514
    %vm2545 = vcmp.eq.s32.totalorder %v2535, %v2514
    %vm2546 = vcmp.eq.s32.totalorder %v2538, %v2514
    %v2547 = vsel %vm2539, 1, 0
    %v2548 = vsel %vm2540, 1, 0
    %v2549 = vsel %vm2541, 1, 0
    %v2550 = vsel %vm2542, 1, 0
    %v2551 = vsel %vm2543, 1, 0
    %v2552 = vsel %vm2544, 1, 0
    %v2553 = vsel %vm2545, 1, 0
    %v2554 = vsel %vm2546, 1, 0
    %v2555 = vcvt.s32.f32 %v2547
    %v2556 = vcvt.s32.f32 %v2548
    %v2557 = vcvt.s32.f32 %v2549
    %v2558 = vcvt.s32.f32 %v2550
    %v2559 = vcvt.s32.f32 %v2551
    %v2560 = vcvt.s32.f32 %v2552
    %v2561 = vcvt.s32.f32 %v2553
    %v2562 = vcvt.s32.f32 %v2554
    %2564 = vset.pattern.permute.xlu0 0
    %2565 = vperm.xlu0 %2564, %v2497
    %v2566 = vpop.permute.xlu0 %2565
    %2569 = vset.pattern.permute.xlu0 0
    %2570 = vperm.xlu0 %2569, %v2498
    %v2571 = vpop.permute.xlu0 %2570
    %2574 = vset.pattern.permute.xlu0 0
    %2575 = vperm.xlu0 %2574, %v2499
    %v2576 = vpop.permute.xlu0 %2575
    %2579 = vset.pattern.permute.xlu0 0
    %2580 = vperm.xlu0 %2579, %v2500
    %v2581 = vpop.permute.xlu0 %2580
    %2584 = vset.pattern.permute.xlu0 0
    %2585 = vperm.xlu0 %2584, %v2501
    %v2586 = vpop.permute.xlu0 %2585
    %2589 = vset.pattern.permute.xlu0 0
    %2590 = vperm.xlu0 %2589, %v2502
    %v2591 = vpop.permute.xlu0 %2590
    %2594 = vset.pattern.permute.xlu0 0
    %2595 = vperm.xlu0 %2594, %v2503
    %v2596 = vpop.permute.xlu0 %2595
    %2599 = vset.pattern.permute.xlu0 0
    %2600 = vperm.xlu0 %2599, %v2504
    %v2601 = vpop.permute.xlu0 %2600
    %v2603 = vmul.f32 %v2555, %v2566
    %v2604 = vmul.f32 %v2556, %v2571
    %v2605 = vmul.f32 %v2557, %v2576
    %v2606 = vmul.f32 %v2558, %v2581
    %v2607 = vmul.f32 %v2559, %v2586
    %v2608 = vmul.f32 %v2560, %v2591
    %v2609 = vmul.f32 %v2561, %v2596
    %v2610 = vmul.f32 %v2562, %v2601
    %v2611 = vld [vmem:[#allocation5] sm:$0x3]
    %v2612 = vld [vmem:[#allocation5 + $0x2] sm:$0x3]
    %v2613 = vld [vmem:[#allocation5 + $0x4] sm:$0x3]
    %v2614 = vld [vmem:[#allocation5 + $0x6] sm:$0x3]
    %v2615 = vld [vmem:[#allocation5 + $0x8] sm:$0x3]
    %v2616 = vld [vmem:[#allocation5 + $0xa] sm:$0x3]
    %v2617 = vld [vmem:[#allocation5 + $0xc] sm:$0x3]
    %v2618 = vld [vmem:[#allocation5 + $0xe] sm:$0x3]
    %v2619 = vmul.f32 %v2603, %v2611
    %v2620 = vmul.f32 %v2604, %v2612
    %v2621 = vmul.f32 %v2605, %v2613
    %v2622 = vmul.f32 %v2606, %v2614
    %v2623 = vmul.f32 %v2607, %v2615
    %v2624 = vmul.f32 %v2608, %v2616
    %v2625 = vmul.f32 %v2609, %v2617
    %v2626 = vmul.f32 %v2610, %v2618
    %v2627 = vsel %vm2485, %v2619, 0.0
    %v2628 = vsel %vm2485, %v2620, 0.0
    %v2629 = vadd.f32 %v2627, %v2628
    %v2630 = vsel %vm2485, %v2621, 0.0
    %v2631 = vadd.f32 %v2629, %v2630
    %v2632 = vsel %vm2485, %v2622, 0.0
    %v2633 = vadd.f32 %v2631, %v2632
    %v2634 = vsel %vm2485, %v2623, 0.0
    %v2635 = vadd.f32 %v2633, %v2634
    %v2636 = vsel %vm2485, %v2624, 0.0
    %v2637 = vadd.f32 %v2635, %v2636
    %v2638 = vsel %vm2485, %v2625, 0.0
    %v2639 = vadd.f32 %v2637, %v2638
    %v2640 = vsel %vm2485, %v2626, 0.0
    %v2641 = vadd.f32 %v2639, %v2640
    %2642 = vadd.xlane.f32.xlu0 %v2641
    %v2643 = vpop.xlane.xlu0 %2642
    %v2644 = vrot.slane %v2643, 4
    %v2645 = vadd.f32 %v2643, %v2644
    %v2646 = vrot.slane %v2645, 2
    %v2647 = vadd.f32 %v2645, %v2646
    %v2648 = vrot.slane %v2647, 1
    %v2649 = vadd.f32 %v2647, %v2648
    %s2650 = vtos %v2649
    %v2652 = vlaneseq
    %v2653 = vshrl.u32 %v2652, 7
    %v2654 = vsub.s32 0, %v2653
    %v2655 = vrot.slane %v2494, %v2654
    %v2657 = vadd.f32 %v2655, %v2611
    %s2658 = scalar_lea.vmem [#allocation5], 2
    %v2659 = vld [vmem:[%s2658] sm:$0x3]
    %s2660 = scalar_lea.vmem %s14, 2
    %v2661 = vld [vmem:[%s2660] sm:$0x3]
    %v2662 = vlaneseq
    %v2663 = vshrl.u32 %v2662, 7
    %v2664 = vsub.s32 0, %v2663
    %v2665 = vrot.slane %v2657, %v2664
    %2667 = vbcast.lane.b32.xlu0 %v2665, 256
    %v2668 = vpop.permute.xlu0 %2667
    %v2669 = vlaneseq
    %v2670 = vshrl.u32 %v2669, 7
    %v2671 = vsub.s32 1, %v2670
    %v2672 = vrot.slane %v2657, %v2671
    %2674 = vbcast.lane.b32.xlu0 %v2672, 256
    %v2675 = vpop.permute.xlu0 %2674
    %v2676 = vadd.f32 %v2668, %v2496
    %v2677 = vadd.f32 %v2675, %v2496
    %v2680 = vunpack.c.l.s4 1966171168
    %v2681 = vunpack.c.0.s8 %v2680
    %v2682 = vlaneseq
    %v2683 = vshrl.u32 %v2682, 7
    %v2684 = vsub.s32 %v2681, %v2683
    %v2685 = vrot.slane %v2659, %v2684
    %v2686 = vcombine.high %v2685, %v2685
    %v2688 = vunpack.c.l.s4 1966171168
    %v2689 = vunpack.c.0.s8 %v2688
    %v2690 = vlaneseq
    %v2691 = vshrl.u32 %v2690, 7
    %v2692 = vsub.s32 %v2689, %v2691
    %v2693 = vrot.slane %v2685, %v2692
    %v2695 = vunpack.c.l.s4 1966171168
    %v2696 = vunpack.c.0.s8 %v2695
    %v2697 = vlaneseq
    %v2698 = vshrl.u32 %v2697, 7
    %v2699 = vsub.s32 %v2696, %v2698
    %v2700 = vrot.slane %v2686, %v2699
    %v2701 = vlaneseq
    %v2702 = vshrl.u32 %v2701, 7
    %v2703 = vsub.s32 0, %v2702
    %v2704 = vrot.slane %v2693, %v2703
    %v2705 = vlaneseq
    %v2706 = vshrl.u32 %v2705, 7
    %v2707 = vsub.s32 0, %v2706
    %v2708 = vrot.slane %v2700, %v2707
    %v2711 = vadd.f32 %v2676, %v2704
    %v2712 = vadd.f32 %v2677, %v2708
    %vm2713 = vcmask 64512
    %v2714 = vsel %vm2713, %v2711, -inf
    %v2715 = vrot.slane %v2714, 4
    %v2716 = vmax.f32 %v2714, %v2715
    %v2717 = vrot.slane %v2716, 2
    %v2718 = vmax.f32 %v2716, %v2717
    %v2719 = vrot.slane %v2718, 1
    %v2720 = vmax.f32 %v2718, %v2719
    %v2721 = vsel %vm2713, %v2712, -inf
    %v2722 = vrot.slane %v2721, 4
    %v2723 = vmax.f32 %v2721, %v2722
    %v2724 = vrot.slane %v2723, 2
    %v2725 = vmax.f32 %v2723, %v2724
    %v2726 = vrot.slane %v2725, 1
    %v2727 = vmax.f32 %v2725, %v2726
    %v2728 = vsub.f32 %v2711, %v2720
    %v2729 = vsub.f32 %v2712, %v2727
    %v2730 = vmul.f32 %v2728, 1.442695
    %v2731 = vpow.pop %v2730
    %v2732 = vmul.f32 %v2729, 1.442695
    %v2733 = vpow.pop %v2732
    %v2734 = vsel %vm2713, %v2731, 0.0
    %v2735 = vrot.slane %v2734, 4
    %v2736 = vadd.f32 %v2734, %v2735
    %v2737 = vrot.slane %v2736, 2
    %v2738 = vadd.f32 %v2736, %v2737
    %v2739 = vrot.slane %v2738, 1
    %v2740 = vadd.f32 %v2738, %v2739
    %v2741 = vsel %vm2713, %v2733, 0.0
    %v2742 = vrot.slane %v2741, 4
    %v2743 = vadd.f32 %v2741, %v2742
    %v2744 = vrot.slane %v2743, 2
    %v2745 = vadd.f32 %v2743, %v2744
    %v2746 = vrot.slane %v2745, 1
    %v2747 = vadd.f32 %v2745, %v2746
    %v2748 = vlog2.pop %v2740
    %v2749 = vmul.f32 %v2748, 0.6931472
    %v2750 = vlog2.pop %v2747
    %v2751 = vmul.f32 %v2750, 0.6931472
    %v2752 = vadd.f32 %v2720, %v2749
    %v2753 = vadd.f32 %v2727, %v2751
    %vm2754 = vcmp.gt.f32.partialorder %v2661, 0.5
    %v2755 = vsel %vm2754, 1, 0
    %2756 = vset.pattern.permute.xlu0 0
    %2757 = vperm.xlu0 %2756, %v2755
    %v2758 = vpop.permute.xlu0 %2757
    %vm2759 = vcmp.eq.s32.totalorder %v2758, 1
    %vm2762 = vcmask 1041409
    %v2763 = vsel %vm2762, %v2753, %v2752
    %v2765 = vsel %vm2759, %v2763, %v2657
    %s2766 = scalar_lea.vmem [#allocation5], 4
    %v2767 = vld [vmem:[%s2766] sm:$0x3]
    %s2768 = scalar_lea.vmem %s14, 4
    %v2769 = vld [vmem:[%s2768] sm:$0x3]
    %v2770 = vlaneseq
    %v2771 = vshrl.u32 %v2770, 7
    %v2772 = vsub.s32 0, %v2771
    %v2773 = vrot.slane %v2765, %v2772
    %2775 = vbcast.lane.b32.xlu0 %v2773, 256
    %v2776 = vpop.permute.xlu0 %2775
    %v2777 = vlaneseq
    %v2778 = vshrl.u32 %v2777, 7
    %v2779 = vsub.s32 1, %v2778
    %v2780 = vrot.slane %v2765, %v2779
    %2782 = vbcast.lane.b32.xlu0 %v2780, 256
    %v2783 = vpop.permute.xlu0 %2782
    %v2784 = vadd.f32 %v2776, %v2496
    %v2785 = vadd.f32 %v2783, %v2496
    %v2788 = vunpack.c.l.s4 1966171168
    %v2789 = vunpack.c.0.s8 %v2788
    %v2790 = vlaneseq
    %v2791 = vshrl.u32 %v2790, 7
    %v2792 = vsub.s32 %v2789, %v2791
    %v2793 = vrot.slane %v2767, %v2792
    %v2794 = vcombine.high %v2793, %v2793
    %v2796 = vunpack.c.l.s4 1966171168
    %v2797 = vunpack.c.0.s8 %v2796
    %v2798 = vlaneseq
    %v2799 = vshrl.u32 %v2798, 7
    %v2800 = vsub.s32 %v2797, %v2799
    %v2801 = vrot.slane %v2793, %v2800
    %v2803 = vunpack.c.l.s4 1966171168
    %v2804 = vunpack.c.0.s8 %v2803
    %v2805 = vlaneseq
    %v2806 = vshrl.u32 %v2805, 7
    %v2807 = vsub.s32 %v2804, %v2806
    %v2808 = vrot.slane %v2794, %v2807
    %v2809 = vlaneseq
    %v2810 = vshrl.u32 %v2809, 7
    %v2811 = vsub.s32 0, %v2810
    %v2812 = vrot.slane %v2801, %v2811
    %v2813 = vlaneseq
    %v2814 = vshrl.u32 %v2813, 7
    %v2815 = vsub.s32 0, %v2814
    %v2816 = vrot.slane %v2808, %v2815
    %v2819 = vadd.f32 %v2784, %v2812
    %v2820 = vadd.f32 %v2785, %v2816
    %v2821 = vsel %vm2713, %v2819, -inf
    %v2822 = vrot.slane %v2821, 4
    %v2823 = vmax.f32 %v2821, %v2822
    %v2824 = vrot.slane %v2823, 2
    %v2825 = vmax.f32 %v2823, %v2824
    %v2826 = vrot.slane %v2825, 1
    %v2827 = vmax.f32 %v2825, %v2826
    %v2828 = vsel %vm2713, %v2820, -inf
    %v2829 = vrot.slane %v2828, 4
    %v2830 = vmax.f32 %v2828, %v2829
    %v2831 = vrot.slane %v2830, 2
    %v2832 = vmax.f32 %v2830, %v2831
    %v2833 = vrot.slane %v2832, 1
    %v2834 = vmax.f32 %v2832, %v2833
    %v2835 = vsub.f32 %v2819, %v2827
    %v2836 = vsub.f32 %v2820, %v2834
    %v2837 = vmul.f32 %v2835, 1.442695
    %v2838 = vpow.pop %v2837
    %v2839 = vmul.f32 %v2836, 1.442695
    %v2840 = vpow.pop %v2839
    %v2841 = vsel %vm2713, %v2838, 0.0
    %v2842 = vrot.slane %v2841, 4
    %v2843 = vadd.f32 %v2841, %v2842
    %v2844 = vrot.slane %v2843, 2
    %v2845 = vadd.f32 %v2843, %v2844
    %v2846 = vrot.slane %v2845, 1
    %v2847 = vadd.f32 %v2845, %v2846
    %v2848 = vsel %vm2713, %v2840, 0.0
    %v2849 = vrot.slane %v2848, 4
    %v2850 = vadd.f32 %v2848, %v2849
    %v2851 = vrot.slane %v2850, 2
    %v2852 = vadd.f32 %v2850, %v2851
    %v2853 = vrot.slane %v2852, 1
    %v2854 = vadd.f32 %v2852, %v2853
    %v2855 = vlog2.pop %v2847
    %v2856 = vmul.f32 %v2855, 0.6931472
    %v2857 = vlog2.pop %v2854
    %v2858 = vmul.f32 %v2857, 0.6931472
    %v2859 = vadd.f32 %v2827, %v2856
    %v2860 = vadd.f32 %v2834, %v2858
    %vm2861 = vcmp.gt.f32.partialorder %v2769, 0.5
    %v2862 = vsel %vm2861, 1, 0
    %2863 = vset.pattern.permute.xlu0 0
    %2864 = vperm.xlu0 %2863, %v2862
    %v2865 = vpop.permute.xlu0 %2864
    %vm2866 = vcmp.eq.s32.totalorder %v2865, 1
    %v2869 = vsel %vm2762, %v2860, %v2859
    %v2871 = vsel %vm2866, %v2869, %v2765
    %s2872 = scalar_lea.vmem [#allocation5], 6
    %v2873 = vld [vmem:[%s2872] sm:$0x3]
    %s2874 = scalar_lea.vmem %s14, 6
    %v2875 = vld [vmem:[%s2874] sm:$0x3]
    %v2876 = vlaneseq
    %v2877 = vshrl.u32 %v2876, 7
    %v2878 = vsub.s32 0, %v2877
    %v2879 = vrot.slane %v2871, %v2878
    %2881 = vbcast.lane.b32.xlu0 %v2879, 256
    %v2882 = vpop.permute.xlu0 %2881
    %v2883 = vlaneseq
    %v2884 = vshrl.u32 %v2883, 7
    %v2885 = vsub.s32 1, %v2884
    %v2886 = vrot.slane %v2871, %v2885
    %2888 = vbcast.lane.b32.xlu0 %v2886, 256
    %v2889 = vpop.permute.xlu0 %2888
    %v2890 = vadd.f32 %v2882, %v2496
    %v2891 = vadd.f32 %v2889, %v2496
    %v2894 = vunpack.c.l.s4 1966171168
    %v2895 = vunpack.c.0.s8 %v2894
    %v2896 = vlaneseq
    %v2897 = vshrl.u32 %v2896, 7
    %v2898 = vsub.s32 %v2895, %v2897
    %v2899 = vrot.slane %v2873, %v2898
    %v2900 = vcombine.high %v2899, %v2899
    %v2902 = vunpack.c.l.s4 1966171168
    %v2903 = vunpack.c.0.s8 %v2902
    %v2904 = vlaneseq
    %v2905 = vshrl.u32 %v2904, 7
    %v2906 = vsub.s32 %v2903, %v2905
    %v2907 = vrot.slane %v2899, %v2906
    %v2909 = vunpack.c.l.s4 1966171168
    %v2910 = vunpack.c.0.s8 %v2909
    %v2911 = vlaneseq
    %v2912 = vshrl.u32 %v2911, 7
    %v2913 = vsub.s32 %v2910, %v2912
    %v2914 = vrot.slane %v2900, %v2913
    %v2915 = vlaneseq
    %v2916 = vshrl.u32 %v2915, 7
    %v2917 = vsub.s32 0, %v2916
    %v2918 = vrot.slane %v2907, %v2917
    %v2919 = vlaneseq
    %v2920 = vshrl.u32 %v2919, 7
    %v2921 = vsub.s32 0, %v2920
    %v2922 = vrot.slane %v2914, %v2921
    %v2925 = vadd.f32 %v2890, %v2918
    %v2926 = vadd.f32 %v2891, %v2922
    %v2927 = vsel %vm2713, %v2925, -inf
    %v2928 = vrot.slane %v2927, 4
    %v2929 = vmax.f32 %v2927, %v2928
    %v2930 = vrot.slane %v2929, 2
    %v2931 = vmax.f32 %v2929, %v2930
    %v2932 = vrot.slane %v2931, 1
    %v2933 = vmax.f32 %v2931, %v2932
    %v2934 = vsel %vm2713, %v2926, -inf
    %v2935 = vrot.slane %v2934, 4
    %v2936 = vmax.f32 %v2934, %v2935
    %v2937 = vrot.slane %v2936, 2
    %v2938 = vmax.f32 %v2936, %v2937
    %v2939 = vrot.slane %v2938, 1
    %v2940 = vmax.f32 %v2938, %v2939
    %v2941 = vsub.f32 %v2925, %v2933
    %v2942 = vsub.f32 %v2926, %v2940
    %v2943 = vmul.f32 %v2941, 1.442695
    %v2944 = vpow.pop %v2943
    %v2945 = vmul.f32 %v2942, 1.442695
    %v2946 = vpow.pop %v2945
    %v2947 = vsel %vm2713, %v2944, 0.0
    %v2948 = vrot.slane %v2947, 4
    %v2949 = vadd.f32 %v2947, %v2948
    %v2950 = vrot.slane %v2949, 2
    %v2951 = vadd.f32 %v2949, %v2950
    %v2952 = vrot.slane %v2951, 1
    %v2953 = vadd.f32 %v2951, %v2952
    %v2954 = vsel %vm2713, %v2946, 0.0
    %v2955 = vrot.slane %v2954, 4
    %v2956 = vadd.f32 %v2954, %v2955
    %v2957 = vrot.slane %v2956, 2
    %v2958 = vadd.f32 %v2956, %v2957
    %v2959 = vrot.slane %v2958, 1
    %v2960 = vadd.f32 %v2958, %v2959
    %v2961 = vlog2.pop %v2953
    %v2962 = vmul.f32 %v2961, 0.6931472
    %v2963 = vlog2.pop %v2960
    %v2964 = vmul.f32 %v2963, 0.6931472
    %v2965 = vadd.f32 %v2933, %v2962
    %v2966 = vadd.f32 %v2940, %v2964
    %vm2967 = vcmp.gt.f32.partialorder %v2875, 0.5
    %v2968 = vsel %vm2967, 1, 0
    %2969 = vset.pattern.permute.xlu0 0
    %2970 = vperm.xlu0 %2969, %v2968
    %v2971 = vpop.permute.xlu0 %2970
    %vm2972 = vcmp.eq.s32.totalorder %v2971, 1
    %v2975 = vsel %vm2762, %v2966, %v2965
    %v2977 = vsel %vm2972, %v2975, %v2871
    %s2978 = scalar_lea.vmem [#allocation5], 8
    %v2979 = vld [vmem:[%s2978] sm:$0x3]
    %s2980 = scalar_lea.vmem %s14, 8
    %v2981 = vld [vmem:[%s2980] sm:$0x3]
    %v2982 = vlaneseq
    %v2983 = vshrl.u32 %v2982, 7
    %v2984 = vsub.s32 0, %v2983
    %v2985 = vrot.slane %v2977, %v2984
    %2987 = vbcast.lane.b32.xlu0 %v2985, 256
    %v2988 = vpop.permute.xlu0 %2987
    %v2989 = vlaneseq
    %v2990 = vshrl.u32 %v2989, 7
    %v2991 = vsub.s32 1, %v2990
    %v2992 = vrot.slane %v2977, %v2991
    %2994 = vbcast.lane.b32.xlu0 %v2992, 256
    %v2995 = vpop.permute.xlu0 %2994
    %v2996 = vadd.f32 %v2988, %v2496
    %v2997 = vadd.f32 %v2995, %v2496
    %v3000 = vunpack.c.l.s4 1966171168
    %v3001 = vunpack.c.0.s8 %v3000
    %v3002 = vlaneseq
    %v3003 = vshrl.u32 %v3002, 7
    %v3004 = vsub.s32 %v3001, %v3003
    %v3005 = vrot.slane %v2979, %v3004
    %v3006 = vcombine.high %v3005, %v3005
    %v3008 = vunpack.c.l.s4 1966171168
    %v3009 = vunpack.c.0.s8 %v3008
    %v3010 = vlaneseq
    %v3011 = vshrl.u32 %v3010, 7
    %v3012 = vsub.s32 %v3009, %v3011
    %v3013 = vrot.slane %v3005, %v3012
    %v3015 = vunpack.c.l.s4 1966171168
    %v3016 = vunpack.c.0.s8 %v3015
    %v3017 = vlaneseq
    %v3018 = vshrl.u32 %v3017, 7
    %v3019 = vsub.s32 %v3016, %v3018
    %v3020 = vrot.slane %v3006, %v3019
    %v3021 = vlaneseq
    %v3022 = vshrl.u32 %v3021, 7
    %v3023 = vsub.s32 0, %v3022
    %v3024 = vrot.slane %v3013, %v3023
    %v3025 = vlaneseq
    %v3026 = vshrl.u32 %v3025, 7
    %v3027 = vsub.s32 0, %v3026
    %v3028 = vrot.slane %v3020, %v3027
    %v3031 = vadd.f32 %v2996, %v3024
    %v3032 = vadd.f32 %v2997, %v3028
    %v3033 = vsel %vm2713, %v3031, -inf
    %v3034 = vrot.slane %v3033, 4
    %v3035 = vmax.f32 %v3033, %v3034
    %v3036 = vrot.slane %v3035, 2
    %v3037 = vmax.f32 %v3035, %v3036
    %v3038 = vrot.slane %v3037, 1
    %v3039 = vmax.f32 %v3037, %v3038
    %v3040 = vsel %vm2713, %v3032, -inf
    %v3041 = vrot.slane %v3040, 4
    %v3042 = vmax.f32 %v3040, %v3041
    %v3043 = vrot.slane %v3042, 2
    %v3044 = vmax.f32 %v3042, %v3043
    %v3045 = vrot.slane %v3044, 1
    %v3046 = vmax.f32 %v3044, %v3045
    %v3047 = vsub.f32 %v3031, %v3039
    %v3048 = vsub.f32 %v3032, %v3046
    %v3049 = vmul.f32 %v3047, 1.442695
    %v3050 = vpow.pop %v3049
    %v3051 = vmul.f32 %v3048, 1.442695
    %v3052 = vpow.pop %v3051
    %v3053 = vsel %vm2713, %v3050, 0.0
    %v3054 = vrot.slane %v3053, 4
    %v3055 = vadd.f32 %v3053, %v3054
    %v3056 = vrot.slane %v3055, 2
    %v3057 = vadd.f32 %v3055, %v3056
    %v3058 = vrot.slane %v3057, 1
    %v3059 = vadd.f32 %v3057, %v3058
    %v3060 = vsel %vm2713, %v3052, 0.0
    %v3061 = vrot.slane %v3060, 4
    %v3062 = vadd.f32 %v3060, %v3061
    %v3063 = vrot.slane %v3062, 2
    %v3064 = vadd.f32 %v3062, %v3063
    %v3065 = vrot.slane %v3064, 1
    %v3066 = vadd.f32 %v3064, %v3065
    %v3067 = vlog2.pop %v3059
    %v3068 = vmul.f32 %v3067, 0.6931472
    %v3069 = vlog2.pop %v3066
    %v3070 = vmul.f32 %v3069, 0.6931472
    %v3071 = vadd.f32 %v3039, %v3068
    %v3072 = vadd.f32 %v3046, %v3070
    %vm3073 = vcmp.gt.f32.partialorder %v2981, 0.5
    %v3074 = vsel %vm3073, 1, 0
    %3075 = vset.pattern.permute.xlu0 0
    %3076 = vperm.xlu0 %3075, %v3074
    %v3077 = vpop.permute.xlu0 %3076
    %vm3078 = vcmp.eq.s32.totalorder %v3077, 1
    %v3081 = vsel %vm2762, %v3072, %v3071
    %v3083 = vsel %vm3078, %v3081, %v2977
    %s3084 = scalar_lea.vmem [#allocation5], 10
    %v3085 = vld [vmem:[%s3084] sm:$0x3]
    %s3086 = scalar_lea.vmem %s14, 10
    %v3087 = vld [vmem:[%s3086] sm:$0x3]
    %v3088 = vlaneseq
    %v3089 = vshrl.u32 %v3088, 7
    %v3090 = vsub.s32 0, %v3089
    %v3091 = vrot.slane %v3083, %v3090
    %3093 = vbcast.lane.b32.xlu0 %v3091, 256
    %v3094 = vpop.permute.xlu0 %3093
    %v3095 = vlaneseq
    %v3096 = vshrl.u32 %v3095, 7
    %v3097 = vsub.s32 1, %v3096
    %v3098 = vrot.slane %v3083, %v3097
    %3100 = vbcast.lane.b32.xlu0 %v3098, 256
    %v3101 = vpop.permute.xlu0 %3100
    %v3102 = vadd.f32 %v3094, %v2496
    %v3103 = vadd.f32 %v3101, %v2496
    %v3106 = vunpack.c.l.s4 1966171168
    %v3107 = vunpack.c.0.s8 %v3106
    %v3108 = vlaneseq
    %v3109 = vshrl.u32 %v3108, 7
    %v3110 = vsub.s32 %v3107, %v3109
    %v3111 = vrot.slane %v3085, %v3110
    %v3112 = vcombine.high %v3111, %v3111
    %v3114 = vunpack.c.l.s4 1966171168
    %v3115 = vunpack.c.0.s8 %v3114
    %v3116 = vlaneseq
    %v3117 = vshrl.u32 %v3116, 7
    %v3118 = vsub.s32 %v3115, %v3117
    %v3119 = vrot.slane %v3111, %v3118
    %v3121 = vunpack.c.l.s4 1966171168
    %v3122 = vunpack.c.0.s8 %v3121
    %v3123 = vlaneseq
    %v3124 = vshrl.u32 %v3123, 7
    %v3125 = vsub.s32 %v3122, %v3124
    %v3126 = vrot.slane %v3112, %v3125
    %v3127 = vlaneseq
    %v3128 = vshrl.u32 %v3127, 7
    %v3129 = vsub.s32 0, %v3128
    %v3130 = vrot.slane %v3119, %v3129
    %v3131 = vlaneseq
    %v3132 = vshrl.u32 %v3131, 7
    %v3133 = vsub.s32 0, %v3132
    %v3134 = vrot.slane %v3126, %v3133
    %v3137 = vadd.f32 %v3102, %v3130
    %v3138 = vadd.f32 %v3103, %v3134
    %v3139 = vsel %vm2713, %v3137, -inf
    %v3140 = vrot.slane %v3139, 4
    %v3141 = vmax.f32 %v3139, %v3140
    %v3142 = vrot.slane %v3141, 2
    %v3143 = vmax.f32 %v3141, %v3142
    %v3144 = vrot.slane %v3143, 1
    %v3145 = vmax.f32 %v3143, %v3144
    %v3146 = vsel %vm2713, %v3138, -inf
    %v3147 = vrot.slane %v3146, 4
    %v3148 = vmax.f32 %v3146, %v3147
    %v3149 = vrot.slane %v3148, 2
    %v3150 = vmax.f32 %v3148, %v3149
    %v3151 = vrot.slane %v3150, 1
    %v3152 = vmax.f32 %v3150, %v3151
    %v3153 = vsub.f32 %v3137, %v3145
    %v3154 = vsub.f32 %v3138, %v3152
    %v3155 = vmul.f32 %v3153, 1.442695
    %v3156 = vpow.pop %v3155
    %v3157 = vmul.f32 %v3154, 1.442695
    %v3158 = vpow.pop %v3157
    %v3159 = vsel %vm2713, %v3156, 0.0
    %v3160 = vrot.slane %v3159, 4
    %v3161 = vadd.f32 %v3159, %v3160
    %v3162 = vrot.slane %v3161, 2
    %v3163 = vadd.f32 %v3161, %v3162
    %v3164 = vrot.slane %v3163, 1
    %v3165 = vadd.f32 %v3163, %v3164
    %v3166 = vsel %vm2713, %v3158, 0.0
    %v3167 = vrot.slane %v3166, 4
    %v3168 = vadd.f32 %v3166, %v3167
    %v3169 = vrot.slane %v3168, 2
    %v3170 = vadd.f32 %v3168, %v3169
    %v3171 = vrot.slane %v3170, 1
    %v3172 = vadd.f32 %v3170, %v3171
    %v3173 = vlog2.pop %v3165
    %v3174 = vmul.f32 %v3173, 0.6931472
    %v3175 = vlog2.pop %v3172
    %v3176 = vmul.f32 %v3175, 0.6931472
    %v3177 = vadd.f32 %v3145, %v3174
    %v3178 = vadd.f32 %v3152, %v3176
    %vm3179 = vcmp.gt.f32.partialorder %v3087, 0.5
    %v3180 = vsel %vm3179, 1, 0
    %3181 = vset.pattern.permute.xlu0 0
    %3182 = vperm.xlu0 %3181, %v3180
    %v3183 = vpop.permute.xlu0 %3182
    %vm3184 = vcmp.eq.s32.totalorder %v3183, 1
    %v3187 = vsel %vm2762, %v3178, %v3177
    %v3189 = vsel %vm3184, %v3187, %v3083
    %s3190 = scalar_lea.vmem [#allocation5], 12
    %v3191 = vld [vmem:[%s3190] sm:$0x3]
    %s3192 = scalar_lea.vmem %s14, 12
    %v3193 = vld [vmem:[%s3192] sm:$0x3]
    %v3194 = vlaneseq
    %v3195 = vshrl.u32 %v3194, 7
    %v3196 = vsub.s32 0, %v3195
    %v3197 = vrot.slane %v3189, %v3196
    %3199 = vbcast.lane.b32.xlu0 %v3197, 256
    %v3200 = vpop.permute.xlu0 %3199
    %v3201 = vlaneseq
    %v3202 = vshrl.u32 %v3201, 7
    %v3203 = vsub.s32 1, %v3202
    %v3204 = vrot.slane %v3189, %v3203
    %3206 = vbcast.lane.b32.xlu0 %v3204, 256
    %v3207 = vpop.permute.xlu0 %3206
    %v3208 = vadd.f32 %v3200, %v2496
    %v3209 = vadd.f32 %v3207, %v2496
    %v3212 = vunpack.c.l.s4 1966171168
    %v3213 = vunpack.c.0.s8 %v3212
    %v3214 = vlaneseq
    %v3215 = vshrl.u32 %v3214, 7
    %v3216 = vsub.s32 %v3213, %v3215
    %v3217 = vrot.slane %v3191, %v3216
    %v3218 = vcombine.high %v3217, %v3217
    %v3220 = vunpack.c.l.s4 1966171168
    %v3221 = vunpack.c.0.s8 %v3220
    %v3222 = vlaneseq
    %v3223 = vshrl.u32 %v3222, 7
    %v3224 = vsub.s32 %v3221, %v3223
    %v3225 = vrot.slane %v3217, %v3224
    %v3227 = vunpack.c.l.s4 1966171168
    %v3228 = vunpack.c.0.s8 %v3227
    %v3229 = vlaneseq
    %v3230 = vshrl.u32 %v3229, 7
    %v3231 = vsub.s32 %v3228, %v3230
    %v3232 = vrot.slane %v3218, %v3231
    %v3233 = vlaneseq
    %v3234 = vshrl.u32 %v3233, 7
    %v3235 = vsub.s32 0, %v3234
    %v3236 = vrot.slane %v3225, %v3235
    %v3237 = vlaneseq
    %v3238 = vshrl.u32 %v3237, 7
    %v3239 = vsub.s32 0, %v3238
    %v3240 = vrot.slane %v3232, %v3239
    %v3243 = vadd.f32 %v3208, %v3236
    %v3244 = vadd.f32 %v3209, %v3240
    %v3245 = vsel %vm2713, %v3243, -inf
    %v3246 = vrot.slane %v3245, 4
    %v3247 = vmax.f32 %v3245, %v3246
    %v3248 = vrot.slane %v3247, 2
    %v3249 = vmax.f32 %v3247, %v3248
    %v3250 = vrot.slane %v3249, 1
    %v3251 = vmax.f32 %v3249, %v3250
    %v3252 = vsel %vm2713, %v3244, -inf
    %v3253 = vrot.slane %v3252, 4
    %v3254 = vmax.f32 %v3252, %v3253
    %v3255 = vrot.slane %v3254, 2
    %v3256 = vmax.f32 %v3254, %v3255
    %v3257 = vrot.slane %v3256, 1
    %v3258 = vmax.f32 %v3256, %v3257
    %v3259 = vsub.f32 %v3243, %v3251
    %v3260 = vsub.f32 %v3244, %v3258
    %v3261 = vmul.f32 %v3259, 1.442695
    %v3262 = vpow.pop %v3261
    %v3263 = vmul.f32 %v3260, 1.442695
    %v3264 = vpow.pop %v3263
    %v3265 = vsel %vm2713, %v3262, 0.0
    %v3266 = vrot.slane %v3265, 4
    %v3267 = vadd.f32 %v3265, %v3266
    %v3268 = vrot.slane %v3267, 2
    %v3269 = vadd.f32 %v3267, %v3268
    %v3270 = vrot.slane %v3269, 1
    %v3271 = vadd.f32 %v3269, %v3270
    %v3272 = vsel %vm2713, %v3264, 0.0
    %v3273 = vrot.slane %v3272, 4
    %v3274 = vadd.f32 %v3272, %v3273
    %v3275 = vrot.slane %v3274, 2
    %v3276 = vadd.f32 %v3274, %v3275
    %v3277 = vrot.slane %v3276, 1
    %v3278 = vadd.f32 %v3276, %v3277
    %v3279 = vlog2.pop %v3271
    %v3280 = vmul.f32 %v3279, 0.6931472
    %v3281 = vlog2.pop %v3278
    %v3282 = vmul.f32 %v3281, 0.6931472
    %v3283 = vadd.f32 %v3251, %v3280
    %v3284 = vadd.f32 %v3258, %v3282
    %vm3285 = vcmp.gt.f32.partialorder %v3193, 0.5
    %v3286 = vsel %vm3285, 1, 0
    %3287 = vset.pattern.permute.xlu0 0
    %3288 = vperm.xlu0 %3287, %v3286
    %v3289 = vpop.permute.xlu0 %3288
    %vm3290 = vcmp.eq.s32.totalorder %v3289, 1
    %v3293 = vsel %vm2762, %v3284, %v3283
    %v3295 = vsel %vm3290, %v3293, %v3189
    %s3296 = scalar_lea.vmem [#allocation5], 14
    %v3297 = vld [vmem:[%s3296] sm:$0x3]
    %s3298 = scalar_lea.vmem %s14, 14
    %v3299 = vld [vmem:[%s3298] sm:$0x3]
    %v3300 = vlaneseq
    %v3301 = vshrl.u32 %v3300, 7
    %v3302 = vsub.s32 0, %v3301
    %v3303 = vrot.slane %v3295, %v3302
    %3305 = vbcast.lane.b32.xlu0 %v3303, 256
    %v3306 = vpop.permute.xlu0 %3305
    %v3307 = vlaneseq
    %v3308 = vshrl.u32 %v3307, 7
    %v3309 = vsub.s32 1, %v3308
    %v3310 = vrot.slane %v3295, %v3309
    %3312 = vbcast.lane.b32.xlu0 %v3310, 256
    %v3313 = vpop.permute.xlu0 %3312
    %v3314 = vadd.f32 %v3306, %v2496
    %v3315 = vadd.f32 %v3313, %v2496
    %v3318 = vunpack.c.l.s4 1966171168
    %v3319 = vunpack.c.0.s8 %v3318
    %v3320 = vlaneseq
    %v3321 = vshrl.u32 %v3320, 7
    %v3322 = vsub.s32 %v3319, %v3321
    %v3323 = vrot.slane %v3297, %v3322
    %v3324 = vcombine.high %v3323, %v3323
    %v3326 = vunpack.c.l.s4 1966171168
    %v3327 = vunpack.c.0.s8 %v3326
    %v3328 = vlaneseq
    %v3329 = vshrl.u32 %v3328, 7
    %v3330 = vsub.s32 %v3327, %v3329
    %v3331 = vrot.slane %v3323, %v3330
    %v3333 = vunpack.c.l.s4 1966171168
    %v3334 = vunpack.c.0.s8 %v3333
    %v3335 = vlaneseq
    %v3336 = vshrl.u32 %v3335, 7
    %v3337 = vsub.s32 %v3334, %v3336
    %v3338 = vrot.slane %v3324, %v3337
    %v3339 = vlaneseq
    %v3340 = vshrl.u32 %v3339, 7
    %v3341 = vsub.s32 0, %v3340
    %v3342 = vrot.slane %v3331, %v3341
    %v3343 = vlaneseq
    %v3344 = vshrl.u32 %v3343, 7
    %v3345 = vsub.s32 0, %v3344
    %v3346 = vrot.slane %v3338, %v3345
    %v3349 = vadd.f32 %v3314, %v3342
    %v3350 = vadd.f32 %v3315, %v3346
    %v3351 = vsel %vm2713, %v3349, -inf
    %v3352 = vrot.slane %v3351, 4
    %v3353 = vmax.f32 %v3351, %v3352
    %v3354 = vrot.slane %v3353, 2
    %v3355 = vmax.f32 %v3353, %v3354
    %v3356 = vrot.slane %v3355, 1
    %v3357 = vmax.f32 %v3355, %v3356
    %v3358 = vsel %vm2713, %v3350, -inf
    %v3359 = vrot.slane %v3358, 4
    %v3360 = vmax.f32 %v3358, %v3359
    %v3361 = vrot.slane %v3360, 2
    %v3362 = vmax.f32 %v3360, %v3361
    %v3363 = vrot.slane %v3362, 1
    %v3364 = vmax.f32 %v3362, %v3363
    %v3365 = vsub.f32 %v3349, %v3357
    %v3366 = vsub.f32 %v3350, %v3364
    %v3367 = vmul.f32 %v3365, 1.442695
    %v3368 = vpow.pop %v3367
    %v3369 = vmul.f32 %v3366, 1.442695
    %v3370 = vpow.pop %v3369
    %v3371 = vsel %vm2713, %v3368, 0.0
    %v3372 = vrot.slane %v3371, 4
    %v3373 = vadd.f32 %v3371, %v3372
    %v3374 = vrot.slane %v3373, 2
    %v3375 = vadd.f32 %v3373, %v3374
    %v3376 = vrot.slane %v3375, 1
    %v3377 = vadd.f32 %v3375, %v3376
    %v3378 = vsel %vm2713, %v3370, 0.0
    %v3379 = vrot.slane %v3378, 4
    %v3380 = vadd.f32 %v3378, %v3379
    %v3381 = vrot.slane %v3380, 2
    %v3382 = vadd.f32 %v3380, %v3381
    %v3383 = vrot.slane %v3382, 1
    %v3384 = vadd.f32 %v3382, %v3383
    %v3385 = vlog2.pop %v3377
    %v3386 = vmul.f32 %v3385, 0.6931472
    %v3387 = vlog2.pop %v3384
    %v3388 = vmul.f32 %v3387, 0.6931472
    %v3389 = vadd.f32 %v3357, %v3386
    %v3390 = vadd.f32 %v3364, %v3388
    %vm3391 = vcmp.gt.f32.partialorder %v3299, 0.5
    %v3392 = vsel %vm3391, 1, 0
    %3393 = vset.pattern.permute.xlu0 0
    %3394 = vperm.xlu0 %3393, %v3392
    %v3395 = vpop.permute.xlu0 %3394
    %vm3396 = vcmp.eq.s32.totalorder %v3395, 1
    %v3399 = vsel %vm2762, %v3390, %v3389
    %v3401 = vsel %vm3396, %v3399, %v3295
    %v3403 = vlaneseq
    %v3404 = vshrl.u32 %v3403, 7
    %v3405 = vsub.s32 0, %v3404
    %v3406 = vrot.slane %v2495, %v3405
    %v3408 = vadd.f32 %v3401, %v3406
    %v3409 = vsel %vm2485, %v3408, -inf
    %3410 = vmax.xlane.f32.xlu0 %v3409
    %v3411 = vpop.xlane.xlu0 %3410
    %v3412 = vsub.f32 %v3408, %v3411
    %v3413 = vmul.f32 %v3412, 1.442695
    %v3414 = vpow.pop %v3413
    %v3415 = vsel %vm2485, %v3414, 0.0
    %3416 = vadd.xlane.f32.xlu0 %v3415
    %v3417 = vpop.xlane.xlu0 %3416
    %v3418 = vlog2.pop %v3417
    %v3419 = vmul.f32 %v3418, 0.6931472
    %v3420 = vadd.f32 %v3411, %v3419
    %vm3421 = vcmask 1024
    %v3422 = vsel %vm3421, %v3420, 0.0
    %3423 = vadd.xlane.f32.xlu0 %v3422
    %v3424 = vpop.xlane.xlu0 %3423
    %v3425 = vrot.slane %v3424, 4
    %v3426 = vadd.f32 %v3424, %v3425
    %v3427 = vrot.slane %v3426, 2
    %v3428 = vadd.f32 %v3426, %v3427
    %v3429 = vrot.slane %v3428, 1
    %v3430 = vadd.f32 %v3428, %v3429
    %s3431 = vtos %v3430
    %s3432 = ssub.f32 %s3431, %s2650
    %v3433 = vstv %s3432
    %vm3434 = vcmask 0
    %3435 = vst.msk [vmem:[#allocation6] sm:$0x1] %vm3434, %v3433
    // Predicated region
    $region62: #{elmo_ner_loss.1} parent=1 // pred_check
      _
    $region63: #{elmo_ner_loss.1} parent=1 // pred_check_branch
      %3437 = sbr.rel (0) target = $region65
    $region64: #{elmo_ner_loss.1} parent=1 // pred_region
      %s3439 = ssub.s32 16, 16
      %3440 = vsyncadd [#allocation7], %s3439
      %s3442 = sshll.u32 [#allocation6], 4
      %s3443 = int_to_ptr.vmem [resolvable:$true] %s3442
      %3445 = dma.vmem_to_hbm [thread:$0]  %s3443, 16, %s15, [#allocation7]
    $region65: #{elmo_ner_loss.1} parent=1 // pred_fallthru
      _
    // Predicated region
    $region66: #{elmo_ner_loss.1} parent=1 // pred_check
      _
    $region67: #{elmo_ner_loss.1} parent=1 // pred_check_branch
      %3447 = sbr.rel (0) target = $region69
    $region68: #{elmo_ner_loss.1} parent=1 // pred_region
      %3448 = dma.done [#allocation7], 16
    $region69: #{elmo_ner_loss.1} parent=1 // pred_fallthru
      _
    %3449 = vsyncpa [#allocation7], 1

</llo_original>
